<compile_context>
chip_gen: v7x
topology: tpu7x:2x2x1
jax: 0.10.0
libtpu: 0.0.40
codegen_flags: <defaults>
</compile_context>

<pallas_src>
import jax
import jax.numpy as jnp
from jax import lax
from jax.experimental import pallas as pl
from jax.experimental.pallas import tpu as pltpu

# ---------------- static configuration (small demo shapes) ----------------
N = 2                 # batch
H = W = 16            # input spatial size
C_IN = 3
C1 = 64               # conv1 output channels
C2 = 32               # conv2 / conv3 output channels
K1 = 5                # conv1 kernel
K2 = 3                # conv2 / conv3 kernel

P1H = P1W = (H - 3) // 2 + 1      # 7 : after first MaxPool(3, 2)
P1W_PAD = 8                       # pooled width padded to 8 sublanes (column 7 is junk)
P2H = P2W = (P1H - 3) // 2 + 1    # 3 : after second MaxPool(3, 2)

LRN_SIZE = 3
LRN_ALPHA = 5e-5
LRN_BETA = 0.75
LRN_K = 1.0

ROWS1 = N * H * W                 # 512 rows for the conv1 im2col matmul
ROWS2 = N * P1H * P1W_PAD         # 112 rows for conv2 / conv3 / LRN matmuls


def _tree_sum(vals):
    """Pairwise (log-depth) sum of a list of same-shaped arrays."""
    vals = list(vals)
    while len(vals) > 1:
        nxt = [vals[i] + vals[i + 1] for i in range(0, len(vals) - 1, 2)]
        if len(vals) % 2:
            nxt.append(vals[-1])
        vals = nxt
    return vals[0]


def _alexnet_branch_kernel(patches_ref, w1_ref, b1_ref, band_ref,
                           w2_ref, b2_ref, w3_ref, b3_ref,
                           o_ref, hp_ref, pad2_ref, pad3_ref, hm_ref):
    f32 = jnp.float32

    # ---------------- conv1 (im2col) + bias + ReLU: one (512,75)@(75,64) MXU matmul ------
    a1 = jnp.dot(patches_ref[...], w1_ref[...], preferred_element_type=f32)   # (512, 64)
    a1 = jnp.maximum(a1 + b1_ref[...], 0.0)

    # ---------------- MaxPool(3,2), H direction: even/odd split of the leading H axis ----
    a1r = a1.reshape(N, H // 2, 2, W, C1)                 # (2, 8, 2, 16, 64)
    evn = a1r[:, :, 0]                                    # rows 0,2,...,14
    odd = a1r[:, :, 1]                                    # rows 1,3,...,15
    hp = jnp.maximum(jnp.maximum(evn[:, 0:P1H], odd[:, 0:P1H]),
                     evn[:, 1:P1H + 1])                   # (2, 7, 16, 64)

    # ---------------- MaxPool(3,2), W direction: sublane-strided loads -------------------
    hp_ref[:, :, 0:W, :] = hp
    hp_ref[:, :, W:W + 2, :] = jnp.zeros((N, P1H, 2, C1), f32)   # zero pad cols 16,17
    c0 = hp_ref[:, :, pl.ds(0, P1W_PAD, stride=2), :]     # cols 0,2,...,14
    c1 = hp_ref[:, :, pl.ds(1, P1W_PAD, stride=2), :]     # cols 1,3,...,15
    c2 = hp_ref[:, :, pl.ds(2, P1W_PAD, stride=2), :]     # cols 2,4,...,16 (16 is zero)
    pooled = jnp.maximum(jnp.maximum(c0, c1), c2)         # (2, 7, 8, 64); col 7 junk, >=0

    # ---------------- LRN(size=3, alpha=5e-5, beta=0.75, k=1): one band matmul -----------
    p2d = pooled.reshape(ROWS2, C1)                       # (112, 64)
    ssum = jnp.dot(p2d * p2d, band_ref[...], preferred_element_type=f32)
    denom = LRN_K + (LRN_ALPHA / LRN_SIZE) * ssum         # >= 1 always
    lrn = (p2d * jnp.exp(-LRN_BETA * jnp.log(denom))).reshape(N, P1H, P1W_PAD, C1)

    # ---------------- conv2 (3x3, 64 -> 32, pad=1) + bias + ReLU -------------------------
    pad2_ref[...] = jnp.zeros((N, P1H + 2, P1W_PAD + 2, C1), f32)
    pad2_ref[:, 1:1 + P1H, 1:1 + P1W, :] = lrn[:, :, 0:P1W, :]   # real 7x7 interior only
    prods2 = [jnp.broadcast_to(b2_ref[...], (ROWS2, C2))]
    for dy in range(K2):
        for dx in range(K2):
            xs = pad2_ref[:, dy:dy + P1H, dx:dx + P1W_PAD, :]    # (2, 7, 8, 64)
            prods2.append(jnp.dot(xs.reshape(ROWS2, C1), w2_ref[dy, dx],
                                  preferred_element_type=f32))
    a2 = jnp.maximum(_tree_sum(prods2), 0.0).reshape(N, P1H, P1W_PAD, C2)   # col 7 junk

    # ---------------- conv3 (3x3, 32 -> 32, pad=1) + bias + ReLU -------------------------
    pad3_ref[...] = jnp.zeros((N, P1H + 2, P1W_PAD + 2, C2), f32)
    pad3_ref[:, 1:1 + P1H, 1:1 + P1W, :] = a2[:, :, 0:P1W, :]
    prods3 = [jnp.broadcast_to(b3_ref[...], (ROWS2, C2))]
    for dy in range(K2):
        for dx in range(K2):
            xs = pad3_ref[:, dy:dy + P1H, dx:dx + P1W_PAD, :]    # (2, 7, 8, 32)
            prods3.append(jnp.dot(xs.reshape(ROWS2, C2), w3_ref[dy, dx],
                                  preferred_element_type=f32))
    a3 = jnp.maximum(_tree_sum(prods3), 0.0).reshape(N, P1H, P1W_PAD, C2)   # col 7 junk

    # ---------------- final MaxPool(3,2): 7x7 -> 3x3, single output store ----------------
    hm_ref[:, 0, :, :] = jnp.maximum(jnp.maximum(a3[:, 0], a3[:, 1]), a3[:, 2])
    hm_ref[:, 1, :, :] = jnp.maximum(jnp.maximum(a3[:, 2], a3[:, 3]), a3[:, 4])
    hm_ref[:, 2, :, :] = jnp.maximum(jnp.maximum(a3[:, 4], a3[:, 5]), a3[:, 6])
    wa = hm_ref[:, :, pl.ds(0, P2W, stride=2), :]         # cols 0,2,4
    wb = hm_ref[:, :, pl.ds(1, P2W, stride=2), :]         # cols 1,3,5
    wc = hm_ref[:, :, pl.ds(2, P2W, stride=2), :]         # cols 2,4,6
    o_ref[...] = jnp.maximum(jnp.maximum(wa, wb), wc)     # (2, 3, 3, 32)


@jax.jit
def net_exit1_part2l_forward(x_nchw, params):
    """x_nchw: (N, 3, 16, 16) float32 -> (N, 32, 3, 3) float32 (PyTorch NCHW convention)."""
    w1, b1, w2, b2, w3, b3 = params
    assert x_nchw.shape == (N, C_IN, H, W)

    # NCHW -> NHWC, pad=2, and im2col patch matrix for conv1 (fused by XLA with the pad).
    x = jnp.transpose(x_nchw, (0, 2, 3, 1)).astype(jnp.float32)
    xp = jnp.pad(x, ((0, 0), (2, 2), (2, 2), (0, 0)))
    taps = [xp[:, dy:dy + H, dx:dx + W, :] for dy in range(K1) for dx in range(K1)]
    patches = jnp.concatenate(taps, axis=-1).reshape(ROWS1, K1 * K1 * C_IN)   # (512, 75)

    # Weights: PyTorch (out, in, kH, kW) -> HWIO; conv1 flattened to match patch ordering.
    w1_mat = jnp.transpose(w1, (2, 3, 1, 0)).astype(jnp.float32).reshape(K1 * K1 * C_IN, C1)
    w2_hwio = jnp.transpose(w2, (2, 3, 1, 0)).astype(jnp.float32)
    w3_hwio = jnp.transpose(w3, (2, 3, 1, 0)).astype(jnp.float32)
    b1_2d = b1.reshape(1, C1).astype(jnp.float32)
    b2_2d = b2.reshape(1, C2).astype(jnp.float32)
    b3_2d = b3.reshape(1, C2).astype(jnp.float32)

    # LRN band matrix over channels (|c' - c| <= size // 2), precomputed once.
    ch = jnp.arange(C1)
    band = (jnp.abs(ch[:, None] - ch[None, :]) <= (LRN_SIZE // 2)).astype(jnp.float32)

    vmem_specs = [pl.BlockSpec(memory_space=pltpu.MemorySpace.VMEM) for _ in range(8)]
    out_nhwc = pl.pallas_call(
        _alexnet_branch_kernel,
        out_shape=jax.ShapeDtypeStruct((N, P2H, P2W, C2), jnp.float32),
        in_specs=vmem_specs,
        out_specs=pl.BlockSpec(memory_space=pltpu.MemorySpace.VMEM),
        scratch_shapes=[
            pltpu.VMEM((N, P1H, W + 2, C1), jnp.float32),               # H-pooled rows (+2 zero cols)
            pltpu.VMEM((N, P1H + 2, P1W_PAD + 2, C1), jnp.float32),     # conv2 zero-padded input
            pltpu.VMEM((N, P1H + 2, P1W_PAD + 2, C2), jnp.float32),     # conv3 zero-padded input
            pltpu.VMEM((N, P2H, P1W_PAD, C2), jnp.float32),             # final pool, H-direction
        ],
    )(patches, w1_mat, b1_2d, band, w2_hwio, b2_2d, w3_hwio, b3_2d)

    return jnp.transpose(out_nhwc, (0, 3, 1, 2))                        # NHWC -> NCHW


def _reference_forward(x_nchw, params):
    """Pure-JAX reference reproducing the PyTorch forward exactly."""
    w1, b1, w2, b2, w3, b3 = params
    x = jnp.transpose(x_nchw, (0, 2, 3, 1)).astype(jnp.float32)

    def conv(x, w, b, pad):
        y = lax.conv_general_dilated(
            x, jnp.transpose(w, (2, 3, 1, 0)).astype(jnp.float32),
            window_strides=(1, 1), padding=((pad, pad), (pad, pad)),
            dimension_numbers=("NHWC", "HWIO", "NHWC"),
            precision=lax.Precision.HIGHEST)
        return y + b.reshape(1, 1, 1, -1)

    def maxpool(x):
        return lax.reduce_window(x, -jnp.inf, lax.max,
                                 (1, 3, 3, 1), (1, 2, 2, 1), "VALID")

    def lrn(x):
        sq = x * x
        p = jnp.pad(sq, ((0, 0), (0, 0), (0, 0), (1, 1)))
        ssum = p[..., 0:-2] + p[..., 1:-1] + p[..., 2:]
        return x / (LRN_K + (LRN_ALPHA / LRN_SIZE) * ssum) ** LRN_BETA

    y = jnp.maximum(conv(x, w1, b1, 2), 0.0)
    y = maxpool(y)
    y = lrn(y)
    y = jnp.maximum(conv(y, w2, b2, 1), 0.0)
    y = jnp.maximum(conv(y, w3, b3, 1), 0.0)
    y = maxpool(y)
    return jnp.transpose(y, (0, 3, 1, 2))


if __name__ == "__main__":
    key = jax.random.PRNGKey(0)
    ks = jax.random.split(key, 7)
    x = jax.random.normal(ks[0], (N, C_IN, H, W), jnp.float32)
    # Deterministic synthetic parameters (PyTorch weight layout: (out, in, kH, kW)).
    w1 = jax.random.normal(ks[1], (C1, C_IN, K1, K1), jnp.float32) * 0.1
    b1 = jax.random.normal(ks[2], (C1,), jnp.float32) * 0.1
    w2 = jax.random.normal(ks[3], (C2, C1, K2, K2), jnp.float32) * 0.05
    b2 = jax.random.normal(ks[4], (C2,), jnp.float32) * 0.05
    w3 = jax.random.normal(ks[5], (C2, C2, K2, K2), jnp.float32) * 0.05
    b3 = jax.random.normal(ks[6], (C2,), jnp.float32) * 0.05
    params = (w1, b1, w2, b2, w3, b3)

    out = jax.block_until_ready(net_exit1_part2l_forward(x, params))
    assert out.shape == (N, C2, P2H, P2W), out.shape

    ref = jax.block_until_ready(_reference_forward(x, params))
    assert bool(jnp.allclose(out, ref, rtol=1e-3, atol=1e-4)), "mismatch vs reference"

    print("KERNEL_OK")
</pallas_src>

<mosaic_0001>
module attributes {stable_mosaic.version = 11 : i64} {
  func.func @_alexnet_branch_kernel(%arg0: memref<512x75xf32, #tpu.memory_space<vmem>>, %arg1: memref<75x64xf32, #tpu.memory_space<vmem>>, %arg2: memref<1x64xf32, #tpu.memory_space<vmem>>, %arg3: memref<64x64xf32, #tpu.memory_space<vmem>>, %arg4: memref<3x3x64x32xf32, #tpu.memory_space<vmem>>, %arg5: memref<1x32xf32, #tpu.memory_space<vmem>>, %arg6: memref<3x3x32x32xf32, #tpu.memory_space<vmem>>, %arg7: memref<1x32xf32, #tpu.memory_space<vmem>>, %arg8: memref<2x3x3x32xf32, #tpu.memory_space<vmem>>, %arg9: memref<2x7x18x64xf32, #tpu.memory_space<vmem>>, %arg10: memref<2x9x10x64xf32, #tpu.memory_space<vmem>>, %arg11: memref<2x9x10x32xf32, #tpu.memory_space<vmem>>, %arg12: memref<2x3x8x32xf32, #tpu.memory_space<vmem>>) attributes {dimension_semantics = [], scalar_prefetch = 0 : i64, scratch_operands = 4 : i64, tpu.core_type = #tpu.core_type<tc>} {
    %c0 = arith.constant 0 : index
    %c0_0 = arith.constant 0 : index
    %0 = vector.load %arg0[%c0, %c0_0] : memref<512x75xf32, #tpu.memory_space<vmem>>, vector<512x75xf32>
    %c0_1 = arith.constant 0 : index
    %c0_2 = arith.constant 0 : index
    %1 = vector.load %arg1[%c0_1, %c0_2] : memref<75x64xf32, #tpu.memory_space<vmem>>, vector<75x64xf32>
    %cst = arith.constant dense<0.000000e+00> : vector<512x64xf32>
    %2 = tpu.matmul %0, %1, %cst {dimension_numbers = #tpu.dot_dimension_numbers<[1], [0], [0], [1], [0, 0, 1, 1], [], []>} : vector<512x75xf32>, vector<75x64xf32>, vector<512x64xf32> -> vector<512x64xf32>
    %c0_3 = arith.constant 0 : index
    %c0_4 = arith.constant 0 : index
    %3 = vector.load %arg2[%c0_3, %c0_4] : memref<1x64xf32, #tpu.memory_space<vmem>>, vector<1x64xf32>
    %4 = vector.broadcast %3 : vector<1x64xf32> to vector<512x64xf32>
    %5 = arith.addf %2, %4 : vector<512x64xf32>
    %cst_5 = arith.constant 0.000000e+00 : f32
    %6 = vector.broadcast %cst_5 : f32 to vector<512x64xf32>
    %7 = arith.maximumf %5, %6 : vector<512x64xf32>
    %8 = vector.shape_cast %7 : vector<512x64xf32> to vector<2x8x2x16x64xf32>
    %9 = vector.extract_strided_slice %8 {offsets = [0, 0, 0, 0, 0], sizes = [2, 8, 1, 16, 64], strides = [1, 1, 1, 1, 1]} : vector<2x8x2x16x64xf32> to vector<2x8x1x16x64xf32>
    %10 = vector.shape_cast %9 : vector<2x8x1x16x64xf32> to vector<2x8x16x64xf32>
    %11 = vector.extract_strided_slice %8 {offsets = [0, 0, 1, 0, 0], sizes = [2, 8, 1, 16, 64], strides = [1, 1, 1, 1, 1]} : vector<2x8x2x16x64xf32> to vector<2x8x1x16x64xf32>
    %12 = vector.shape_cast %11 : vector<2x8x1x16x64xf32> to vector<2x8x16x64xf32>
    %13 = vector.extract_strided_slice %10 {offsets = [0, 0, 0, 0], sizes = [2, 7, 16, 64], strides = [1, 1, 1, 1]} : vector<2x8x16x64xf32> to vector<2x7x16x64xf32>
    %14 = vector.extract_strided_slice %12 {offsets = [0, 0, 0, 0], sizes = [2, 7, 16, 64], strides = [1, 1, 1, 1]} : vector<2x8x16x64xf32> to vector<2x7x16x64xf32>
    %15 = arith.maximumf %13, %14 : vector<2x7x16x64xf32>
    %16 = vector.extract_strided_slice %10 {offsets = [0, 1, 0, 0], sizes = [2, 7, 16, 64], strides = [1, 1, 1, 1]} : vector<2x8x16x64xf32> to vector<2x7x16x64xf32>
    %17 = arith.maximumf %15, %16 : vector<2x7x16x64xf32>
    %c0_6 = arith.constant 0 : index
    %c0_7 = arith.constant 0 : index
    %c0_8 = arith.constant 0 : index
    %c0_9 = arith.constant 0 : index
    %18 = vector.load %arg9[%c0_6, %c0_7, %c0_8, %c0_9] : memref<2x7x18x64xf32, #tpu.memory_space<vmem>>, vector<2x7x16x64xf32>
    tpu.vector_store %arg9[%c0_6, %c0_7, %c0_8, %c0_9], %17 {strides = array<i32>} : memref<2x7x18x64xf32, #tpu.memory_space<vmem>>, vector<2x7x16x64xf32>,
    %cst_10 = arith.constant 0.000000e+00 : f32
    %19 = vector.broadcast %cst_10 : f32 to vector<2x7x2x64xf32>
    %c0_11 = arith.constant 0 : index
    %c0_12 = arith.constant 0 : index
    %c16 = arith.constant 16 : index
    %c0_13 = arith.constant 0 : index
    %20 = vector.load %arg9[%c0_11, %c0_12, %c16, %c0_13] : memref<2x7x18x64xf32, #tpu.memory_space<vmem>>, vector<2x7x2x64xf32>
    tpu.vector_store %arg9[%c0_11, %c0_12, %c16, %c0_13], %19 {strides = array<i32>} : memref<2x7x18x64xf32, #tpu.memory_space<vmem>>, vector<2x7x2x64xf32>,
    %c0_14 = arith.constant 0 : index
    %c0_15 = arith.constant 0 : index
    %c0_16 = arith.constant 0 : index
    %c0_17 = arith.constant 0 : index
    %21 = tpu.strided_load %arg9[%c0_14, %c0_15, %c0_16, %c0_17] {strides = array<i32: 1, 1, 2, 1>} : memref<2x7x18x64xf32, #tpu.memory_space<vmem>>, vector<2x7x8x64xf32>
    %c0_18 = arith.constant 0 : index
    %c0_19 = arith.constant 0 : index
    %c1 = arith.constant 1 : index
    %c0_20 = arith.constant 0 : index
    %22 = tpu.strided_load %arg9[%c0_18, %c0_19, %c1, %c0_20] {strides = array<i32: 1, 1, 2, 1>} : memref<2x7x18x64xf32, #tpu.memory_space<vmem>>, vector<2x7x8x64xf32>
    %c0_21 = arith.constant 0 : index
    %c0_22 = arith.constant 0 : index
    %c2 = arith.constant 2 : index
    %c0_23 = arith.constant 0 : index
    %23 = tpu.strided_load %arg9[%c0_21, %c0_22, %c2, %c0_23] {strides = array<i32: 1, 1, 2, 1>} : memref<2x7x18x64xf32, #tpu.memory_space<vmem>>, vector<2x7x8x64xf32>
    %24 = arith.maximumf %21, %22 : vector<2x7x8x64xf32>
    %25 = arith.maximumf %24, %23 : vector<2x7x8x64xf32>
    %26 = vector.shape_cast %25 : vector<2x7x8x64xf32> to vector<112x64xf32>
    %27 = arith.mulf %26, %26 : vector<112x64xf32>
    %c0_24 = arith.constant 0 : index
    %c0_25 = arith.constant 0 : index
    %28 = vector.load %arg3[%c0_24, %c0_25] : memref<64x64xf32, #tpu.memory_space<vmem>>, vector<64x64xf32>
    %cst_26 = arith.constant dense<0.000000e+00> : vector<112x64xf32>
    %29 = tpu.matmul %27, %28, %cst_26 {dimension_numbers = #tpu.dot_dimension_numbers<[1], [0], [0], [1], [0, 0, 1, 1], [], []>} : vector<112x64xf32>, vector<64x64xf32>, vector<112x64xf32> -> vector<112x64xf32>
    %cst_27 = arith.constant 1.66666669E-5 : f32
    %30 = vector.broadcast %cst_27 : f32 to vector<112x64xf32>
    %31 = arith.mulf %30, %29 : vector<112x64xf32>
    %cst_28 = arith.constant 1.000000e+00 : f32
    %32 = vector.broadcast %cst_28 : f32 to vector<112x64xf32>
    %33 = arith.addf %32, %31 : vector<112x64xf32>
    %34 = math.log %33 : vector<112x64xf32>
    %cst_29 = arith.constant -7.500000e-01 : f32
    %35 = vector.broadcast %cst_29 : f32 to vector<112x64xf32>
    %36 = arith.mulf %35, %34 : vector<112x64xf32>
    %37 = math.exp %36 : vector<112x64xf32>
    %38 = arith.mulf %26, %37 : vector<112x64xf32>
    %39 = vector.shape_cast %38 : vector<112x64xf32> to vector<2x7x8x64xf32>
    %cst_30 = arith.constant 0.000000e+00 : f32
    %40 = vector.broadcast %cst_30 : f32 to vector<2x9x10x64xf32>
    %c0_31 = arith.constant 0 : index
    %c0_32 = arith.constant 0 : index
    %c0_33 = arith.constant 0 : index
    %c0_34 = arith.constant 0 : index
    %41 = vector.load %arg10[%c0_31, %c0_32, %c0_33, %c0_34] : memref<2x9x10x64xf32, #tpu.memory_space<vmem>>, vector<2x9x10x64xf32>
    tpu.vector_store %arg10[%c0_31, %c0_32, %c0_33, %c0_34], %40 {strides = array<i32>} : memref<2x9x10x64xf32, #tpu.memory_space<vmem>>, vector<2x9x10x64xf32>,
    %42 = vector.extract_strided_slice %39 {offsets = [0, 0, 0, 0], sizes = [2, 7, 7, 64], strides = [1, 1, 1, 1]} : vector<2x7x8x64xf32> to vector<2x7x7x64xf32>
    %c0_35 = arith.constant 0 : index
    %c1_36 = arith.constant 1 : index
    %c1_37 = arith.constant 1 : index
    %c0_38 = arith.constant 0 : index
    %43 = vector.load %arg10[%c0_35, %c1_36, %c1_37, %c0_38] : memref<2x9x10x64xf32, #tpu.memory_space<vmem>>, vector<2x7x7x64xf32>
    tpu.vector_store %arg10[%c0_35, %c1_36, %c1_37, %c0_38], %42 {strides = array<i32>} : memref<2x9x10x64xf32, #tpu.memory_space<vmem>>, vector<2x7x7x64xf32>,
    %c0_39 = arith.constant 0 : index
    %c0_40 = arith.constant 0 : index
    %44 = vector.load %arg5[%c0_39, %c0_40] : memref<1x32xf32, #tpu.memory_space<vmem>>, vector<1x32xf32>
    %45 = vector.shape_cast %44 : vector<1x32xf32> to vector<1x32xf32>
    %46 = vector.broadcast %45 : vector<1x32xf32> to vector<112x32xf32>
    %c0_41 = arith.constant 0 : index
    %c0_42 = arith.constant 0 : index
    %c0_43 = arith.constant 0 : index
    %c0_44 = arith.constant 0 : index
    %47 = vector.load %arg10[%c0_41, %c0_42, %c0_43, %c0_44] : memref<2x9x10x64xf32, #tpu.memory_space<vmem>>, vector<2x7x8x64xf32>
    %48 = vector.shape_cast %47 : vector<2x7x8x64xf32> to vector<112x64xf32>
    %c0_45 = arith.constant 0 : index
    %c0_46 = arith.constant 0 : index
    %c0_47 = arith.constant 0 : index
    %c0_48 = arith.constant 0 : index
    %49 = vector.load %arg4[%c0_45, %c0_46, %c0_47, %c0_48] : memref<3x3x64x32xf32, #tpu.memory_space<vmem>>, vector<1x1x64x32xf32>
    %50 = vector.shape_cast %49 : vector<1x1x64x32xf32> to vector<64x32xf32>
    %cst_49 = arith.constant dense<0.000000e+00> : vector<112x32xf32>
    %51 = tpu.matmul %48, %50, %cst_49 {dimension_numbers = #tpu.dot_dimension_numbers<[1], [0], [0], [1], [0, 0, 1, 1], [], []>} : vector<112x64xf32>, vector<64x32xf32>, vector<112x32xf32> -> vector<112x32xf32>
    %c0_50 = arith.constant 0 : index
    %c0_51 = arith.constant 0 : index
    %c1_52 = arith.constant 1 : index
    %c0_53 = arith.constant 0 : index
    %52 = vector.load %arg10[%c0_50, %c0_51, %c1_52, %c0_53] : memref<2x9x10x64xf32, #tpu.memory_space<vmem>>, vector<2x7x8x64xf32>
    %53 = vector.shape_cast %52 : vector<2x7x8x64xf32> to vector<112x64xf32>
    %c0_54 = arith.constant 0 : index
    %c1_55 = arith.constant 1 : index
    %c0_56 = arith.constant 0 : index
    %c0_57 = arith.constant 0 : index
    %54 = vector.load %arg4[%c0_54, %c1_55, %c0_56, %c0_57] : memref<3x3x64x32xf32, #tpu.memory_space<vmem>>, vector<1x1x64x32xf32>
    %55 = vector.shape_cast %54 : vector<1x1x64x32xf32> to vector<64x32xf32>
    %cst_58 = arith.constant dense<0.000000e+00> : vector<112x32xf32>
    %56 = tpu.matmul %53, %55, %cst_58 {dimension_numbers = #tpu.dot_dimension_numbers<[1], [0], [0], [1], [0, 0, 1, 1], [], []>} : vector<112x64xf32>, vector<64x32xf32>, vector<112x32xf32> -> vector<112x32xf32>
    %c0_59 = arith.constant 0 : index
    %c0_60 = arith.constant 0 : index
    %c2_61 = arith.constant 2 : index
    %c0_62 = arith.constant 0 : index
    %57 = vector.load %arg10[%c0_59, %c0_60, %c2_61, %c0_62] : memref<2x9x10x64xf32, #tpu.memory_space<vmem>>, vector<2x7x8x64xf32>
    %58 = vector.shape_cast %57 : vector<2x7x8x64xf32> to vector<112x64xf32>
    %c0_63 = arith.constant 0 : index
    %c2_64 = arith.constant 2 : index
    %c0_65 = arith.constant 0 : index
    %c0_66 = arith.constant 0 : index
    %59 = vector.load %arg4[%c0_63, %c2_64, %c0_65, %c0_66] : memref<3x3x64x32xf32, #tpu.memory_space<vmem>>, vector<1x1x64x32xf32>
    %60 = vector.shape_cast %59 : vector<1x1x64x32xf32> to vector<64x32xf32>
    %cst_67 = arith.constant dense<0.000000e+00> : vector<112x32xf32>
    %61 = tpu.matmul %58, %60, %cst_67 {dimension_numbers = #tpu.dot_dimension_numbers<[1], [0], [0], [1], [0, 0, 1, 1], [], []>} : vector<112x64xf32>, vector<64x32xf32>, vector<112x32xf32> -> vector<112x32xf32>
    %c0_68 = arith.constant 0 : index
    %c1_69 = arith.constant 1 : index
    %c0_70 = arith.constant 0 : index
    %c0_71 = arith.constant 0 : index
    %62 = vector.load %arg10[%c0_68, %c1_69, %c0_70, %c0_71] : memref<2x9x10x64xf32, #tpu.memory_space<vmem>>, vector<2x7x8x64xf32>
    %63 = vector.shape_cast %62 : vector<2x7x8x64xf32> to vector<112x64xf32>
    %c1_72 = arith.constant 1 : index
    %c0_73 = arith.constant 0 : index
    %c0_74 = arith.constant 0 : index
    %c0_75 = arith.constant 0 : index
    %64 = vector.load %arg4[%c1_72, %c0_73, %c0_74, %c0_75] : memref<3x3x64x32xf32, #tpu.memory_space<vmem>>, vector<1x1x64x32xf32>
    %65 = vector.shape_cast %64 : vector<1x1x64x32xf32> to vector<64x32xf32>
    %cst_76 = arith.constant dense<0.000000e+00> : vector<112x32xf32>
    %66 = tpu.matmul %63, %65, %cst_76 {dimension_numbers = #tpu.dot_dimension_numbers<[1], [0], [0], [1], [0, 0, 1, 1], [], []>} : vector<112x64xf32>, vector<64x32xf32>, vector<112x32xf32> -> vector<112x32xf32>
    %c0_77 = arith.constant 0 : index
    %c1_78 = arith.constant 1 : index
    %c1_79 = arith.constant 1 : index
    %c0_80 = arith.constant 0 : index
    %67 = vector.load %arg10[%c0_77, %c1_78, %c1_79, %c0_80] : memref<2x9x10x64xf32, #tpu.memory_space<vmem>>, vector<2x7x8x64xf32>
    %68 = vector.shape_cast %67 : vector<2x7x8x64xf32> to vector<112x64xf32>
    %c1_81 = arith.constant 1 : index
    %c1_82 = arith.constant 1 : index
    %c0_83 = arith.constant 0 : index
    %c0_84 = arith.constant 0 : index
    %69 = vector.load %arg4[%c1_81, %c1_82, %c0_83, %c0_84] : memref<3x3x64x32xf32, #tpu.memory_space<vmem>>, vector<1x1x64x32xf32>
    %70 = vector.shape_cast %69 : vector<1x1x64x32xf32> to vector<64x32xf32>
    %cst_85 = arith.constant dense<0.000000e+00> : vector<112x32xf32>
    %71 = tpu.matmul %68, %70, %cst_85 {dimension_numbers = #tpu.dot_dimension_numbers<[1], [0], [0], [1], [0, 0, 1, 1], [], []>} : vector<112x64xf32>, vector<64x32xf32>, vector<112x32xf32> -> vector<112x32xf32>
    %c0_86 = arith.constant 0 : index
    %c1_87 = arith.constant 1 : index
    %c2_88 = arith.constant 2 : index
    %c0_89 = arith.constant 0 : index
    %72 = vector.load %arg10[%c0_86, %c1_87, %c2_88, %c0_89] : memref<2x9x10x64xf32, #tpu.memory_space<vmem>>, vector<2x7x8x64xf32>
    %73 = vector.shape_cast %72 : vector<2x7x8x64xf32> to vector<112x64xf32>
    %c1_90 = arith.constant 1 : index
    %c2_91 = arith.constant 2 : index
    %c0_92 = arith.constant 0 : index
    %c0_93 = arith.constant 0 : index
    %74 = vector.load %arg4[%c1_90, %c2_91, %c0_92, %c0_93] : memref<3x3x64x32xf32, #tpu.memory_space<vmem>>, vector<1x1x64x32xf32>
    %75 = vector.shape_cast %74 : vector<1x1x64x32xf32> to vector<64x32xf32>
    %cst_94 = arith.constant dense<0.000000e+00> : vector<112x32xf32>
    %76 = tpu.matmul %73, %75, %cst_94 {dimension_numbers = #tpu.dot_dimension_numbers<[1], [0], [0], [1], [0, 0, 1, 1], [], []>} : vector<112x64xf32>, vector<64x32xf32>, vector<112x32xf32> -> vector<112x32xf32>
    %c0_95 = arith.constant 0 : index
    %c2_96 = arith.constant 2 : index
    %c0_97 = arith.constant 0 : index
    %c0_98 = arith.constant 0 : index
    %77 = vector.load %arg10[%c0_95, %c2_96, %c0_97, %c0_98] : memref<2x9x10x64xf32, #tpu.memory_space<vmem>>, vector<2x7x8x64xf32>
    %78 = vector.shape_cast %77 : vector<2x7x8x64xf32> to vector<112x64xf32>
    %c2_99 = arith.constant 2 : index
    %c0_100 = arith.constant 0 : index
    %c0_101 = arith.constant 0 : index
    %c0_102 = arith.constant 0 : index
    %79 = vector.load %arg4[%c2_99, %c0_100, %c0_101, %c0_102] : memref<3x3x64x32xf32, #tpu.memory_space<vmem>>, vector<1x1x64x32xf32>
    %80 = vector.shape_cast %79 : vector<1x1x64x32xf32> to vector<64x32xf32>
    %cst_103 = arith.constant dense<0.000000e+00> : vector<112x32xf32>
    %81 = tpu.matmul %78, %80, %cst_103 {dimension_numbers = #tpu.dot_dimension_numbers<[1], [0], [0], [1], [0, 0, 1, 1], [], []>} : vector<112x64xf32>, vector<64x32xf32>, vector<112x32xf32> -> vector<112x32xf32>
    %c0_104 = arith.constant 0 : index
    %c2_105 = arith.constant 2 : index
    %c1_106 = arith.constant 1 : index
    %c0_107 = arith.constant 0 : index
    %82 = vector.load %arg10[%c0_104, %c2_105, %c1_106, %c0_107] : memref<2x9x10x64xf32, #tpu.memory_space<vmem>>, vector<2x7x8x64xf32>
    %83 = vector.shape_cast %82 : vector<2x7x8x64xf32> to vector<112x64xf32>
    %c2_108 = arith.constant 2 : index
    %c1_109 = arith.constant 1 : index
    %c0_110 = arith.constant 0 : index
    %c0_111 = arith.constant 0 : index
    %84 = vector.load %arg4[%c2_108, %c1_109, %c0_110, %c0_111] : memref<3x3x64x32xf32, #tpu.memory_space<vmem>>, vector<1x1x64x32xf32>
    %85 = vector.shape_cast %84 : vector<1x1x64x32xf32> to vector<64x32xf32>
    %cst_112 = arith.constant dense<0.000000e+00> : vector<112x32xf32>
    %86 = tpu.matmul %83, %85, %cst_112 {dimension_numbers = #tpu.dot_dimension_numbers<[1], [0], [0], [1], [0, 0, 1, 1], [], []>} : vector<112x64xf32>, vector<64x32xf32>, vector<112x32xf32> -> vector<112x32xf32>
    %c0_113 = arith.constant 0 : index
    %c2_114 = arith.constant 2 : index
    %c2_115 = arith.constant 2 : index
    %c0_116 = arith.constant 0 : index
    %87 = vector.load %arg10[%c0_113, %c2_114, %c2_115, %c0_116] : memref<2x9x10x64xf32, #tpu.memory_space<vmem>>, vector<2x7x8x64xf32>
    %88 = vector.shape_cast %87 : vector<2x7x8x64xf32> to vector<112x64xf32>
    %c2_117 = arith.constant 2 : index
    %c2_118 = arith.constant 2 : index
    %c0_119 = arith.constant 0 : index
    %c0_120 = arith.constant 0 : index
    %89 = vector.load %arg4[%c2_117, %c2_118, %c0_119, %c0_120] : memref<3x3x64x32xf32, #tpu.memory_space<vmem>>, vector<1x1x64x32xf32>
    %90 = vector.shape_cast %89 : vector<1x1x64x32xf32> to vector<64x32xf32>
    %cst_121 = arith.constant dense<0.000000e+00> : vector<112x32xf32>
    %91 = tpu.matmul %88, %90, %cst_121 {dimension_numbers = #tpu.dot_dimension_numbers<[1], [0], [0], [1], [0, 0, 1, 1], [], []>} : vector<112x64xf32>, vector<64x32xf32>, vector<112x32xf32> -> vector<112x32xf32>
    %92 = arith.addf %46, %51 : vector<112x32xf32>
    %93 = arith.addf %56, %61 : vector<112x32xf32>
    %94 = arith.addf %66, %71 : vector<112x32xf32>
    %95 = arith.addf %76, %81 : vector<112x32xf32>
    %96 = arith.addf %86, %91 : vector<112x32xf32>
    %97 = arith.addf %92, %93 : vector<112x32xf32>
    %98 = arith.addf %94, %95 : vector<112x32xf32>
    %99 = arith.addf %97, %98 : vector<112x32xf32>
    %100 = arith.addf %99, %96 : vector<112x32xf32>
    %cst_122 = arith.constant 0.000000e+00 : f32
    %101 = vector.broadcast %cst_122 : f32 to vector<112x32xf32>
    %102 = arith.maximumf %100, %101 : vector<112x32xf32>
    %103 = vector.shape_cast %102 : vector<112x32xf32> to vector<2x7x8x32xf32>
    %cst_123 = arith.constant 0.000000e+00 : f32
    %104 = vector.broadcast %cst_123 : f32 to vector<2x9x10x32xf32>
    %c0_124 = arith.constant 0 : index
    %c0_125 = arith.constant 0 : index
    %c0_126 = arith.constant 0 : index
    %c0_127 = arith.constant 0 : index
    %105 = vector.load %arg11[%c0_124, %c0_125, %c0_126, %c0_127] : memref<2x9x10x32xf32, #tpu.memory_space<vmem>>, vector<2x9x10x32xf32>
    tpu.vector_store %arg11[%c0_124, %c0_125, %c0_126, %c0_127], %104 {strides = array<i32>} : memref<2x9x10x32xf32, #tpu.memory_space<vmem>>, vector<2x9x10x32xf32>,
    %106 = vector.extract_strided_slice %103 {offsets = [0, 0, 0, 0], sizes = [2, 7, 7, 32], strides = [1, 1, 1, 1]} : vector<2x7x8x32xf32> to vector<2x7x7x32xf32>
    %c0_128 = arith.constant 0 : index
    %c1_129 = arith.constant 1 : index
    %c1_130 = arith.constant 1 : index
    %c0_131 = arith.constant 0 : index
    %107 = vector.load %arg11[%c0_128, %c1_129, %c1_130, %c0_131] : memref<2x9x10x32xf32, #tpu.memory_space<vmem>>, vector<2x7x7x32xf32>
    tpu.vector_store %arg11[%c0_128, %c1_129, %c1_130, %c0_131], %106 {strides = array<i32>} : memref<2x9x10x32xf32, #tpu.memory_space<vmem>>, vector<2x7x7x32xf32>,
    %c0_132 = arith.constant 0 : index
    %c0_133 = arith.constant 0 : index
    %108 = vector.load %arg7[%c0_132, %c0_133] : memref<1x32xf32, #tpu.memory_space<vmem>>, vector<1x32xf32>
    %109 = vector.shape_cast %108 : vector<1x32xf32> to vector<1x32xf32>
    %110 = vector.broadcast %109 : vector<1x32xf32> to vector<112x32xf32>
    %c0_134 = arith.constant 0 : index
    %c0_135 = arith.constant 0 : index
    %c0_136 = arith.constant 0 : index
    %c0_137 = arith.constant 0 : index
    %111 = vector.load %arg11[%c0_134, %c0_135, %c0_136, %c0_137] : memref<2x9x10x32xf32, #tpu.memory_space<vmem>>, vector<2x7x8x32xf32>
    %112 = vector.shape_cast %111 : vector<2x7x8x32xf32> to vector<112x32xf32>
    %c0_138 = arith.constant 0 : index
    %c0_139 = arith.constant 0 : index
    %c0_140 = arith.constant 0 : index
    %c0_141 = arith.constant 0 : index
    %113 = vector.load %arg6[%c0_138, %c0_139, %c0_140, %c0_141] : memref<3x3x32x32xf32, #tpu.memory_space<vmem>>, vector<1x1x32x32xf32>
    %114 = vector.shape_cast %113 : vector<1x1x32x32xf32> to vector<32x32xf32>
    %cst_142 = arith.constant dense<0.000000e+00> : vector<112x32xf32>
    %115 = tpu.matmul %112, %114, %cst_142 {dimension_numbers = #tpu.dot_dimension_numbers<[1], [0], [0], [1], [0, 0, 1, 1], [], []>} : vector<112x32xf32>, vector<32x32xf32>, vector<112x32xf32> -> vector<112x32xf32>
    %c0_143 = arith.constant 0 : index
    %c0_144 = arith.constant 0 : index
    %c1_145 = arith.constant 1 : index
    %c0_146 = arith.constant 0 : index
    %116 = vector.load %arg11[%c0_143, %c0_144, %c1_145, %c0_146] : memref<2x9x10x32xf32, #tpu.memory_space<vmem>>, vector<2x7x8x32xf32>
    %117 = vector.shape_cast %116 : vector<2x7x8x32xf32> to vector<112x32xf32>
    %c0_147 = arith.constant 0 : index
    %c1_148 = arith.constant 1 : index
    %c0_149 = arith.constant 0 : index
    %c0_150 = arith.constant 0 : index
    %118 = vector.load %arg6[%c0_147, %c1_148, %c0_149, %c0_150] : memref<3x3x32x32xf32, #tpu.memory_space<vmem>>, vector<1x1x32x32xf32>
    %119 = vector.shape_cast %118 : vector<1x1x32x32xf32> to vector<32x32xf32>
    %cst_151 = arith.constant dense<0.000000e+00> : vector<112x32xf32>
    %120 = tpu.matmul %117, %119, %cst_151 {dimension_numbers = #tpu.dot_dimension_numbers<[1], [0], [0], [1], [0, 0, 1, 1], [], []>} : vector<112x32xf32>, vector<32x32xf32>, vector<112x32xf32> -> vector<112x32xf32>
    %c0_152 = arith.constant 0 : index
    %c0_153 = arith.constant 0 : index
    %c2_154 = arith.constant 2 : index
    %c0_155 = arith.constant 0 : index
    %121 = vector.load %arg11[%c0_152, %c0_153, %c2_154, %c0_155] : memref<2x9x10x32xf32, #tpu.memory_space<vmem>>, vector<2x7x8x32xf32>
    %122 = vector.shape_cast %121 : vector<2x7x8x32xf32> to vector<112x32xf32>
    %c0_156 = arith.constant 0 : index
    %c2_157 = arith.constant 2 : index
    %c0_158 = arith.constant 0 : index
    %c0_159 = arith.constant 0 : index
    %123 = vector.load %arg6[%c0_156, %c2_157, %c0_158, %c0_159] : memref<3x3x32x32xf32, #tpu.memory_space<vmem>>, vector<1x1x32x32xf32>
    %124 = vector.shape_cast %123 : vector<1x1x32x32xf32> to vector<32x32xf32>
    %cst_160 = arith.constant dense<0.000000e+00> : vector<112x32xf32>
    %125 = tpu.matmul %122, %124, %cst_160 {dimension_numbers = #tpu.dot_dimension_numbers<[1], [0], [0], [1], [0, 0, 1, 1], [], []>} : vector<112x32xf32>, vector<32x32xf32>, vector<112x32xf32> -> vector<112x32xf32>
    %c0_161 = arith.constant 0 : index
    %c1_162 = arith.constant 1 : index
    %c0_163 = arith.constant 0 : index
    %c0_164 = arith.constant 0 : index
    %126 = vector.load %arg11[%c0_161, %c1_162, %c0_163, %c0_164] : memref<2x9x10x32xf32, #tpu.memory_space<vmem>>, vector<2x7x8x32xf32>
    %127 = vector.shape_cast %126 : vector<2x7x8x32xf32> to vector<112x32xf32>
    %c1_165 = arith.constant 1 : index
    %c0_166 = arith.constant 0 : index
    %c0_167 = arith.constant 0 : index
    %c0_168 = arith.constant 0 : index
    %128 = vector.load %arg6[%c1_165, %c0_166, %c0_167, %c0_168] : memref<3x3x32x32xf32, #tpu.memory_space<vmem>>, vector<1x1x32x32xf32>
    %129 = vector.shape_cast %128 : vector<1x1x32x32xf32> to vector<32x32xf32>
    %cst_169 = arith.constant dense<0.000000e+00> : vector<112x32xf32>
    %130 = tpu.matmul %127, %129, %cst_169 {dimension_numbers = #tpu.dot_dimension_numbers<[1], [0], [0], [1], [0, 0, 1, 1], [], []>} : vector<112x32xf32>, vector<32x32xf32>, vector<112x32xf32> -> vector<112x32xf32>
    %c0_170 = arith.constant 0 : index
    %c1_171 = arith.constant 1 : index
    %c1_172 = arith.constant 1 : index
    %c0_173 = arith.constant 0 : index
    %131 = vector.load %arg11[%c0_170, %c1_171, %c1_172, %c0_173] : memref<2x9x10x32xf32, #tpu.memory_space<vmem>>, vector<2x7x8x32xf32>
    %132 = vector.shape_cast %131 : vector<2x7x8x32xf32> to vector<112x32xf32>
    %c1_174 = arith.constant 1 : index
    %c1_175 = arith.constant 1 : index
    %c0_176 = arith.constant 0 : index
    %c0_177 = arith.constant 0 : index
    %133 = vector.load %arg6[%c1_174, %c1_175, %c0_176, %c0_177] : memref<3x3x32x32xf32, #tpu.memory_space<vmem>>, vector<1x1x32x32xf32>
    %134 = vector.shape_cast %133 : vector<1x1x32x32xf32> to vector<32x32xf32>
    %cst_178 = arith.constant dense<0.000000e+00> : vector<112x32xf32>
    %135 = tpu.matmul %132, %134, %cst_178 {dimension_numbers = #tpu.dot_dimension_numbers<[1], [0], [0], [1], [0, 0, 1, 1], [], []>} : vector<112x32xf32>, vector<32x32xf32>, vector<112x32xf32> -> vector<112x32xf32>
    %c0_179 = arith.constant 0 : index
    %c1_180 = arith.constant 1 : index
    %c2_181 = arith.constant 2 : index
    %c0_182 = arith.constant 0 : index
    %136 = vector.load %arg11[%c0_179, %c1_180, %c2_181, %c0_182] : memref<2x9x10x32xf32, #tpu.memory_space<vmem>>, vector<2x7x8x32xf32>
    %137 = vector.shape_cast %136 : vector<2x7x8x32xf32> to vector<112x32xf32>
    %c1_183 = arith.constant 1 : index
    %c2_184 = arith.constant 2 : index
    %c0_185 = arith.constant 0 : index
    %c0_186 = arith.constant 0 : index
    %138 = vector.load %arg6[%c1_183, %c2_184, %c0_185, %c0_186] : memref<3x3x32x32xf32, #tpu.memory_space<vmem>>, vector<1x1x32x32xf32>
    %139 = vector.shape_cast %138 : vector<1x1x32x32xf32> to vector<32x32xf32>
    %cst_187 = arith.constant dense<0.000000e+00> : vector<112x32xf32>
    %140 = tpu.matmul %137, %139, %cst_187 {dimension_numbers = #tpu.dot_dimension_numbers<[1], [0], [0], [1], [0, 0, 1, 1], [], []>} : vector<112x32xf32>, vector<32x32xf32>, vector<112x32xf32> -> vector<112x32xf32>
    %c0_188 = arith.constant 0 : index
    %c2_189 = arith.constant 2 : index
    %c0_190 = arith.constant 0 : index
    %c0_191 = arith.constant 0 : index
    %141 = vector.load %arg11[%c0_188, %c2_189, %c0_190, %c0_191] : memref<2x9x10x32xf32, #tpu.memory_space<vmem>>, vector<2x7x8x32xf32>
    %142 = vector.shape_cast %141 : vector<2x7x8x32xf32> to vector<112x32xf32>
    %c2_192 = arith.constant 2 : index
    %c0_193 = arith.constant 0 : index
    %c0_194 = arith.constant 0 : index
    %c0_195 = arith.constant 0 : index
    %143 = vector.load %arg6[%c2_192, %c0_193, %c0_194, %c0_195] : memref<3x3x32x32xf32, #tpu.memory_space<vmem>>, vector<1x1x32x32xf32>
    %144 = vector.shape_cast %143 : vector<1x1x32x32xf32> to vector<32x32xf32>
    %cst_196 = arith.constant dense<0.000000e+00> : vector<112x32xf32>
    %145 = tpu.matmul %142, %144, %cst_196 {dimension_numbers = #tpu.dot_dimension_numbers<[1], [0], [0], [1], [0, 0, 1, 1], [], []>} : vector<112x32xf32>, vector<32x32xf32>, vector<112x32xf32> -> vector<112x32xf32>
    %c0_197 = arith.constant 0 : index
    %c2_198 = arith.constant 2 : index
    %c1_199 = arith.constant 1 : index
    %c0_200 = arith.constant 0 : index
    %146 = vector.load %arg11[%c0_197, %c2_198, %c1_199, %c0_200] : memref<2x9x10x32xf32, #tpu.memory_space<vmem>>, vector<2x7x8x32xf32>
    %147 = vector.shape_cast %146 : vector<2x7x8x32xf32> to vector<112x32xf32>
    %c2_201 = arith.constant 2 : index
    %c1_202 = arith.constant 1 : index
    %c0_203 = arith.constant 0 : index
    %c0_204 = arith.constant 0 : index
    %148 = vector.load %arg6[%c2_201, %c1_202, %c0_203, %c0_204] : memref<3x3x32x32xf32, #tpu.memory_space<vmem>>, vector<1x1x32x32xf32>
    %149 = vector.shape_cast %148 : vector<1x1x32x32xf32> to vector<32x32xf32>
    %cst_205 = arith.constant dense<0.000000e+00> : vector<112x32xf32>
    %150 = tpu.matmul %147, %149, %cst_205 {dimension_numbers = #tpu.dot_dimension_numbers<[1], [0], [0], [1], [0, 0, 1, 1], [], []>} : vector<112x32xf32>, vector<32x32xf32>, vector<112x32xf32> -> vector<112x32xf32>
    %c0_206 = arith.constant 0 : index
    %c2_207 = arith.constant 2 : index
    %c2_208 = arith.constant 2 : index
    %c0_209 = arith.constant 0 : index
    %151 = vector.load %arg11[%c0_206, %c2_207, %c2_208, %c0_209] : memref<2x9x10x32xf32, #tpu.memory_space<vmem>>, vector<2x7x8x32xf32>
    %152 = vector.shape_cast %151 : vector<2x7x8x32xf32> to vector<112x32xf32>
    %c2_210 = arith.constant 2 : index
    %c2_211 = arith.constant 2 : index
    %c0_212 = arith.constant 0 : index
    %c0_213 = arith.constant 0 : index
    %153 = vector.load %arg6[%c2_210, %c2_211, %c0_212, %c0_213] : memref<3x3x32x32xf32, #tpu.memory_space<vmem>>, vector<1x1x32x32xf32>
    %154 = vector.shape_cast %153 : vector<1x1x32x32xf32> to vector<32x32xf32>
    %cst_214 = arith.constant dense<0.000000e+00> : vector<112x32xf32>
    %155 = tpu.matmul %152, %154, %cst_214 {dimension_numbers = #tpu.dot_dimension_numbers<[1], [0], [0], [1], [0, 0, 1, 1], [], []>} : vector<112x32xf32>, vector<32x32xf32>, vector<112x32xf32> -> vector<112x32xf32>
    %156 = arith.addf %110, %115 : vector<112x32xf32>
    %157 = arith.addf %120, %125 : vector<112x32xf32>
    %158 = arith.addf %130, %135 : vector<112x32xf32>
    %159 = arith.addf %140, %145 : vector<112x32xf32>
    %160 = arith.addf %150, %155 : vector<112x32xf32>
    %161 = arith.addf %156, %157 : vector<112x32xf32>
    %162 = arith.addf %158, %159 : vector<112x32xf32>
    %163 = arith.addf %161, %162 : vector<112x32xf32>
    %164 = arith.addf %163, %160 : vector<112x32xf32>
    %cst_215 = arith.constant 0.000000e+00 : f32
    %165 = vector.broadcast %cst_215 : f32 to vector<112x32xf32>
    %166 = arith.maximumf %164, %165 : vector<112x32xf32>
    %167 = vector.shape_cast %166 : vector<112x32xf32> to vector<2x7x8x32xf32>
    %168 = vector.extract_strided_slice %167 {offsets = [0, 0, 0, 0], sizes = [2, 1, 8, 32], strides = [1, 1, 1, 1]} : vector<2x7x8x32xf32> to vector<2x1x8x32xf32>
    %169 = vector.shape_cast %168 : vector<2x1x8x32xf32> to vector<2x8x32xf32>
    %170 = vector.extract_strided_slice %167 {offsets = [0, 1, 0, 0], sizes = [2, 1, 8, 32], strides = [1, 1, 1, 1]} : vector<2x7x8x32xf32> to vector<2x1x8x32xf32>
    %171 = vector.shape_cast %170 : vector<2x1x8x32xf32> to vector<2x8x32xf32>
    %172 = arith.maximumf %169, %171 : vector<2x8x32xf32>
    %173 = vector.extract_strided_slice %167 {offsets = [0, 2, 0, 0], sizes = [2, 1, 8, 32], strides = [1, 1, 1, 1]} : vector<2x7x8x32xf32> to vector<2x1x8x32xf32>
    %174 = vector.shape_cast %173 : vector<2x1x8x32xf32> to vector<2x8x32xf32>
    %175 = arith.maximumf %172, %174 : vector<2x8x32xf32>
    %c0_216 = arith.constant 0 : index
    %c0_217 = arith.constant 0 : index
    %c0_218 = arith.constant 0 : index
    %c0_219 = arith.constant 0 : index
    %176 = vector.load %arg12[%c0_216, %c0_217, %c0_218, %c0_219] : memref<2x3x8x32xf32, #tpu.memory_space<vmem>>, vector<2x1x8x32xf32>
    %177 = vector.shape_cast %176 : vector<2x1x8x32xf32> to vector<2x8x32xf32>
    %178 = vector.shape_cast %175 : vector<2x8x32xf32> to vector<2x1x8x32xf32>
    tpu.vector_store %arg12[%c0_216, %c0_217, %c0_218, %c0_219], %178 {strides = array<i32>} : memref<2x3x8x32xf32, #tpu.memory_space<vmem>>, vector<2x1x8x32xf32>,
    %179 = vector.extract_strided_slice %167 {offsets = [0, 2, 0, 0], sizes = [2, 1, 8, 32], strides = [1, 1, 1, 1]} : vector<2x7x8x32xf32> to vector<2x1x8x32xf32>
    %180 = vector.shape_cast %179 : vector<2x1x8x32xf32> to vector<2x8x32xf32>
    %181 = vector.extract_strided_slice %167 {offsets = [0, 3, 0, 0], sizes = [2, 1, 8, 32], strides = [1, 1, 1, 1]} : vector<2x7x8x32xf32> to vector<2x1x8x32xf32>
    %182 = vector.shape_cast %181 : vector<2x1x8x32xf32> to vector<2x8x32xf32>
    %183 = arith.maximumf %180, %182 : vector<2x8x32xf32>
    %184 = vector.extract_strided_slice %167 {offsets = [0, 4, 0, 0], sizes = [2, 1, 8, 32], strides = [1, 1, 1, 1]} : vector<2x7x8x32xf32> to vector<2x1x8x32xf32>
    %185 = vector.shape_cast %184 : vector<2x1x8x32xf32> to vector<2x8x32xf32>
    %186 = arith.maximumf %183, %185 : vector<2x8x32xf32>
    %c0_220 = arith.constant 0 : index
    %c1_221 = arith.constant 1 : index
    %c0_222 = arith.constant 0 : index
    %c0_223 = arith.constant 0 : index
    %187 = vector.load %arg12[%c0_220, %c1_221, %c0_222, %c0_223] : memref<2x3x8x32xf32, #tpu.memory_space<vmem>>, vector<2x1x8x32xf32>
    %188 = vector.shape_cast %187 : vector<2x1x8x32xf32> to vector<2x8x32xf32>
    %189 = vector.shape_cast %186 : vector<2x8x32xf32> to vector<2x1x8x32xf32>
    tpu.vector_store %arg12[%c0_220, %c1_221, %c0_222, %c0_223], %189 {strides = array<i32>} : memref<2x3x8x32xf32, #tpu.memory_space<vmem>>, vector<2x1x8x32xf32>,
    %190 = vector.extract_strided_slice %167 {offsets = [0, 4, 0, 0], sizes = [2, 1, 8, 32], strides = [1, 1, 1, 1]} : vector<2x7x8x32xf32> to vector<2x1x8x32xf32>
    %191 = vector.shape_cast %190 : vector<2x1x8x32xf32> to vector<2x8x32xf32>
    %192 = vector.extract_strided_slice %167 {offsets = [0, 5, 0, 0], sizes = [2, 1, 8, 32], strides = [1, 1, 1, 1]} : vector<2x7x8x32xf32> to vector<2x1x8x32xf32>
    %193 = vector.shape_cast %192 : vector<2x1x8x32xf32> to vector<2x8x32xf32>
    %194 = arith.maximumf %191, %193 : vector<2x8x32xf32>
    %195 = vector.extract_strided_slice %167 {offsets = [0, 6, 0, 0], sizes = [2, 1, 8, 32], strides = [1, 1, 1, 1]} : vector<2x7x8x32xf32> to vector<2x1x8x32xf32>
    %196 = vector.shape_cast %195 : vector<2x1x8x32xf32> to vector<2x8x32xf32>
    %197 = arith.maximumf %194, %196 : vector<2x8x32xf32>
    %c0_224 = arith.constant 0 : index
    %c2_225 = arith.constant 2 : index
    %c0_226 = arith.constant 0 : index
    %c0_227 = arith.constant 0 : index
    %198 = vector.load %arg12[%c0_224, %c2_225, %c0_226, %c0_227] : memref<2x3x8x32xf32, #tpu.memory_space<vmem>>, vector<2x1x8x32xf32>
    %199 = vector.shape_cast %198 : vector<2x1x8x32xf32> to vector<2x8x32xf32>
    %200 = vector.shape_cast %197 : vector<2x8x32xf32> to vector<2x1x8x32xf32>
    tpu.vector_store %arg12[%c0_224, %c2_225, %c0_226, %c0_227], %200 {strides = array<i32>} : memref<2x3x8x32xf32, #tpu.memory_space<vmem>>, vector<2x1x8x32xf32>,
    %c0_228 = arith.constant 0 : index
    %c0_229 = arith.constant 0 : index
    %c0_230 = arith.constant 0 : index
    %c0_231 = arith.constant 0 : index
    %201 = tpu.strided_load %arg12[%c0_228, %c0_229, %c0_230, %c0_231] {strides = array<i32: 1, 1, 2, 1>} : memref<2x3x8x32xf32, #tpu.memory_space<vmem>>, vector<2x3x3x32xf32>
    %c0_232 = arith.constant 0 : index
    %c0_233 = arith.constant 0 : index
    %c1_234 = arith.constant 1 : index
    %c0_235 = arith.constant 0 : index
    %202 = tpu.strided_load %arg12[%c0_232, %c0_233, %c1_234, %c0_235] {strides = array<i32: 1, 1, 2, 1>} : memref<2x3x8x32xf32, #tpu.memory_space<vmem>>, vector<2x3x3x32xf32>
    %c0_236 = arith.constant 0 : index
    %c0_237 = arith.constant 0 : index
    %c2_238 = arith.constant 2 : index
    %c0_239 = arith.constant 0 : index
    %203 = tpu.strided_load %arg12[%c0_236, %c0_237, %c2_238, %c0_239] {strides = array<i32: 1, 1, 2, 1>} : memref<2x3x8x32xf32, #tpu.memory_space<vmem>>, vector<2x3x3x32xf32>
    %204 = arith.maximumf %201, %202 : vector<2x3x3x32xf32>
    %205 = arith.maximumf %204, %203 : vector<2x3x3x32xf32>
    %c0_240 = arith.constant 0 : index
    %c0_241 = arith.constant 0 : index
    %c0_242 = arith.constant 0 : index
    %c0_243 = arith.constant 0 : index
    %206 = vector.load %arg8[%c0_240, %c0_241, %c0_242, %c0_243] : memref<2x3x3x32xf32, #tpu.memory_space<vmem>>, vector<2x3x3x32xf32>
    tpu.vector_store %arg8[%c0_240, %c0_241, %c0_242, %c0_243], %205 {strides = array<i32>} : memref<2x3x3x32xf32, #tpu.memory_space<vmem>>, vector<2x3x3x32xf32>,
    return
  }
}

</mosaic_0001>

<llo_original>
// kernel: net_exit1_part2l_forward.1
$region0: #{net_exit1_part2l_forward.1}
  #allocation0 [shape = 'u32[]', space=smem, size = 0x4, offset = 0x4, fixed_abs, tag = 'smem constant byte address 0x4 - core index']
  #allocation1 [shape = 'u32[144,128]{1,0:T(1,128)}', space=vmem, size = 0x12000, scoped, tag = 'internal scratch']
  #allocation2 [shape = 'f32[2,7,18,64]{3,2,1,0:T(8,128)}', space=vmem, size = 0x2a000, scoped, tag = 'scratch operand']
  #allocation3 [shape = 'f32[2,9,10,64]{3,2,1,0:T(8,128)}', space=vmem, size = 0x24000, scoped, tag = 'scratch operand']
  #allocation4 [shape = 'f32[2,9,10,32]{3,2,1,0:T(8,128)}', space=vmem, size = 0x24000, scoped, tag = 'scratch operand']
  #allocation5 [shape = 'f32[2,3,8,32]{3,2,1,0:T(8,128)}', space=vmem, size = 0x6000, scoped, tag = 'scratch operand']
  %s0 = inlined_call_operand.vmem [shape: f32[512,75], index: 0, kind: input, shape index: {}]
  %s1 = inlined_call_operand.vmem [shape: f32[75,64], index: 1, kind: input, shape index: {}]
  %s2 = inlined_call_operand.vmem [shape: f32[1,64], index: 2, kind: input, shape index: {}]
  %s3 = inlined_call_operand.vmem [shape: f32[64,64], index: 3, kind: input, shape index: {}]
  %s4 = inlined_call_operand.vmem [shape: f32[3,3,64,32], index: 4, kind: input, shape index: {}]
  %s5 = inlined_call_operand.vmem [shape: f32[1,32], index: 5, kind: input, shape index: {}]
  %s6 = inlined_call_operand.vmem [shape: f32[3,3,32,32], index: 6, kind: input, shape index: {}]
  %s7 = inlined_call_operand.vmem [shape: f32[1,32], index: 7, kind: input, shape index: {}]
  %s8 = inlined_call_operand.vmem [shape: f32[2,3,3,32], index: 8, kind: output, shape index: {}]
  %s9 = sld [smem:[#allocation0]]
  $region42: #{net_exit1_part2l_forward.1} parent=0
    _
  %s11 = ssub.s32 1, %s9
  %s12 = scalar_select 0, %s11, %s9
  // Predicated region
  $region2: #{net_exit1_part2l_forward.1} parent=0 // pred_check
    _
  $region3: #{net_exit1_part2l_forward.1} parent=0 // pred_check_branch
    %14 = sbr.rel (0) target = $region5
  $region4: #{net_exit1_part2l_forward.1} parent=0 // pred_region
    _
  $region5: #{net_exit1_part2l_forward.1} parent=0 // pred_fallthru
    _
  // Predicated region
  $region6: #{net_exit1_part2l_forward.1} parent=0 // pred_check
    _
  $region7: #{net_exit1_part2l_forward.1} parent=0 // pred_check_branch
    %16 = sbr.rel (0) target = $region9
  $region8: #{net_exit1_part2l_forward.1} parent=0 // pred_region
    _
  $region9: #{net_exit1_part2l_forward.1} parent=0 // pred_fallthru
    _
  // Predicated region
  $region10: #{net_exit1_part2l_forward.1} parent=0 // pred_check
    _
  $region11: #{net_exit1_part2l_forward.1} parent=0 // pred_check_branch
    %18 = sbr.rel (0) target = $region13
  $region12: #{net_exit1_part2l_forward.1} parent=0 // pred_region
    _
  $region13: #{net_exit1_part2l_forward.1} parent=0 // pred_fallthru
    _
  // Predicated region
  $region14: #{net_exit1_part2l_forward.1} parent=0 // pred_check
    _
  $region15: #{net_exit1_part2l_forward.1} parent=0 // pred_check_branch
    %20 = sbr.rel (0) target = $region17
  $region16: #{net_exit1_part2l_forward.1} parent=0 // pred_region
    _
  $region17: #{net_exit1_part2l_forward.1} parent=0 // pred_fallthru
    _
  // Predicated region
  $region18: #{net_exit1_part2l_forward.1} parent=0 // pred_check
    _
  $region19: #{net_exit1_part2l_forward.1} parent=0 // pred_check_branch
    %22 = sbr.rel (0) target = $region21
  $region20: #{net_exit1_part2l_forward.1} parent=0 // pred_region
    _
  $region21: #{net_exit1_part2l_forward.1} parent=0 // pred_fallthru
    _
  // Predicated region
  $region22: #{net_exit1_part2l_forward.1} parent=0 // pred_check
    _
  $region23: #{net_exit1_part2l_forward.1} parent=0 // pred_check_branch
    %24 = sbr.rel (0) target = $region25
  $region24: #{net_exit1_part2l_forward.1} parent=0 // pred_region
    _
  $region25: #{net_exit1_part2l_forward.1} parent=0 // pred_fallthru
    _
  // Predicated region
  $region26: #{net_exit1_part2l_forward.1} parent=0 // pred_check
    _
  $region27: #{net_exit1_part2l_forward.1} parent=0 // pred_check_branch
    %26 = sbr.rel (0) target = $region29
  $region28: #{net_exit1_part2l_forward.1} parent=0 // pred_region
    _
  $region29: #{net_exit1_part2l_forward.1} parent=0 // pred_fallthru
    _
  // Predicated region
  $region30: #{net_exit1_part2l_forward.1} parent=0 // pred_check
    _
  $region31: #{net_exit1_part2l_forward.1} parent=0 // pred_check_branch
    %28 = sbr.rel (0) target = $region33
  $region32: #{net_exit1_part2l_forward.1} parent=0 // pred_region
    _
  $region33: #{net_exit1_part2l_forward.1} parent=0 // pred_fallthru
    _
  %v29 = vld [vmem:[%s0] sm:$0xff]
  %v30 = vld [vmem:[%s0 + $0x8] sm:$0xff]
  %v31 = vld [vmem:[%s0 + $0x10] sm:$0xff]
  %v32 = vld [vmem:[%s0 + $0x18] sm:$0xff]
  %v33 = vld [vmem:[%s0 + $0x20] sm:$0xff]
  %v34 = vld [vmem:[%s0 + $0x28] sm:$0xff]
  %v35 = vld [vmem:[%s0 + $0x30] sm:$0xff]
  %v36 = vld [vmem:[%s0 + $0x38] sm:$0xff]
  %v37 = vld [vmem:[%s0 + $0x40] sm:$0xff]
  %v38 = vld [vmem:[%s0 + $0x48] sm:$0xff]
  %v39 = vld [vmem:[%s0 + $0x50] sm:$0xff]
  %v40 = vld [vmem:[%s0 + $0x58] sm:$0xff]
  %v41 = vld [vmem:[%s0 + $0x60] sm:$0xff]
  %v42 = vld [vmem:[%s0 + $0x68] sm:$0xff]
  %v43 = vld [vmem:[%s0 + $0x70] sm:$0xff]
  %v44 = vld [vmem:[%s0 + $0x78] sm:$0xff]
  %v45 = vld [vmem:[%s0 + $0x80] sm:$0xff]
  %v46 = vld [vmem:[%s0 + $0x88] sm:$0xff]
  %v47 = vld [vmem:[%s0 + $0x90] sm:$0xff]
  %v48 = vld [vmem:[%s0 + $0x98] sm:$0xff]
  %v49 = vld [vmem:[%s0 + $0xa0] sm:$0xff]
  %v50 = vld [vmem:[%s0 + $0xa8] sm:$0xff]
  %v51 = vld [vmem:[%s0 + $0xb0] sm:$0xff]
  %v52 = vld [vmem:[%s0 + $0xb8] sm:$0xff]
  %v53 = vld [vmem:[%s0 + $0xc0] sm:$0xff]
  %v54 = vld [vmem:[%s0 + $0xc8] sm:$0xff]
  %v55 = vld [vmem:[%s0 + $0xd0] sm:$0xff]
  %v56 = vld [vmem:[%s0 + $0xd8] sm:$0xff]
  %v57 = vld [vmem:[%s0 + $0xe0] sm:$0xff]
  %v58 = vld [vmem:[%s0 + $0xe8] sm:$0xff]
  %v59 = vld [vmem:[%s0 + $0xf0] sm:$0xff]
  %v60 = vld [vmem:[%s0 + $0xf8] sm:$0xff]
  %v61 = vld [vmem:[%s0 + $0x100] sm:$0xff]
  %v62 = vld [vmem:[%s0 + $0x108] sm:$0xff]
  %v63 = vld [vmem:[%s0 + $0x110] sm:$0xff]
  %v64 = vld [vmem:[%s0 + $0x118] sm:$0xff]
  %v65 = vld [vmem:[%s0 + $0x120] sm:$0xff]
  %v66 = vld [vmem:[%s0 + $0x128] sm:$0xff]
  %v67 = vld [vmem:[%s0 + $0x130] sm:$0xff]
  %v68 = vld [vmem:[%s0 + $0x138] sm:$0xff]
  %v69 = vld [vmem:[%s0 + $0x140] sm:$0xff]
  %v70 = vld [vmem:[%s0 + $0x148] sm:$0xff]
  %v71 = vld [vmem:[%s0 + $0x150] sm:$0xff]
  %v72 = vld [vmem:[%s0 + $0x158] sm:$0xff]
  %v73 = vld [vmem:[%s0 + $0x160] sm:$0xff]
  %v74 = vld [vmem:[%s0 + $0x168] sm:$0xff]
  %v75 = vld [vmem:[%s0 + $0x170] sm:$0xff]
  %v76 = vld [vmem:[%s0 + $0x178] sm:$0xff]
  %v77 = vld [vmem:[%s0 + $0x180] sm:$0xff]
  %v78 = vld [vmem:[%s0 + $0x188] sm:$0xff]
  %v79 = vld [vmem:[%s0 + $0x190] sm:$0xff]
  %v80 = vld [vmem:[%s0 + $0x198] sm:$0xff]
  %v81 = vld [vmem:[%s0 + $0x1a0] sm:$0xff]
  %v82 = vld [vmem:[%s0 + $0x1a8] sm:$0xff]
  %v83 = vld [vmem:[%s0 + $0x1b0] sm:$0xff]
  %v84 = vld [vmem:[%s0 + $0x1b8] sm:$0xff]
  %v85 = vld [vmem:[%s0 + $0x1c0] sm:$0xff]
  %v86 = vld [vmem:[%s0 + $0x1c8] sm:$0xff]
  %v87 = vld [vmem:[%s0 + $0x1d0] sm:$0xff]
  %v88 = vld [vmem:[%s0 + $0x1d8] sm:$0xff]
  %v89 = vld [vmem:[%s0 + $0x1e0] sm:$0xff]
  %v90 = vld [vmem:[%s0 + $0x1e8] sm:$0xff]
  %v91 = vld [vmem:[%s0 + $0x1f0] sm:$0xff]
  %v92 = vld [vmem:[%s0 + $0x1f8] sm:$0xff]
  %v93 = vld [vmem:[%s1] sm:$0xff]
  %v94 = vld [vmem:[%s1 + $0x8] sm:$0xff]
  %v95 = vld [vmem:[%s1 + $0x10] sm:$0xff]
  %v96 = vld [vmem:[%s1 + $0x18] sm:$0xff]
  %v97 = vld [vmem:[%s1 + $0x20] sm:$0xff]
  %v98 = vld [vmem:[%s1 + $0x28] sm:$0xff]
  %v99 = vld [vmem:[%s1 + $0x30] sm:$0xff]
  %v100 = vld [vmem:[%s1 + $0x38] sm:$0xff]
  %v101 = vld [vmem:[%s1 + $0x40] sm:$0xff]
  %v102 = vld [vmem:[%s1 + $0x48] sm:$0x7]
  %v103 = vld [vmem:[%s2] sm:$0x1]
  %v105 = vlaneseq
  %v106 = vshrl.u32 %v105, 7
  %v107 = vsub.s32 0, %v106
  %v108 = vrot.slane %v103, %v107
  %vm110 = vcmask 613376
  %v112 = vsel %vm110, %v29, 0
  %v115 = vsel %vm110, %v30, 0
  %v118 = vsel %vm110, %v31, 0
  %v121 = vsel %vm110, %v32, 0
  %v124 = vsel %vm110, %v33, 0
  %v127 = vsel %vm110, %v34, 0
  %v130 = vsel %vm110, %v35, 0
  %v133 = vsel %vm110, %v36, 0
  %v136 = vsel %vm110, %v37, 0
  %v139 = vsel %vm110, %v38, 0
  %v142 = vsel %vm110, %v39, 0
  %v145 = vsel %vm110, %v40, 0
  %v148 = vsel %vm110, %v41, 0
  %v151 = vsel %vm110, %v42, 0
  %v154 = vsel %vm110, %v43, 0
  %v157 = vsel %vm110, %v44, 0
  %v160 = vsel %vm110, %v45, 0
  %v163 = vsel %vm110, %v46, 0
  %v166 = vsel %vm110, %v47, 0
  %v169 = vsel %vm110, %v48, 0
  %v172 = vsel %vm110, %v49, 0
  %v175 = vsel %vm110, %v50, 0
  %v178 = vsel %vm110, %v51, 0
  %v181 = vsel %vm110, %v52, 0
  %v184 = vsel %vm110, %v53, 0
  %v187 = vsel %vm110, %v54, 0
  %v190 = vsel %vm110, %v55, 0
  %v193 = vsel %vm110, %v56, 0
  %v196 = vsel %vm110, %v57, 0
  %v199 = vsel %vm110, %v58, 0
  %v202 = vsel %vm110, %v59, 0
  %v205 = vsel %vm110, %v60, 0
  %v208 = vsel %vm110, %v61, 0
  %v211 = vsel %vm110, %v62, 0
  %v214 = vsel %vm110, %v63, 0
  %v217 = vsel %vm110, %v64, 0
  %v220 = vsel %vm110, %v65, 0
  %v223 = vsel %vm110, %v66, 0
  %v226 = vsel %vm110, %v67, 0
  %v229 = vsel %vm110, %v68, 0
  %v232 = vsel %vm110, %v69, 0
  %v235 = vsel %vm110, %v70, 0
  %v238 = vsel %vm110, %v71, 0
  %v241 = vsel %vm110, %v72, 0
  %v244 = vsel %vm110, %v73, 0
  %v247 = vsel %vm110, %v74, 0
  %v250 = vsel %vm110, %v75, 0
  %v253 = vsel %vm110, %v76, 0
  %v256 = vsel %vm110, %v77, 0
  %v259 = vsel %vm110, %v78, 0
  %v262 = vsel %vm110, %v79, 0
  %v265 = vsel %vm110, %v80, 0
  %v268 = vsel %vm110, %v81, 0
  %v271 = vsel %vm110, %v82, 0
  %v274 = vsel %vm110, %v83, 0
  %v277 = vsel %vm110, %v84, 0
  %v280 = vsel %vm110, %v85, 0
  %v283 = vsel %vm110, %v86, 0
  %v286 = vsel %vm110, %v87, 0
  %v289 = vsel %vm110, %v88, 0
  %v292 = vsel %vm110, %v89, 0
  %v295 = vsel %vm110, %v90, 0
  %v298 = vsel %vm110, %v91, 0
  %v301 = vsel %vm110, %v92, 0
  %vm303 = vcmask 1042432
  %v305 = vsel %vm303, %v102, 0
  %307 = vmatprep.subr.mxu0 0.0
  %308 = vmatpush1.msra.mxu0 %v93
  %309 = vmatprep.subr.mxu0 0.0
  %310 = vmatpush1.msra.mxu0 %v94
  %311 = vmatprep.subr.mxu0 0.0
  %312 = vmatpush1.msra.mxu0 %v95
  %313 = vmatprep.subr.mxu0 0.0
  %314 = vmatpush1.msra.mxu0 %v96
  %315 = vmatprep.subr.mxu0 0.0
  %316 = vmatpush1.msra.mxu0 %v97
  %317 = vmatprep.subr.mxu0 0.0
  %318 = vmatpush1.msra.mxu0 %v98
  %319 = vmatprep.subr.mxu0 0.0
  %320 = vmatpush1.msra.mxu0 %v99
  %321 = vmatprep.subr.mxu0 0.0
  %322 = vmatpush1.msra.mxu0 %v100
  %323 = vmatprep.subr.mxu0 0.0
  %324 = vmatpush1.msra.mxu0 %v101
  %325 = vmatprep.subr.mxu0 0.0
  %326 = vmatpush1.msra.mxu0 %v305
  %327 = vmatprep.subr.mxu0 0.0
  %328 = vmatpush1.msra.mxu0 0.0
  %329 = vmatprep.subr.mxu0 0.0
  %330 = vmatpush1.msra.mxu0 0.0
  %331 = vmatprep.subr.mxu0 0.0
  %332 = vmatpush1.msra.mxu0 0.0
  %333 = vmatprep.subr.mxu0 0.0
  %334 = vmatpush1.msra.mxu0 0.0
  %335 = vmatprep.subr.mxu0 0.0
  %336 = vmatpush1.msra.mxu0 0.0
  %337 = vmatprep.subr.mxu0 0.0
  %338 = vmatpush1.msra.mxu0 0.0
  %339 = vmatprep.subr.mxu0 0.0
  %340 = vmatpush1.msra.mxu0 0.0
  %341 = vmatprep.subr.mxu0 0.0
  %342 = vmatpush1.msra.mxu0 0.0
  %343 = vmatprep.subr.mxu0 0.0
  %344 = vmatpush1.msra.mxu0 0.0
  %345 = vmatprep.subr.mxu0 0.0
  %346 = vmatpush1.msra.mxu0 0.0
  %347 = vmatprep.subr.mxu0 0.0
  %348 = vmatpush1.msra.mxu0 0.0
  %349 = vmatprep.subr.mxu0 0.0
  %350 = vmatpush1.msra.mxu0 0.0
  %351 = vmatprep.subr.mxu0 0.0
  %352 = vmatpush1.msra.mxu0 0.0
  %353 = vmatprep.subr.mxu0 0.0
  %354 = vmatpush1.msra.mxu0 0.0
  %355 = vmatprep.subr.mxu0 0.0
  %356 = vmatpush1.msra.mxu0 0.0
  %357 = vmatprep.subr.mxu0 0.0
  %358 = vmatpush1.msra.mxu0 0.0
  %359 = vmatprep.subr.mxu0 0.0
  %360 = vmatpush1.msra.mxu0 0.0
  %361 = vmatprep.subr.mxu0 0.0
  %362 = vmatpush1.msra.mxu0 0.0
  %363 = vmatprep.subr.mxu0 0.0
  %364 = vmatpush1.msra.mxu0 0.0
  %365 = vmatprep.subr.mxu0 0.0
  %366 = vmatpush1.msra.mxu0 0.0
  %367 = vmatprep.subr.mxu0 0.0
  %368 = vmatpush1.msra.mxu0 0.0
  %369 = vmatprep.subr.mxu0 0.0
  %370 = vmatpush1.msra.mxu0 0.0
  %371 = vmatprep.mubr.f32.mxu0 0.0
  %372 = vmatmul.mubr.f32.gmra.mrb[0].mxu0 %v112
  %v373 = vpop.f32.mrb[0].mxu0
  %v374 = vadd.f32 %v108, %v373
  %v375 = vpop.f32.mrb[0].mxu0
  %376 = vmatprep.mubr.f32.mxu0 0.0
  %377 = vmatmul.mubr.f32.gmra.mrb[0].mxu0 %v115
  %v378 = vpop.f32.mrb[0].mxu0
  %v379 = vadd.f32 %v108, %v378
  %v380 = vpop.f32.mrb[0].mxu0
  %381 = vmatprep.mubr.f32.mxu0 0.0
  %382 = vmatmul.mubr.f32.gmra.mrb[0].mxu0 %v118
  %v383 = vpop.f32.mrb[0].mxu0
  %v384 = vadd.f32 %v108, %v383
  %v385 = vpop.f32.mrb[0].mxu0
  %386 = vmatprep.mubr.f32.mxu0 0.0
  %387 = vmatmul.mubr.f32.gmra.mrb[0].mxu0 %v121
  %v388 = vpop.f32.mrb[0].mxu0
  %v389 = vadd.f32 %v108, %v388
  %v390 = vpop.f32.mrb[0].mxu0
  %391 = vmatprep.mubr.f32.mxu0 0.0
  %392 = vmatmul.mubr.f32.gmra.mrb[0].mxu0 %v124
  %v393 = vpop.f32.mrb[0].mxu0
  %v394 = vadd.f32 %v108, %v393
  %v395 = vpop.f32.mrb[0].mxu0
  %396 = vmatprep.mubr.f32.mxu0 0.0
  %397 = vmatmul.mubr.f32.gmra.mrb[0].mxu0 %v127
  %v398 = vpop.f32.mrb[0].mxu0
  %v399 = vadd.f32 %v108, %v398
  %v400 = vpop.f32.mrb[0].mxu0
  %401 = vmatprep.mubr.f32.mxu0 0.0
  %402 = vmatmul.mubr.f32.gmra.mrb[0].mxu0 %v130
  %v403 = vpop.f32.mrb[0].mxu0
  %v404 = vadd.f32 %v108, %v403
  %v405 = vpop.f32.mrb[0].mxu0
  %406 = vmatprep.mubr.f32.mxu0 0.0
  %407 = vmatmul.mubr.f32.gmra.mrb[0].mxu0 %v133
  %v408 = vpop.f32.mrb[0].mxu0
  %v409 = vadd.f32 %v108, %v408
  %v410 = vpop.f32.mrb[0].mxu0
  %411 = vmatprep.mubr.f32.mxu0 0.0
  %412 = vmatmul.mubr.f32.gmra.mrb[0].mxu0 %v136
  %v413 = vpop.f32.mrb[0].mxu0
  %v414 = vadd.f32 %v108, %v413
  %v415 = vpop.f32.mrb[0].mxu0
  %416 = vmatprep.mubr.f32.mxu0 0.0
  %417 = vmatmul.mubr.f32.gmra.mrb[0].mxu0 %v139
  %v418 = vpop.f32.mrb[0].mxu0
  %v419 = vadd.f32 %v108, %v418
  %v420 = vpop.f32.mrb[0].mxu0
  %421 = vmatprep.mubr.f32.mxu0 0.0
  %422 = vmatmul.mubr.f32.gmra.mrb[0].mxu0 %v142
  %v423 = vpop.f32.mrb[0].mxu0
  %v424 = vadd.f32 %v108, %v423
  %v425 = vpop.f32.mrb[0].mxu0
  %426 = vmatprep.mubr.f32.mxu0 0.0
  %427 = vmatmul.mubr.f32.gmra.mrb[0].mxu0 %v145
  %v428 = vpop.f32.mrb[0].mxu0
  %v429 = vadd.f32 %v108, %v428
  %v430 = vpop.f32.mrb[0].mxu0
  %431 = vmatprep.mubr.f32.mxu0 0.0
  %432 = vmatmul.mubr.f32.gmra.mrb[0].mxu0 %v148
  %v433 = vpop.f32.mrb[0].mxu0
  %v434 = vadd.f32 %v108, %v433
  %v435 = vpop.f32.mrb[0].mxu0
  %436 = vmatprep.mubr.f32.mxu0 0.0
  %437 = vmatmul.mubr.f32.gmra.mrb[0].mxu0 %v151
  %v438 = vpop.f32.mrb[0].mxu0
  %v439 = vadd.f32 %v108, %v438
  %v440 = vpop.f32.mrb[0].mxu0
  %441 = vmatprep.mubr.f32.mxu0 0.0
  %442 = vmatmul.mubr.f32.gmra.mrb[0].mxu0 %v154
  %v443 = vpop.f32.mrb[0].mxu0
  %v444 = vadd.f32 %v108, %v443
  %v445 = vpop.f32.mrb[0].mxu0
  %446 = vmatprep.mubr.f32.mxu0 0.0
  %447 = vmatmul.mubr.f32.gmra.mrb[0].mxu0 %v157
  %v448 = vpop.f32.mrb[0].mxu0
  %v449 = vadd.f32 %v108, %v448
  %v450 = vpop.f32.mrb[0].mxu0
  %451 = vmatprep.mubr.f32.mxu0 0.0
  %452 = vmatmul.mubr.f32.gmra.mrb[0].mxu0 %v160
  %v453 = vpop.f32.mrb[0].mxu0
  %v454 = vadd.f32 %v108, %v453
  %v455 = vpop.f32.mrb[0].mxu0
  %456 = vmatprep.mubr.f32.mxu0 0.0
  %457 = vmatmul.mubr.f32.gmra.mrb[0].mxu0 %v163
  %v458 = vpop.f32.mrb[0].mxu0
  %v459 = vadd.f32 %v108, %v458
  %v460 = vpop.f32.mrb[0].mxu0
  %461 = vmatprep.mubr.f32.mxu0 0.0
  %462 = vmatmul.mubr.f32.gmra.mrb[0].mxu0 %v166
  %v463 = vpop.f32.mrb[0].mxu0
  %v464 = vadd.f32 %v108, %v463
  %v465 = vpop.f32.mrb[0].mxu0
  %466 = vmatprep.mubr.f32.mxu0 0.0
  %467 = vmatmul.mubr.f32.gmra.mrb[0].mxu0 %v169
  %v468 = vpop.f32.mrb[0].mxu0
  %v469 = vadd.f32 %v108, %v468
  %v470 = vpop.f32.mrb[0].mxu0
  %471 = vmatprep.mubr.f32.mxu0 0.0
  %472 = vmatmul.mubr.f32.gmra.mrb[0].mxu0 %v172
  %v473 = vpop.f32.mrb[0].mxu0
  %v474 = vadd.f32 %v108, %v473
  %v475 = vpop.f32.mrb[0].mxu0
  %476 = vmatprep.mubr.f32.mxu0 0.0
  %477 = vmatmul.mubr.f32.gmra.mrb[0].mxu0 %v175
  %v478 = vpop.f32.mrb[0].mxu0
  %v479 = vadd.f32 %v108, %v478
  %v480 = vpop.f32.mrb[0].mxu0
  %481 = vmatprep.mubr.f32.mxu0 0.0
  %482 = vmatmul.mubr.f32.gmra.mrb[0].mxu0 %v178
  %v483 = vpop.f32.mrb[0].mxu0
  %v484 = vadd.f32 %v108, %v483
  %v485 = vpop.f32.mrb[0].mxu0
  %486 = vmatprep.mubr.f32.mxu0 0.0
  %487 = vmatmul.mubr.f32.gmra.mrb[0].mxu0 %v181
  %v488 = vpop.f32.mrb[0].mxu0
  %v489 = vadd.f32 %v108, %v488
  %v490 = vpop.f32.mrb[0].mxu0
  %491 = vmatprep.mubr.f32.mxu0 0.0
  %492 = vmatmul.mubr.f32.gmra.mrb[0].mxu0 %v184
  %v493 = vpop.f32.mrb[0].mxu0
  %v494 = vadd.f32 %v108, %v493
  %v495 = vpop.f32.mrb[0].mxu0
  %496 = vmatprep.mubr.f32.mxu0 0.0
  %497 = vmatmul.mubr.f32.gmra.mrb[0].mxu0 %v187
  %v498 = vpop.f32.mrb[0].mxu0
  %v499 = vadd.f32 %v108, %v498
  %v500 = vpop.f32.mrb[0].mxu0
  %501 = vmatprep.mubr.f32.mxu0 0.0
  %502 = vmatmul.mubr.f32.gmra.mrb[0].mxu0 %v190
  %v503 = vpop.f32.mrb[0].mxu0
  %v504 = vadd.f32 %v108, %v503
  %v505 = vpop.f32.mrb[0].mxu0
  %506 = vmatprep.mubr.f32.mxu0 0.0
  %507 = vmatmul.mubr.f32.gmra.mrb[0].mxu0 %v193
  %v508 = vpop.f32.mrb[0].mxu0
  %v509 = vadd.f32 %v108, %v508
  %v510 = vpop.f32.mrb[0].mxu0
  %511 = vmatprep.mubr.f32.mxu0 0.0
  %512 = vmatmul.mubr.f32.gmra.mrb[0].mxu0 %v196
  %v513 = vpop.f32.mrb[0].mxu0
  %v514 = vadd.f32 %v108, %v513
  %v515 = vpop.f32.mrb[0].mxu0
  %516 = vmatprep.mubr.f32.mxu0 0.0
  %517 = vmatmul.mubr.f32.gmra.mrb[0].mxu0 %v199
  %v518 = vpop.f32.mrb[0].mxu0
  %v519 = vadd.f32 %v108, %v518
  %v520 = vpop.f32.mrb[0].mxu0
  %521 = vmatprep.mubr.f32.mxu0 0.0
  %522 = vmatmul.mubr.f32.gmra.mrb[0].mxu0 %v202
  %v523 = vpop.f32.mrb[0].mxu0
  %v524 = vpop.f32.mrb[0].mxu0
  %525 = vmatprep.mubr.f32.mxu0 0.0
  %526 = vmatmul.mubr.f32.gmra.mrb[0].mxu0 %v205
  %v527 = vpop.f32.mrb[0].mxu0
  %v528 = vpop.f32.mrb[0].mxu0
  %529 = vmatprep.mubr.f32.mxu0 0.0
  %530 = vmatmul.mubr.f32.gmra.mrb[0].mxu0 %v208
  %v531 = vpop.f32.mrb[0].mxu0
  %v532 = vadd.f32 %v108, %v531
  %v533 = vpop.f32.mrb[0].mxu0
  %534 = vmatprep.mubr.f32.mxu0 0.0
  %535 = vmatmul.mubr.f32.gmra.mrb[0].mxu0 %v211
  %v536 = vpop.f32.mrb[0].mxu0
  %v537 = vadd.f32 %v108, %v536
  %v538 = vpop.f32.mrb[0].mxu0
  %539 = vmatprep.mubr.f32.mxu0 0.0
  %540 = vmatmul.mubr.f32.gmra.mrb[0].mxu0 %v214
  %v541 = vpop.f32.mrb[0].mxu0
  %v542 = vadd.f32 %v108, %v541
  %v543 = vpop.f32.mrb[0].mxu0
  %544 = vmatprep.mubr.f32.mxu0 0.0
  %545 = vmatmul.mubr.f32.gmra.mrb[0].mxu0 %v217
  %v546 = vpop.f32.mrb[0].mxu0
  %v547 = vadd.f32 %v108, %v546
  %v548 = vpop.f32.mrb[0].mxu0
  %549 = vmatprep.mubr.f32.mxu0 0.0
  %550 = vmatmul.mubr.f32.gmra.mrb[0].mxu0 %v220
  %v551 = vpop.f32.mrb[0].mxu0
  %v552 = vadd.f32 %v108, %v551
  %v553 = vpop.f32.mrb[0].mxu0
  %554 = vmatprep.mubr.f32.mxu0 0.0
  %555 = vmatmul.mubr.f32.gmra.mrb[0].mxu0 %v223
  %v556 = vpop.f32.mrb[0].mxu0
  %v557 = vadd.f32 %v108, %v556
  %v558 = vpop.f32.mrb[0].mxu0
  %559 = vmatprep.mubr.f32.mxu0 0.0
  %560 = vmatmul.mubr.f32.gmra.mrb[0].mxu0 %v226
  %v561 = vpop.f32.mrb[0].mxu0
  %v562 = vadd.f32 %v108, %v561
  %v563 = vpop.f32.mrb[0].mxu0
  %564 = vmatprep.mubr.f32.mxu0 0.0
  %565 = vmatmul.mubr.f32.gmra.mrb[0].mxu0 %v229
  %v566 = vpop.f32.mrb[0].mxu0
  %v567 = vadd.f32 %v108, %v566
  %v568 = vpop.f32.mrb[0].mxu0
  %569 = vmatprep.mubr.f32.mxu0 0.0
  %570 = vmatmul.mubr.f32.gmra.mrb[0].mxu0 %v232
  %v571 = vpop.f32.mrb[0].mxu0
  %v572 = vadd.f32 %v108, %v571
  %v573 = vpop.f32.mrb[0].mxu0
  %574 = vmatprep.mubr.f32.mxu0 0.0
  %575 = vmatmul.mubr.f32.gmra.mrb[0].mxu0 %v235
  %v576 = vpop.f32.mrb[0].mxu0
  %v577 = vadd.f32 %v108, %v576
  %v578 = vpop.f32.mrb[0].mxu0
  %579 = vmatprep.mubr.f32.mxu0 0.0
  %580 = vmatmul.mubr.f32.gmra.mrb[0].mxu0 %v238
  %v581 = vpop.f32.mrb[0].mxu0
  %v582 = vadd.f32 %v108, %v581
  %v583 = vpop.f32.mrb[0].mxu0
  %584 = vmatprep.mubr.f32.mxu0 0.0
  %585 = vmatmul.mubr.f32.gmra.mrb[0].mxu0 %v241
  %v586 = vpop.f32.mrb[0].mxu0
  %v587 = vadd.f32 %v108, %v586
  %v588 = vpop.f32.mrb[0].mxu0
  %589 = vmatprep.mubr.f32.mxu0 0.0
  %590 = vmatmul.mubr.f32.gmra.mrb[0].mxu0 %v244
  %v591 = vpop.f32.mrb[0].mxu0
  %v592 = vadd.f32 %v108, %v591
  %v593 = vpop.f32.mrb[0].mxu0
  %594 = vmatprep.mubr.f32.mxu0 0.0
  %595 = vmatmul.mubr.f32.gmra.mrb[0].mxu0 %v247
  %v596 = vpop.f32.mrb[0].mxu0
  %v597 = vadd.f32 %v108, %v596
  %v598 = vpop.f32.mrb[0].mxu0
  %599 = vmatprep.mubr.f32.mxu0 0.0
  %600 = vmatmul.mubr.f32.gmra.mrb[0].mxu0 %v250
  %v601 = vpop.f32.mrb[0].mxu0
  %v602 = vadd.f32 %v108, %v601
  %v603 = vpop.f32.mrb[0].mxu0
  %604 = vmatprep.mubr.f32.mxu0 0.0
  %605 = vmatmul.mubr.f32.gmra.mrb[0].mxu0 %v253
  %v606 = vpop.f32.mrb[0].mxu0
  %v607 = vadd.f32 %v108, %v606
  %v608 = vpop.f32.mrb[0].mxu0
  %609 = vmatprep.mubr.f32.mxu0 0.0
  %610 = vmatmul.mubr.f32.gmra.mrb[0].mxu0 %v256
  %v611 = vpop.f32.mrb[0].mxu0
  %v612 = vadd.f32 %v108, %v611
  %v613 = vpop.f32.mrb[0].mxu0
  %614 = vmatprep.mubr.f32.mxu0 0.0
  %615 = vmatmul.mubr.f32.gmra.mrb[0].mxu0 %v259
  %v616 = vpop.f32.mrb[0].mxu0
  %v617 = vadd.f32 %v108, %v616
  %v618 = vpop.f32.mrb[0].mxu0
  %619 = vmatprep.mubr.f32.mxu0 0.0
  %620 = vmatmul.mubr.f32.gmra.mrb[0].mxu0 %v262
  %v621 = vpop.f32.mrb[0].mxu0
  %v622 = vadd.f32 %v108, %v621
  %v623 = vpop.f32.mrb[0].mxu0
  %624 = vmatprep.mubr.f32.mxu0 0.0
  %625 = vmatmul.mubr.f32.gmra.mrb[0].mxu0 %v265
  %v626 = vpop.f32.mrb[0].mxu0
  %v627 = vadd.f32 %v108, %v626
  %v628 = vpop.f32.mrb[0].mxu0
  %629 = vmatprep.mubr.f32.mxu0 0.0
  %630 = vmatmul.mubr.f32.gmra.mrb[0].mxu0 %v268
  %v631 = vpop.f32.mrb[0].mxu0
  %v632 = vadd.f32 %v108, %v631
  %v633 = vpop.f32.mrb[0].mxu0
  %634 = vmatprep.mubr.f32.mxu0 0.0
  %635 = vmatmul.mubr.f32.gmra.mrb[0].mxu0 %v271
  %v636 = vpop.f32.mrb[0].mxu0
  %v637 = vadd.f32 %v108, %v636
  %v638 = vpop.f32.mrb[0].mxu0
  %639 = vmatprep.mubr.f32.mxu0 0.0
  %640 = vmatmul.mubr.f32.gmra.mrb[0].mxu0 %v274
  %v641 = vpop.f32.mrb[0].mxu0
  %v642 = vadd.f32 %v108, %v641
  %v643 = vpop.f32.mrb[0].mxu0
  %644 = vmatprep.mubr.f32.mxu0 0.0
  %645 = vmatmul.mubr.f32.gmra.mrb[0].mxu0 %v277
  %v646 = vpop.f32.mrb[0].mxu0
  %v647 = vadd.f32 %v108, %v646
  %v648 = vpop.f32.mrb[0].mxu0
  %649 = vmatprep.mubr.f32.mxu0 0.0
  %650 = vmatmul.mubr.f32.gmra.mrb[0].mxu0 %v280
  %v651 = vpop.f32.mrb[0].mxu0
  %v652 = vadd.f32 %v108, %v651
  %v653 = vpop.f32.mrb[0].mxu0
  %654 = vmatprep.mubr.f32.mxu0 0.0
  %655 = vmatmul.mubr.f32.gmra.mrb[0].mxu0 %v283
  %v656 = vpop.f32.mrb[0].mxu0
  %v657 = vadd.f32 %v108, %v656
  %v658 = vpop.f32.mrb[0].mxu0
  %659 = vmatprep.mubr.f32.mxu0 0.0
  %660 = vmatmul.mubr.f32.gmra.mrb[0].mxu0 %v286
  %v661 = vpop.f32.mrb[0].mxu0
  %v662 = vadd.f32 %v108, %v661
  %v663 = vpop.f32.mrb[0].mxu0
  %664 = vmatprep.mubr.f32.mxu0 0.0
  %665 = vmatmul.mubr.f32.gmra.mrb[0].mxu0 %v289
  %v666 = vpop.f32.mrb[0].mxu0
  %v667 = vadd.f32 %v108, %v666
  %v668 = vpop.f32.mrb[0].mxu0
  %669 = vmatprep.mubr.f32.mxu0 0.0
  %670 = vmatmul.mubr.f32.gmra.mrb[0].mxu0 %v292
  %v671 = vpop.f32.mrb[0].mxu0
  %v672 = vadd.f32 %v108, %v671
  %v673 = vpop.f32.mrb[0].mxu0
  %674 = vmatprep.mubr.f32.mxu0 0.0
  %675 = vmatmul.mubr.f32.gmra.mrb[0].mxu0 %v295
  %v676 = vpop.f32.mrb[0].mxu0
  %v677 = vadd.f32 %v108, %v676
  %v678 = vpop.f32.mrb[0].mxu0
  %679 = vmatprep.mubr.f32.mxu0 0.0
  %680 = vmatmul.mubr.f32.gmra.mrb[0].mxu0 %v298
  %v681 = vpop.f32.mrb[0].mxu0
  %v682 = vpop.f32.mrb[0].mxu0
  %683 = vmatprep.mubr.f32.mxu0 0.0
  %684 = vmatmul.mubr.f32.gmra.mrb[0].mxu0 %v301
  %v685 = vpop.f32.mrb[0].mxu0
  %v686 = vpop.f32.mrb[0].mxu0
  %687 = vdwg.mxu0
  %v688 = vmax.f32 %v374, 0.0
  %v689 = vmax.f32 %v379, 0.0
  %v690 = vmax.f32 %v384, 0.0
  %v691 = vmax.f32 %v389, 0.0
  %v692 = vmax.f32 %v394, 0.0
  %v693 = vmax.f32 %v399, 0.0
  %v694 = vmax.f32 %v404, 0.0
  %v695 = vmax.f32 %v409, 0.0
  %v696 = vmax.f32 %v414, 0.0
  %v697 = vmax.f32 %v419, 0.0
  %v698 = vmax.f32 %v424, 0.0
  %v699 = vmax.f32 %v429, 0.0
  %v700 = vmax.f32 %v434, 0.0
  %v701 = vmax.f32 %v439, 0.0
  %v702 = vmax.f32 %v444, 0.0
  %v703 = vmax.f32 %v449, 0.0
  %v704 = vmax.f32 %v454, 0.0
  %v705 = vmax.f32 %v459, 0.0
  %v706 = vmax.f32 %v464, 0.0
  %v707 = vmax.f32 %v469, 0.0
  %v708 = vmax.f32 %v474, 0.0
  %v709 = vmax.f32 %v479, 0.0
  %v710 = vmax.f32 %v484, 0.0
  %v711 = vmax.f32 %v489, 0.0
  %v712 = vmax.f32 %v494, 0.0
  %v713 = vmax.f32 %v499, 0.0
  %v714 = vmax.f32 %v504, 0.0
  %v715 = vmax.f32 %v509, 0.0
  %v716 = vmax.f32 %v514, 0.0
  %v717 = vmax.f32 %v519, 0.0
  %v718 = vmax.f32 %v532, 0.0
  %v719 = vmax.f32 %v537, 0.0
  %v720 = vmax.f32 %v542, 0.0
  %v721 = vmax.f32 %v547, 0.0
  %v722 = vmax.f32 %v552, 0.0
  %v723 = vmax.f32 %v557, 0.0
  %v724 = vmax.f32 %v562, 0.0
  %v725 = vmax.f32 %v567, 0.0
  %v726 = vmax.f32 %v572, 0.0
  %v727 = vmax.f32 %v577, 0.0
  %v728 = vmax.f32 %v582, 0.0
  %v729 = vmax.f32 %v587, 0.0
  %v730 = vmax.f32 %v592, 0.0
  %v731 = vmax.f32 %v597, 0.0
  %v732 = vmax.f32 %v602, 0.0
  %v733 = vmax.f32 %v607, 0.0
  %v734 = vmax.f32 %v612, 0.0
  %v735 = vmax.f32 %v617, 0.0
  %v736 = vmax.f32 %v622, 0.0
  %v737 = vmax.f32 %v627, 0.0
  %v738 = vmax.f32 %v632, 0.0
  %v739 = vmax.f32 %v637, 0.0
  %v740 = vmax.f32 %v642, 0.0
  %v741 = vmax.f32 %v647, 0.0
  %v742 = vmax.f32 %v652, 0.0
  %v743 = vmax.f32 %v657, 0.0
  %v744 = vmax.f32 %v662, 0.0
  %v745 = vmax.f32 %v667, 0.0
  %v746 = vmax.f32 %v672, 0.0
  %v747 = vmax.f32 %v677, 0.0
  %v748 = vmax.f32 %v688, %v690
  %v749 = vmax.f32 %v689, %v691
  %v750 = vmax.f32 %v692, %v694
  %v751 = vmax.f32 %v693, %v695
  %v752 = vmax.f32 %v696, %v698
  %v753 = vmax.f32 %v697, %v699
  %v754 = vmax.f32 %v700, %v702
  %v755 = vmax.f32 %v701, %v703
  %v756 = vmax.f32 %v704, %v706
  %v757 = vmax.f32 %v705, %v707
  %v758 = vmax.f32 %v708, %v710
  %v759 = vmax.f32 %v709, %v711
  %v760 = vmax.f32 %v712, %v714
  %v761 = vmax.f32 %v713, %v715
  %v762 = vmax.f32 %v718, %v720
  %v763 = vmax.f32 %v719, %v721
  %v764 = vmax.f32 %v722, %v724
  %v765 = vmax.f32 %v723, %v725
  %v766 = vmax.f32 %v726, %v728
  %v767 = vmax.f32 %v727, %v729
  %v768 = vmax.f32 %v730, %v732
  %v769 = vmax.f32 %v731, %v733
  %v770 = vmax.f32 %v734, %v736
  %v771 = vmax.f32 %v735, %v737
  %v772 = vmax.f32 %v738, %v740
  %v773 = vmax.f32 %v739, %v741
  %v774 = vmax.f32 %v742, %v744
  %v775 = vmax.f32 %v743, %v745
  %v776 = vmax.f32 %v748, %v692
  %v777 = vmax.f32 %v749, %v693
  %v778 = vmax.f32 %v750, %v696
  %v779 = vmax.f32 %v751, %v697
  %v780 = vmax.f32 %v752, %v700
  %v781 = vmax.f32 %v753, %v701
  %v782 = vmax.f32 %v754, %v704
  %v783 = vmax.f32 %v755, %v705
  %v784 = vmax.f32 %v756, %v708
  %v785 = vmax.f32 %v757, %v709
  %v786 = vmax.f32 %v758, %v712
  %v787 = vmax.f32 %v759, %v713
  %v788 = vmax.f32 %v760, %v716
  %v789 = vmax.f32 %v761, %v717
  %v790 = vmax.f32 %v762, %v722
  %v791 = vmax.f32 %v763, %v723
  %v792 = vmax.f32 %v764, %v726
  %v793 = vmax.f32 %v765, %v727
  %v794 = vmax.f32 %v766, %v730
  %v795 = vmax.f32 %v767, %v731
  %v796 = vmax.f32 %v768, %v734
  %v797 = vmax.f32 %v769, %v735
  %v798 = vmax.f32 %v770, %v738
  %v799 = vmax.f32 %v771, %v739
  %v800 = vmax.f32 %v772, %v742
  %v801 = vmax.f32 %v773, %v743
  %v802 = vmax.f32 %v774, %v746
  %v803 = vmax.f32 %v775, %v747
  %vm804 = vcmask 523264
  %805 = vst.msk [vmem:[#allocation2] sm:$0xff] %vm804, %v776
  %806 = vst.msk [vmem:[#allocation2 + $0x8] sm:$0xff] %vm804, %v777
  %807 = vst.msk [vmem:[#allocation2 + $0x18] sm:$0xff] %vm804, %v778
  %808 = vst.msk [vmem:[#allocation2 + $0x20] sm:$0xff] %vm804, %v779
  %809 = vst.msk [vmem:[#allocation2 + $0x30] sm:$0xff] %vm804, %v780
  %810 = vst.msk [vmem:[#allocation2 + $0x38] sm:$0xff] %vm804, %v781
  %811 = vst.msk [vmem:[#allocation2 + $0x48] sm:$0xff] %vm804, %v782
  %812 = vst.msk [vmem:[#allocation2 + $0x50] sm:$0xff] %vm804, %v783
  %813 = vst.msk [vmem:[#allocation2 + $0x60] sm:$0xff] %vm804, %v784
  %814 = vst.msk [vmem:[#allocation2 + $0x68] sm:$0xff] %vm804, %v785
  %815 = vst.msk [vmem:[#allocation2 + $0x78] sm:$0xff] %vm804, %v786
  %816 = vst.msk [vmem:[#allocation2 + $0x80] sm:$0xff] %vm804, %v787
  %817 = vst.msk [vmem:[#allocation2 + $0x90] sm:$0xff] %vm804, %v788
  %818 = vst.msk [vmem:[#allocation2 + $0x98] sm:$0xff] %vm804, %v789
  %819 = vst.msk [vmem:[#allocation2 + $0xa8] sm:$0xff] %vm804, %v790
  %820 = vst.msk [vmem:[#allocation2 + $0xb0] sm:$0xff] %vm804, %v791
  %821 = vst.msk [vmem:[#allocation2 + $0xc0] sm:$0xff] %vm804, %v792
  %822 = vst.msk [vmem:[#allocation2 + $0xc8] sm:$0xff] %vm804, %v793
  %823 = vst.msk [vmem:[#allocation2 + $0xd8] sm:$0xff] %vm804, %v794
  %824 = vst.msk [vmem:[#allocation2 + $0xe0] sm:$0xff] %vm804, %v795
  %825 = vst.msk [vmem:[#allocation2 + $0xf0] sm:$0xff] %vm804, %v796
  %826 = vst.msk [vmem:[#allocation2 + $0xf8] sm:$0xff] %vm804, %v797
  %827 = vst.msk [vmem:[#allocation2 + $0x108] sm:$0xff] %vm804, %v798
  %828 = vst.msk [vmem:[#allocation2 + $0x110] sm:$0xff] %vm804, %v799
  %829 = vst.msk [vmem:[#allocation2 + $0x120] sm:$0xff] %vm804, %v800
  %830 = vst.msk [vmem:[#allocation2 + $0x128] sm:$0xff] %vm804, %v801
  %831 = vst.msk [vmem:[#allocation2 + $0x138] sm:$0xff] %vm804, %v802
  %832 = vst.msk [vmem:[#allocation2 + $0x140] sm:$0xff] %vm804, %v803
  %vm833 = vcmask 517120
  %834 = vst.msk [vmem:[#allocation2 + $0x10] sm:$0x3] %vm833, 0.0
  %835 = vst.msk [vmem:[#allocation2 + $0x28] sm:$0x3] %vm833, 0.0
  %836 = vst.msk [vmem:[#allocation2 + $0x40] sm:$0x3] %vm833, 0.0
  %837 = vst.msk [vmem:[#allocation2 + $0x58] sm:$0x3] %vm833, 0.0
  %838 = vst.msk [vmem:[#allocation2 + $0x70] sm:$0x3] %vm833, 0.0
  %839 = vst.msk [vmem:[#allocation2 + $0x88] sm:$0x3] %vm833, 0.0
  %840 = vst.msk [vmem:[#allocation2 + $0xa0] sm:$0x3] %vm833, 0.0
  %841 = vst.msk [vmem:[#allocation2 + $0xb8] sm:$0x3] %vm833, 0.0
  %842 = vst.msk [vmem:[#allocation2 + $0xd0] sm:$0x3] %vm833, 0.0
  %843 = vst.msk [vmem:[#allocation2 + $0xe8] sm:$0x3] %vm833, 0.0
  %844 = vst.msk [vmem:[#allocation2 + $0x100] sm:$0x3] %vm833, 0.0
  %845 = vst.msk [vmem:[#allocation2 + $0x118] sm:$0x3] %vm833, 0.0
  %846 = vst.msk [vmem:[#allocation2 + $0x130] sm:$0x3] %vm833, 0.0
  %847 = vst.msk [vmem:[#allocation2 + $0x148] sm:$0x3] %vm833, 0.0
  %v848 = vld [vmem:[#allocation2] ss:$2 sm:$0xff]
  %s849 = scalar_lea.vmem [#allocation2], 24
  %v850 = vld [vmem:[%s849] ss:$2 sm:$0xff]
  %s851 = scalar_lea.vmem [#allocation2], 48
  %v852 = vld [vmem:[%s851] ss:$2 sm:$0xff]
  %s853 = scalar_lea.vmem [#allocation2], 72
  %v854 = vld [vmem:[%s853] ss:$2 sm:$0xff]
  %s855 = scalar_lea.vmem [#allocation2], 96
  %v856 = vld [vmem:[%s855] ss:$2 sm:$0xff]
  %s857 = scalar_lea.vmem [#allocation2], 120
  %v858 = vld [vmem:[%s857] ss:$2 sm:$0xff]
  %s859 = scalar_lea.vmem [#allocation2], 144
  %v860 = vld [vmem:[%s859] ss:$2 sm:$0xff]
  %s861 = scalar_lea.vmem [#allocation2], 168
  %v862 = vld [vmem:[%s861] ss:$2 sm:$0xff]
  %s863 = scalar_lea.vmem [#allocation2], 192
  %v864 = vld [vmem:[%s863] ss:$2 sm:$0xff]
  %s865 = scalar_lea.vmem [#allocation2], 216
  %v866 = vld [vmem:[%s865] ss:$2 sm:$0xff]
  %s867 = scalar_lea.vmem [#allocation2], 240
  %v868 = vld [vmem:[%s867] ss:$2 sm:$0xff]
  %s869 = scalar_lea.vmem [#allocation2], 264
  %v870 = vld [vmem:[%s869] ss:$2 sm:$0xff]
  %s871 = scalar_lea.vmem [#allocation2], 288
  %v872 = vld [vmem:[%s871] ss:$2 sm:$0xff]
  %s873 = scalar_lea.vmem [#allocation2], 312
  %v874 = vld [vmem:[%s873] ss:$2 sm:$0xff]
  %s875 = scalar_lea.vmem [#allocation2], 1
  %v876 = vld [vmem:[%s875] ss:$2 sm:$0xff]
  %s877 = scalar_lea.vmem [#allocation2], 25
  %v878 = vld [vmem:[%s877] ss:$2 sm:$0xff]
  %s879 = scalar_lea.vmem [#allocation2], 49
  %v880 = vld [vmem:[%s879] ss:$2 sm:$0xff]
  %s881 = scalar_lea.vmem [#allocation2], 73
  %v882 = vld [vmem:[%s881] ss:$2 sm:$0xff]
  %s883 = scalar_lea.vmem [#allocation2], 97
  %v884 = vld [vmem:[%s883] ss:$2 sm:$0xff]
  %s885 = scalar_lea.vmem [#allocation2], 121
  %v886 = vld [vmem:[%s885] ss:$2 sm:$0xff]
  %s887 = scalar_lea.vmem [#allocation2], 145
  %v888 = vld [vmem:[%s887] ss:$2 sm:$0xff]
  %s889 = scalar_lea.vmem [#allocation2], 169
  %v890 = vld [vmem:[%s889] ss:$2 sm:$0xff]
  %s891 = scalar_lea.vmem [#allocation2], 193
  %v892 = vld [vmem:[%s891] ss:$2 sm:$0xff]
  %s893 = scalar_lea.vmem [#allocation2], 217
  %v894 = vld [vmem:[%s893] ss:$2 sm:$0xff]
  %s895 = scalar_lea.vmem [#allocation2], 241
  %v896 = vld [vmem:[%s895] ss:$2 sm:$0xff]
  %s897 = scalar_lea.vmem [#allocation2], 265
  %v898 = vld [vmem:[%s897] ss:$2 sm:$0xff]
  %s899 = scalar_lea.vmem [#allocation2], 289
  %v900 = vld [vmem:[%s899] ss:$2 sm:$0xff]
  %s901 = scalar_lea.vmem [#allocation2], 313
  %v902 = vld [vmem:[%s901] ss:$2 sm:$0xff]
  %s903 = scalar_lea.vmem [#allocation2], 2
  %v904 = vld [vmem:[%s903] ss:$2 sm:$0xff]
  %s905 = scalar_lea.vmem [#allocation2], 26
  %v906 = vld [vmem:[%s905] ss:$2 sm:$0xff]
  %s907 = scalar_lea.vmem [#allocation2], 50
  %v908 = vld [vmem:[%s907] ss:$2 sm:$0xff]
  %s909 = scalar_lea.vmem [#allocation2], 74
  %v910 = vld [vmem:[%s909] ss:$2 sm:$0xff]
  %s911 = scalar_lea.vmem [#allocation2], 98
  %v912 = vld [vmem:[%s911] ss:$2 sm:$0xff]
  %s913 = scalar_lea.vmem [#allocation2], 122
  %v914 = vld [vmem:[%s913] ss:$2 sm:$0xff]
  %s915 = scalar_lea.vmem [#allocation2], 146
  %v916 = vld [vmem:[%s915] ss:$2 sm:$0xff]
  %s917 = scalar_lea.vmem [#allocation2], 170
  %v918 = vld [vmem:[%s917] ss:$2 sm:$0xff]
  %s919 = scalar_lea.vmem [#allocation2], 194
  %v920 = vld [vmem:[%s919] ss:$2 sm:$0xff]
  %s921 = scalar_lea.vmem [#allocation2], 218
  %v922 = vld [vmem:[%s921] ss:$2 sm:$0xff]
  %s923 = scalar_lea.vmem [#allocation2], 242
  %v924 = vld [vmem:[%s923] ss:$2 sm:$0xff]
  %s925 = scalar_lea.vmem [#allocation2], 266
  %v926 = vld [vmem:[%s925] ss:$2 sm:$0xff]
  %s927 = scalar_lea.vmem [#allocation2], 290
  %v928 = vld [vmem:[%s927] ss:$2 sm:$0xff]
  %s929 = scalar_lea.vmem [#allocation2], 314
  %v930 = vld [vmem:[%s929] ss:$2 sm:$0xff]
  %v931 = vmax.f32 %v848, %v876
  %v932 = vmax.f32 %v850, %v878
  %v933 = vmax.f32 %v852, %v880
  %v934 = vmax.f32 %v854, %v882
  %v935 = vmax.f32 %v856, %v884
  %v936 = vmax.f32 %v858, %v886
  %v937 = vmax.f32 %v860, %v888
  %v938 = vmax.f32 %v862, %v890
  %v939 = vmax.f32 %v864, %v892
  %v940 = vmax.f32 %v866, %v894
  %v941 = vmax.f32 %v868, %v896
  %v942 = vmax.f32 %v870, %v898
  %v943 = vmax.f32 %v872, %v900
  %v944 = vmax.f32 %v874, %v902
  %v945 = vmax.f32 %v931, %v904
  %v946 = vmax.f32 %v932, %v906
  %v947 = vmax.f32 %v933, %v908
  %v948 = vmax.f32 %v934, %v910
  %v949 = vmax.f32 %v935, %v912
  %v950 = vmax.f32 %v936, %v914
  %v951 = vmax.f32 %v937, %v916
  %v952 = vmax.f32 %v938, %v918
  %v953 = vmax.f32 %v939, %v920
  %v954 = vmax.f32 %v940, %v922
  %v955 = vmax.f32 %v941, %v924
  %v956 = vmax.f32 %v942, %v926
  %v957 = vmax.f32 %v943, %v928
  %v958 = vmax.f32 %v944, %v930
  %v959 = vmul.f32 %v945, %v945
  %v960 = vmul.f32 %v946, %v946
  %v961 = vmul.f32 %v947, %v947
  %v962 = vmul.f32 %v948, %v948
  %v963 = vmul.f32 %v949, %v949
  %v964 = vmul.f32 %v950, %v950
  %v965 = vmul.f32 %v951, %v951
  %v966 = vmul.f32 %v952, %v952
  %v967 = vmul.f32 %v953, %v953
  %v968 = vmul.f32 %v954, %v954
  %v969 = vmul.f32 %v955, %v955
  %v970 = vmul.f32 %v956, %v956
  %v971 = vmul.f32 %v957, %v957
  %v972 = vmul.f32 %v958, %v958
  %v973 = vld [vmem:[%s3] sm:$0xff]
  %v974 = vld [vmem:[%s3 + $0x8] sm:$0xff]
  %v975 = vld [vmem:[%s3 + $0x10] sm:$0xff]
  %v976 = vld [vmem:[%s3 + $0x18] sm:$0xff]
  %v977 = vld [vmem:[%s3 + $0x20] sm:$0xff]
  %v978 = vld [vmem:[%s3 + $0x28] sm:$0xff]
  %v979 = vld [vmem:[%s3 + $0x30] sm:$0xff]
  %v980 = vld [vmem:[%s3 + $0x38] sm:$0xff]
  %v982 = vsel %vm804, %v959, 0
  %v985 = vsel %vm804, %v960, 0
  %v988 = vsel %vm804, %v961, 0
  %v991 = vsel %vm804, %v962, 0
  %v994 = vsel %vm804, %v963, 0
  %v997 = vsel %vm804, %v964, 0
  %v1000 = vsel %vm804, %v965, 0
  %v1003 = vsel %vm804, %v966, 0
  %v1006 = vsel %vm804, %v967, 0
  %v1009 = vsel %vm804, %v968, 0
  %v1012 = vsel %vm804, %v969, 0
  %v1015 = vsel %vm804, %v970, 0
  %v1018 = vsel %vm804, %v971, 0
  %v1021 = vsel %vm804, %v972, 0
  %1023 = vmatprep.subr.mxu0 0.0
  %1024 = vmatpush1.msra.mxu0 %v973
  %1025 = vmatprep.subr.mxu0 0.0
  %1026 = vmatpush1.msra.mxu0 %v974
  %1027 = vmatprep.subr.mxu0 0.0
  %1028 = vmatpush1.msra.mxu0 %v975
  %1029 = vmatprep.subr.mxu0 0.0
  %1030 = vmatpush1.msra.mxu0 %v976
  %1031 = vmatprep.subr.mxu0 0.0
  %1032 = vmatpush1.msra.mxu0 %v977
  %1033 = vmatprep.subr.mxu0 0.0
  %1034 = vmatpush1.msra.mxu0 %v978
  %1035 = vmatprep.subr.mxu0 0.0
  %1036 = vmatpush1.msra.mxu0 %v979
  %1037 = vmatprep.subr.mxu0 0.0
  %1038 = vmatpush1.msra.mxu0 %v980
  %1039 = vmatprep.subr.mxu0 0.0
  %1040 = vmatpush1.msra.mxu0 0.0
  %1041 = vmatprep.subr.mxu0 0.0
  %1042 = vmatpush1.msra.mxu0 0.0
  %1043 = vmatprep.subr.mxu0 0.0
  %1044 = vmatpush1.msra.mxu0 0.0
  %1045 = vmatprep.subr.mxu0 0.0
  %1046 = vmatpush1.msra.mxu0 0.0
  %1047 = vmatprep.subr.mxu0 0.0
  %1048 = vmatpush1.msra.mxu0 0.0
  %1049 = vmatprep.subr.mxu0 0.0
  %1050 = vmatpush1.msra.mxu0 0.0
  %1051 = vmatprep.subr.mxu0 0.0
  %1052 = vmatpush1.msra.mxu0 0.0
  %1053 = vmatprep.subr.mxu0 0.0
  %1054 = vmatpush1.msra.mxu0 0.0
  %1055 = vmatprep.subr.mxu0 0.0
  %1056 = vmatpush1.msra.mxu0 0.0
  %1057 = vmatprep.subr.mxu0 0.0
  %1058 = vmatpush1.msra.mxu0 0.0
  %1059 = vmatprep.subr.mxu0 0.0
  %1060 = vmatpush1.msra.mxu0 0.0
  %1061 = vmatprep.subr.mxu0 0.0
  %1062 = vmatpush1.msra.mxu0 0.0
  %1063 = vmatprep.subr.mxu0 0.0
  %1064 = vmatpush1.msra.mxu0 0.0
  %1065 = vmatprep.subr.mxu0 0.0
  %1066 = vmatpush1.msra.mxu0 0.0
  %1067 = vmatprep.subr.mxu0 0.0
  %1068 = vmatpush1.msra.mxu0 0.0
  %1069 = vmatprep.subr.mxu0 0.0
  %1070 = vmatpush1.msra.mxu0 0.0
  %1071 = vmatprep.subr.mxu0 0.0
  %1072 = vmatpush1.msra.mxu0 0.0
  %1073 = vmatprep.subr.mxu0 0.0
  %1074 = vmatpush1.msra.mxu0 0.0
  %1075 = vmatprep.subr.mxu0 0.0
  %1076 = vmatpush1.msra.mxu0 0.0
  %1077 = vmatprep.subr.mxu0 0.0
  %1078 = vmatpush1.msra.mxu0 0.0
  %1079 = vmatprep.subr.mxu0 0.0
  %1080 = vmatpush1.msra.mxu0 0.0
  %1081 = vmatprep.subr.mxu0 0.0
  %1082 = vmatpush1.msra.mxu0 0.0
  %1083 = vmatprep.subr.mxu0 0.0
  %1084 = vmatpush1.msra.mxu0 0.0
  %1085 = vmatprep.subr.mxu0 0.0
  %1086 = vmatpush1.msra.mxu0 0.0
  %1087 = vmatprep.mubr.f32.mxu0 0.0
  %1088 = vmatmul.mubr.f32.gmra.mrb[0].mxu0 %v982
  %v1089 = vpop.f32.mrb[0].mxu0
  %v1090 = vadd.f32 0.0, %v1089
  %v1091 = vpop.f32.mrb[0].mxu0
  %1092 = vmatprep.mubr.f32.mxu0 0.0
  %1093 = vmatmul.mubr.f32.gmra.mrb[0].mxu0 %v985
  %v1094 = vpop.f32.mrb[0].mxu0
  %v1095 = vadd.f32 0.0, %v1094
  %v1096 = vpop.f32.mrb[0].mxu0
  %1097 = vmatprep.mubr.f32.mxu0 0.0
  %1098 = vmatmul.mubr.f32.gmra.mrb[0].mxu0 %v988
  %v1099 = vpop.f32.mrb[0].mxu0
  %v1100 = vadd.f32 0.0, %v1099
  %v1101 = vpop.f32.mrb[0].mxu0
  %1102 = vmatprep.mubr.f32.mxu0 0.0
  %1103 = vmatmul.mubr.f32.gmra.mrb[0].mxu0 %v991
  %v1104 = vpop.f32.mrb[0].mxu0
  %v1105 = vadd.f32 0.0, %v1104
  %v1106 = vpop.f32.mrb[0].mxu0
  %1107 = vmatprep.mubr.f32.mxu0 0.0
  %1108 = vmatmul.mubr.f32.gmra.mrb[0].mxu0 %v994
  %v1109 = vpop.f32.mrb[0].mxu0
  %v1110 = vadd.f32 0.0, %v1109
  %v1111 = vpop.f32.mrb[0].mxu0
  %1112 = vmatprep.mubr.f32.mxu0 0.0
  %1113 = vmatmul.mubr.f32.gmra.mrb[0].mxu0 %v997
  %v1114 = vpop.f32.mrb[0].mxu0
  %v1115 = vadd.f32 0.0, %v1114
  %v1116 = vpop.f32.mrb[0].mxu0
  %1117 = vmatprep.mubr.f32.mxu0 0.0
  %1118 = vmatmul.mubr.f32.gmra.mrb[0].mxu0 %v1000
  %v1119 = vpop.f32.mrb[0].mxu0
  %v1120 = vadd.f32 0.0, %v1119
  %v1121 = vpop.f32.mrb[0].mxu0
  %1122 = vmatprep.mubr.f32.mxu0 0.0
  %1123 = vmatmul.mubr.f32.gmra.mrb[0].mxu0 %v1003
  %v1124 = vpop.f32.mrb[0].mxu0
  %v1125 = vadd.f32 0.0, %v1124
  %v1126 = vpop.f32.mrb[0].mxu0
  %1127 = vmatprep.mubr.f32.mxu0 0.0
  %1128 = vmatmul.mubr.f32.gmra.mrb[0].mxu0 %v1006
  %v1129 = vpop.f32.mrb[0].mxu0
  %v1130 = vadd.f32 0.0, %v1129
  %v1131 = vpop.f32.mrb[0].mxu0
  %1132 = vmatprep.mubr.f32.mxu0 0.0
  %1133 = vmatmul.mubr.f32.gmra.mrb[0].mxu0 %v1009
  %v1134 = vpop.f32.mrb[0].mxu0
  %v1135 = vadd.f32 0.0, %v1134
  %v1136 = vpop.f32.mrb[0].mxu0
  %1137 = vmatprep.mubr.f32.mxu0 0.0
  %1138 = vmatmul.mubr.f32.gmra.mrb[0].mxu0 %v1012
  %v1139 = vpop.f32.mrb[0].mxu0
  %v1140 = vadd.f32 0.0, %v1139
  %v1141 = vpop.f32.mrb[0].mxu0
  %1142 = vmatprep.mubr.f32.mxu0 0.0
  %1143 = vmatmul.mubr.f32.gmra.mrb[0].mxu0 %v1015
  %v1144 = vpop.f32.mrb[0].mxu0
  %v1145 = vadd.f32 0.0, %v1144
  %v1146 = vpop.f32.mrb[0].mxu0
  %1147 = vmatprep.mubr.f32.mxu0 0.0
  %1148 = vmatmul.mubr.f32.gmra.mrb[0].mxu0 %v1018
  %v1149 = vpop.f32.mrb[0].mxu0
  %v1150 = vadd.f32 0.0, %v1149
  %v1151 = vpop.f32.mrb[0].mxu0
  %1152 = vmatprep.mubr.f32.mxu0 0.0
  %1153 = vmatmul.mubr.f32.gmra.mrb[0].mxu0 %v1021
  %v1154 = vpop.f32.mrb[0].mxu0
  %v1155 = vadd.f32 0.0, %v1154
  %v1156 = vpop.f32.mrb[0].mxu0
  %1157 = vdwg.mxu0
  %v1158 = vmul.f32 %v1090, 1.6666667e-05
  %v1159 = vmul.f32 %v1095, 1.6666667e-05
  %v1160 = vmul.f32 %v1100, 1.6666667e-05
  %v1161 = vmul.f32 %v1105, 1.6666667e-05
  %v1162 = vmul.f32 %v1110, 1.6666667e-05
  %v1163 = vmul.f32 %v1115, 1.6666667e-05
  %v1164 = vmul.f32 %v1120, 1.6666667e-05
  %v1165 = vmul.f32 %v1125, 1.6666667e-05
  %v1166 = vmul.f32 %v1130, 1.6666667e-05
  %v1167 = vmul.f32 %v1135, 1.6666667e-05
  %v1168 = vmul.f32 %v1140, 1.6666667e-05
  %v1169 = vmul.f32 %v1145, 1.6666667e-05
  %v1170 = vmul.f32 %v1150, 1.6666667e-05
  %v1171 = vmul.f32 %v1155, 1.6666667e-05
  %v1172 = vadd.f32 %v1158, 1.0
  %v1173 = vadd.f32 %v1159, 1.0
  %v1174 = vadd.f32 %v1160, 1.0
  %v1175 = vadd.f32 %v1161, 1.0
  %v1176 = vadd.f32 %v1162, 1.0
  %v1177 = vadd.f32 %v1163, 1.0
  %v1178 = vadd.f32 %v1164, 1.0
  %v1179 = vadd.f32 %v1165, 1.0
  %v1180 = vadd.f32 %v1166, 1.0
  %v1181 = vadd.f32 %v1167, 1.0
  %v1182 = vadd.f32 %v1168, 1.0
  %v1183 = vadd.f32 %v1169, 1.0
  %v1184 = vadd.f32 %v1170, 1.0
  %v1185 = vadd.f32 %v1171, 1.0
  %v1186 = vlog2.pop %v1172
  %v1187 = vmul.f32 %v1186, 0.6931472
  %v1188 = vlog2.pop %v1173
  %v1189 = vmul.f32 %v1188, 0.6931472
  %v1190 = vlog2.pop %v1174
  %v1191 = vmul.f32 %v1190, 0.6931472
  %v1192 = vlog2.pop %v1175
  %v1193 = vmul.f32 %v1192, 0.6931472
  %v1194 = vlog2.pop %v1176
  %v1195 = vmul.f32 %v1194, 0.6931472
  %v1196 = vlog2.pop %v1177
  %v1197 = vmul.f32 %v1196, 0.6931472
  %v1198 = vlog2.pop %v1178
  %v1199 = vmul.f32 %v1198, 0.6931472
  %v1200 = vlog2.pop %v1179
  %v1201 = vmul.f32 %v1200, 0.6931472
  %v1202 = vlog2.pop %v1180
  %v1203 = vmul.f32 %v1202, 0.6931472
  %v1204 = vlog2.pop %v1181
  %v1205 = vmul.f32 %v1204, 0.6931472
  %v1206 = vlog2.pop %v1182
  %v1207 = vmul.f32 %v1206, 0.6931472
  %v1208 = vlog2.pop %v1183
  %v1209 = vmul.f32 %v1208, 0.6931472
  %v1210 = vlog2.pop %v1184
  %v1211 = vmul.f32 %v1210, 0.6931472
  %v1212 = vlog2.pop %v1185
  %v1213 = vmul.f32 %v1212, 0.6931472
  %v1214 = vmul.f32 %v1187, -0.75
  %v1215 = vmul.f32 %v1189, -0.75
  %v1216 = vmul.f32 %v1191, -0.75
  %v1217 = vmul.f32 %v1193, -0.75
  %v1218 = vmul.f32 %v1195, -0.75
  %v1219 = vmul.f32 %v1197, -0.75
  %v1220 = vmul.f32 %v1199, -0.75
  %v1221 = vmul.f32 %v1201, -0.75
  %v1222 = vmul.f32 %v1203, -0.75
  %v1223 = vmul.f32 %v1205, -0.75
  %v1224 = vmul.f32 %v1207, -0.75
  %v1225 = vmul.f32 %v1209, -0.75
  %v1226 = vmul.f32 %v1211, -0.75
  %v1227 = vmul.f32 %v1213, -0.75
  %v1228 = vmul.f32 %v1214, 1.442695
  %v1229 = vpow.pop %v1228
  %v1230 = vmul.f32 %v1215, 1.442695
  %v1231 = vpow.pop %v1230
  %v1232 = vmul.f32 %v1216, 1.442695
  %v1233 = vpow.pop %v1232
  %v1234 = vmul.f32 %v1217, 1.442695
  %v1235 = vpow.pop %v1234
  %v1236 = vmul.f32 %v1218, 1.442695
  %v1237 = vpow.pop %v1236
  %v1238 = vmul.f32 %v1219, 1.442695
  %v1239 = vpow.pop %v1238
  %v1240 = vmul.f32 %v1220, 1.442695
  %v1241 = vpow.pop %v1240
  %v1242 = vmul.f32 %v1221, 1.442695
  %v1243 = vpow.pop %v1242
  %v1244 = vmul.f32 %v1222, 1.442695
  %v1245 = vpow.pop %v1244
  %v1246 = vmul.f32 %v1223, 1.442695
  %v1247 = vpow.pop %v1246
  %v1248 = vmul.f32 %v1224, 1.442695
  %v1249 = vpow.pop %v1248
  %v1250 = vmul.f32 %v1225, 1.442695
  %v1251 = vpow.pop %v1250
  %v1252 = vmul.f32 %v1226, 1.442695
  %v1253 = vpow.pop %v1252
  %v1254 = vmul.f32 %v1227, 1.442695
  %v1255 = vpow.pop %v1254
  %v1256 = vmul.f32 %v945, %v1229
  %v1257 = vmul.f32 %v946, %v1231
  %v1258 = vmul.f32 %v947, %v1233
  %v1259 = vmul.f32 %v948, %v1235
  %v1260 = vmul.f32 %v949, %v1237
  %v1261 = vmul.f32 %v950, %v1239
  %v1262 = vmul.f32 %v951, %v1241
  %v1263 = vmul.f32 %v952, %v1243
  %v1264 = vmul.f32 %v953, %v1245
  %v1265 = vmul.f32 %v954, %v1247
  %v1266 = vmul.f32 %v955, %v1249
  %v1267 = vmul.f32 %v956, %v1251
  %v1268 = vmul.f32 %v957, %v1253
  %v1269 = vmul.f32 %v958, %v1255
  %1270 = vst.msk [vmem:[#allocation3] sm:$0xff] %vm804, 0.0
  %1271 = vst.msk [vmem:[#allocation3 + $0x8] sm:$0x3] %vm833, 0.0
  %1272 = vst.msk [vmem:[#allocation3 + $0x10] sm:$0xff] %vm804, 0.0
  %1273 = vst.msk [vmem:[#allocation3 + $0x18] sm:$0x3] %vm833, 0.0
  %1274 = vst.msk [vmem:[#allocation3 + $0x20] sm:$0xff] %vm804, 0.0
  %1275 = vst.msk [vmem:[#allocation3 + $0x28] sm:$0x3] %vm833, 0.0
  %1276 = vst.msk [vmem:[#allocation3 + $0x30] sm:$0xff] %vm804, 0.0
  %1277 = vst.msk [vmem:[#allocation3 + $0x38] sm:$0x3] %vm833, 0.0
  %1278 = vst.msk [vmem:[#allocation3 + $0x40] sm:$0xff] %vm804, 0.0
  %1279 = vst.msk [vmem:[#allocation3 + $0x48] sm:$0x3] %vm833, 0.0
  %1280 = vst.msk [vmem:[#allocation3 + $0x50] sm:$0xff] %vm804, 0.0
  %1281 = vst.msk [vmem:[#allocation3 + $0x58] sm:$0x3] %vm833, 0.0
  %1282 = vst.msk [vmem:[#allocation3 + $0x60] sm:$0xff] %vm804, 0.0
  %1283 = vst.msk [vmem:[#allocation3 + $0x68] sm:$0x3] %vm833, 0.0
  %1284 = vst.msk [vmem:[#allocation3 + $0x70] sm:$0xff] %vm804, 0.0
  %1285 = vst.msk [vmem:[#allocation3 + $0x78] sm:$0x3] %vm833, 0.0
  %1286 = vst.msk [vmem:[#allocation3 + $0x80] sm:$0xff] %vm804, 0.0
  %1287 = vst.msk [vmem:[#allocation3 + $0x88] sm:$0x3] %vm833, 0.0
  %1288 = vst.msk [vmem:[#allocation3 + $0x90] sm:$0xff] %vm804, 0.0
  %1289 = vst.msk [vmem:[#allocation3 + $0x98] sm:$0x3] %vm833, 0.0
  %1290 = vst.msk [vmem:[#allocation3 + $0xa0] sm:$0xff] %vm804, 0.0
  %1291 = vst.msk [vmem:[#allocation3 + $0xa8] sm:$0x3] %vm833, 0.0
  %1292 = vst.msk [vmem:[#allocation3 + $0xb0] sm:$0xff] %vm804, 0.0
  %1293 = vst.msk [vmem:[#allocation3 + $0xb8] sm:$0x3] %vm833, 0.0
  %1294 = vst.msk [vmem:[#allocation3 + $0xc0] sm:$0xff] %vm804, 0.0
  %1295 = vst.msk [vmem:[#allocation3 + $0xc8] sm:$0x3] %vm833, 0.0
  %1296 = vst.msk [vmem:[#allocation3 + $0xd0] sm:$0xff] %vm804, 0.0
  %1297 = vst.msk [vmem:[#allocation3 + $0xd8] sm:$0x3] %vm833, 0.0
  %1298 = vst.msk [vmem:[#allocation3 + $0xe0] sm:$0xff] %vm804, 0.0
  %1299 = vst.msk [vmem:[#allocation3 + $0xe8] sm:$0x3] %vm833, 0.0
  %1300 = vst.msk [vmem:[#allocation3 + $0xf0] sm:$0xff] %vm804, 0.0
  %1301 = vst.msk [vmem:[#allocation3 + $0xf8] sm:$0x3] %vm833, 0.0
  %1302 = vst.msk [vmem:[#allocation3 + $0x100] sm:$0xff] %vm804, 0.0
  %1303 = vst.msk [vmem:[#allocation3 + $0x108] sm:$0x3] %vm833, 0.0
  %1304 = vst.msk [vmem:[#allocation3 + $0x110] sm:$0xff] %vm804, 0.0
  %1305 = vst.msk [vmem:[#allocation3 + $0x118] sm:$0x3] %vm833, 0.0
  %s1306 = scalar_lea.vmem [#allocation3], 16
  %vm1307 = vcmask 522240
  %1308 = vst.msk [vmem:[%s1306 + $0x1] sm:$0x7f] %vm1307, %v1256
  %1309 = vst.msk [vmem:[%s1306 + $0x11] sm:$0x7f] %vm1307, %v1257
  %1310 = vst.msk [vmem:[%s1306 + $0x21] sm:$0x7f] %vm1307, %v1258
  %1311 = vst.msk [vmem:[%s1306 + $0x31] sm:$0x7f] %vm1307, %v1259
  %1312 = vst.msk [vmem:[%s1306 + $0x41] sm:$0x7f] %vm1307, %v1260
  %1313 = vst.msk [vmem:[%s1306 + $0x51] sm:$0x7f] %vm1307, %v1261
  %1314 = vst.msk [vmem:[%s1306 + $0x61] sm:$0x7f] %vm1307, %v1262
  %1315 = vst.msk [vmem:[%s1306 + $0x91] sm:$0x7f] %vm1307, %v1263
  %1316 = vst.msk [vmem:[%s1306 + $0xa1] sm:$0x7f] %vm1307, %v1264
  %1317 = vst.msk [vmem:[%s1306 + $0xb1] sm:$0x7f] %vm1307, %v1265
  %1318 = vst.msk [vmem:[%s1306 + $0xc1] sm:$0x7f] %vm1307, %v1266
  %1319 = vst.msk [vmem:[%s1306 + $0xd1] sm:$0x7f] %vm1307, %v1267
  %1320 = vst.msk [vmem:[%s1306 + $0xe1] sm:$0x7f] %vm1307, %v1268
  %1321 = vst.msk [vmem:[%s1306 + $0xf1] sm:$0x7f] %vm1307, %v1269
  %v1322 = vld [vmem:[%s5] sm:$0x1]
  %v1324 = vlaneseq
  %v1325 = vshrl.u32 %v1324, 7
  %v1326 = vsub.s32 0, %v1325
  %v1327 = vrot.slane %v1322, %v1326
  %v1329 = vld [vmem:[#allocation3] sm:$0xff]
  %v1330 = vld [vmem:[#allocation3 + $0x10] sm:$0xff]
  %v1331 = vld [vmem:[#allocation3 + $0x20] sm:$0xff]
  %v1332 = vld [vmem:[#allocation3 + $0x30] sm:$0xff]
  %v1333 = vld [vmem:[#allocation3 + $0x40] sm:$0xff]
  %v1334 = vld [vmem:[#allocation3 + $0x50] sm:$0xff]
  %v1335 = vld [vmem:[#allocation3 + $0x60] sm:$0xff]
  %v1336 = vld [vmem:[#allocation3 + $0x90] sm:$0xff]
  %v1337 = vld [vmem:[#allocation3 + $0xa0] sm:$0xff]
  %v1338 = vld [vmem:[#allocation3 + $0xb0] sm:$0xff]
  %v1339 = vld [vmem:[#allocation3 + $0xc0] sm:$0xff]
  %v1340 = vld [vmem:[#allocation3 + $0xd0] sm:$0xff]
  %v1341 = vld [vmem:[#allocation3 + $0xe0] sm:$0xff]
  %v1342 = vld [vmem:[#allocation3 + $0xf0] sm:$0xff]
  %v1343 = vld [vmem:[%s4] sm:$0xff]
  %v1344 = vld [vmem:[%s4 + $0x8] sm:$0xff]
  %v1345 = vld [vmem:[%s4 + $0x10] sm:$0xff]
  %v1346 = vld [vmem:[%s4 + $0x18] sm:$0xff]
  %v1347 = vld [vmem:[%s4 + $0x20] sm:$0xff]
  %v1348 = vld [vmem:[%s4 + $0x28] sm:$0xff]
  %v1349 = vld [vmem:[%s4 + $0x30] sm:$0xff]
  %v1350 = vld [vmem:[%s4 + $0x38] sm:$0xff]
  %v1352 = vsel %vm804, %v1329, 0
  %v1355 = vsel %vm804, %v1330, 0
  %v1358 = vsel %vm804, %v1331, 0
  %v1361 = vsel %vm804, %v1332, 0
  %v1364 = vsel %vm804, %v1333, 0
  %v1367 = vsel %vm804, %v1334, 0
  %v1370 = vsel %vm804, %v1335, 0
  %v1373 = vsel %vm804, %v1336, 0
  %v1376 = vsel %vm804, %v1337, 0
  %v1379 = vsel %vm804, %v1338, 0
  %v1382 = vsel %vm804, %v1339, 0
  %v1385 = vsel %vm804, %v1340, 0
  %v1388 = vsel %vm804, %v1341, 0
  %v1391 = vsel %vm804, %v1342, 0
  %1393 = vmatprep.subr.mxu0 0.0
  %1394 = vmatpush1.msra.mxu0 %v1343
  %1395 = vmatprep.subr.mxu0 0.0
  %1396 = vmatpush1.msra.mxu0 %v1344
  %1397 = vmatprep.subr.mxu0 0.0
  %1398 = vmatpush1.msra.mxu0 %v1345
  %1399 = vmatprep.subr.mxu0 0.0
  %1400 = vmatpush1.msra.mxu0 %v1346
  %1401 = vmatprep.subr.mxu0 0.0
  %1402 = vmatpush1.msra.mxu0 %v1347
  %1403 = vmatprep.subr.mxu0 0.0
  %1404 = vmatpush1.msra.mxu0 %v1348
  %1405 = vmatprep.subr.mxu0 0.0
  %1406 = vmatpush1.msra.mxu0 %v1349
  %1407 = vmatprep.subr.mxu0 0.0
  %1408 = vmatpush1.msra.mxu0 %v1350
  %1409 = vmatprep.subr.mxu0 0.0
  %1410 = vmatpush1.msra.mxu0 0.0
  %1411 = vmatprep.subr.mxu0 0.0
  %1412 = vmatpush1.msra.mxu0 0.0
  %1413 = vmatprep.subr.mxu0 0.0
  %1414 = vmatpush1.msra.mxu0 0.0
  %1415 = vmatprep.subr.mxu0 0.0
  %1416 = vmatpush1.msra.mxu0 0.0
  %1417 = vmatprep.subr.mxu0 0.0
  %1418 = vmatpush1.msra.mxu0 0.0
  %1419 = vmatprep.subr.mxu0 0.0
  %1420 = vmatpush1.msra.mxu0 0.0
  %1421 = vmatprep.subr.mxu0 0.0
  %1422 = vmatpush1.msra.mxu0 0.0
  %1423 = vmatprep.subr.mxu0 0.0
  %1424 = vmatpush1.msra.mxu0 0.0
  %1425 = vmatprep.subr.mxu0 0.0
  %1426 = vmatpush1.msra.mxu0 0.0
  %1427 = vmatprep.subr.mxu0 0.0
  %1428 = vmatpush1.msra.mxu0 0.0
  %1429 = vmatprep.subr.mxu0 0.0
  %1430 = vmatpush1.msra.mxu0 0.0
  %1431 = vmatprep.subr.mxu0 0.0
  %1432 = vmatpush1.msra.mxu0 0.0
  %1433 = vmatprep.subr.mxu0 0.0
  %1434 = vmatpush1.msra.mxu0 0.0
  %1435 = vmatprep.subr.mxu0 0.0
  %1436 = vmatpush1.msra.mxu0 0.0
  %1437 = vmatprep.subr.mxu0 0.0
  %1438 = vmatpush1.msra.mxu0 0.0
  %1439 = vmatprep.subr.mxu0 0.0
  %1440 = vmatpush1.msra.mxu0 0.0
  %1441 = vmatprep.subr.mxu0 0.0
  %1442 = vmatpush1.msra.mxu0 0.0
  %1443 = vmatprep.subr.mxu0 0.0
  %1444 = vmatpush1.msra.mxu0 0.0
  %1445 = vmatprep.subr.mxu0 0.0
  %1446 = vmatpush1.msra.mxu0 0.0
  %1447 = vmatprep.subr.mxu0 0.0
  %1448 = vmatpush1.msra.mxu0 0.0
  %1449 = vmatprep.subr.mxu0 0.0
  %1450 = vmatpush1.msra.mxu0 0.0
  %1451 = vmatprep.subr.mxu0 0.0
  %1452 = vmatpush1.msra.mxu0 0.0
  %1453 = vmatprep.subr.mxu0 0.0
  %1454 = vmatpush1.msra.mxu0 0.0
  %1455 = vmatprep.subr.mxu0 0.0
  %1456 = vmatpush1.msra.mxu0 0.0
  %1457 = vmatprep.mubr.f32.mxu0 0.0
  %1458 = vmatmul.mubr.f32.gmra.mrb[0].mxu0 %v1352
  %v1459 = vpop.f32.mrb[0].mxu0
  %v1460 = vadd.f32 0.0, %v1459
  %v1461 = vpop.f32.mrb[0].mxu0
  %1462 = vmatprep.mubr.f32.mxu0 0.0
  %1463 = vmatmul.mubr.f32.gmra.mrb[0].mxu0 %v1355
  %v1464 = vpop.f32.mrb[0].mxu0
  %v1465 = vadd.f32 0.0, %v1464
  %v1466 = vpop.f32.mrb[0].mxu0
  %1467 = vmatprep.mubr.f32.mxu0 0.0
  %1468 = vmatmul.mubr.f32.gmra.mrb[0].mxu0 %v1358
  %v1469 = vpop.f32.mrb[0].mxu0
  %v1470 = vadd.f32 0.0, %v1469
  %v1471 = vpop.f32.mrb[0].mxu0
  %1472 = vmatprep.mubr.f32.mxu0 0.0
  %1473 = vmatmul.mubr.f32.gmra.mrb[0].mxu0 %v1361
  %v1474 = vpop.f32.mrb[0].mxu0
  %v1475 = vadd.f32 0.0, %v1474
  %v1476 = vpop.f32.mrb[0].mxu0
  %1477 = vmatprep.mubr.f32.mxu0 0.0
  %1478 = vmatmul.mubr.f32.gmra.mrb[0].mxu0 %v1364
  %v1479 = vpop.f32.mrb[0].mxu0
  %v1480 = vadd.f32 0.0, %v1479
  %v1481 = vpop.f32.mrb[0].mxu0
  %1482 = vmatprep.mubr.f32.mxu0 0.0
  %1483 = vmatmul.mubr.f32.gmra.mrb[0].mxu0 %v1367
  %v1484 = vpop.f32.mrb[0].mxu0
  %v1485 = vadd.f32 0.0, %v1484
  %v1486 = vpop.f32.mrb[0].mxu0
  %1487 = vmatprep.mubr.f32.mxu0 0.0
  %1488 = vmatmul.mubr.f32.gmra.mrb[0].mxu0 %v1370
  %v1489 = vpop.f32.mrb[0].mxu0
  %v1490 = vadd.f32 0.0, %v1489
  %v1491 = vpop.f32.mrb[0].mxu0
  %1492 = vmatprep.mubr.f32.mxu0 0.0
  %1493 = vmatmul.mubr.f32.gmra.mrb[0].mxu0 %v1373
  %v1494 = vpop.f32.mrb[0].mxu0
  %v1495 = vadd.f32 0.0, %v1494
  %v1496 = vpop.f32.mrb[0].mxu0
  %1497 = vmatprep.mubr.f32.mxu0 0.0
  %1498 = vmatmul.mubr.f32.gmra.mrb[0].mxu0 %v1376
  %v1499 = vpop.f32.mrb[0].mxu0
  %v1500 = vadd.f32 0.0, %v1499
  %v1501 = vpop.f32.mrb[0].mxu0
  %1502 = vmatprep.mubr.f32.mxu0 0.0
  %1503 = vmatmul.mubr.f32.gmra.mrb[0].mxu0 %v1379
  %v1504 = vpop.f32.mrb[0].mxu0
  %v1505 = vadd.f32 0.0, %v1504
  %v1506 = vpop.f32.mrb[0].mxu0
  %1507 = vmatprep.mubr.f32.mxu0 0.0
  %1508 = vmatmul.mubr.f32.gmra.mrb[0].mxu0 %v1382
  %v1509 = vpop.f32.mrb[0].mxu0
  %v1510 = vadd.f32 0.0, %v1509
  %v1511 = vpop.f32.mrb[0].mxu0
  %1512 = vmatprep.mubr.f32.mxu0 0.0
  %1513 = vmatmul.mubr.f32.gmra.mrb[0].mxu0 %v1385
  %v1514 = vpop.f32.mrb[0].mxu0
  %v1515 = vadd.f32 0.0, %v1514
  %v1516 = vpop.f32.mrb[0].mxu0
  %1517 = vmatprep.mubr.f32.mxu0 0.0
  %1518 = vmatmul.mubr.f32.gmra.mrb[0].mxu0 %v1388
  %v1519 = vpop.f32.mrb[0].mxu0
  %v1520 = vadd.f32 0.0, %v1519
  %v1521 = vpop.f32.mrb[0].mxu0
  %1522 = vmatprep.mubr.f32.mxu0 0.0
  %1523 = vmatmul.mubr.f32.gmra.mrb[0].mxu0 %v1391
  %v1524 = vpop.f32.mrb[0].mxu0
  %v1525 = vadd.f32 0.0, %v1524
  %v1526 = vpop.f32.mrb[0].mxu0
  %1527 = vdwg.mxu0
  %v1528 = vld [vmem:[#allocation3 + $0x1] sm:$0xff]
  %v1529 = vld [vmem:[#allocation3 + $0x11] sm:$0xff]
  %v1530 = vld [vmem:[#allocation3 + $0x21] sm:$0xff]
  %v1531 = vld [vmem:[#allocation3 + $0x31] sm:$0xff]
  %v1532 = vld [vmem:[#allocation3 + $0x41] sm:$0xff]
  %v1533 = vld [vmem:[#allocation3 + $0x51] sm:$0xff]
  %v1534 = vld [vmem:[#allocation3 + $0x61] sm:$0xff]
  %v1535 = vld [vmem:[#allocation3 + $0x91] sm:$0xff]
  %v1536 = vld [vmem:[#allocation3 + $0xa1] sm:$0xff]
  %v1537 = vld [vmem:[#allocation3 + $0xb1] sm:$0xff]
  %v1538 = vld [vmem:[#allocation3 + $0xc1] sm:$0xff]
  %v1539 = vld [vmem:[#allocation3 + $0xd1] sm:$0xff]
  %v1540 = vld [vmem:[#allocation3 + $0xe1] sm:$0xff]
  %v1541 = vld [vmem:[#allocation3 + $0xf1] sm:$0xff]
  %s1542 = scalar_lea.vmem %s4, 64
  %v1543 = vld [vmem:[%s1542] sm:$0xff]
  %v1544 = vld [vmem:[%s1542 + $0x8] sm:$0xff]
  %v1545 = vld [vmem:[%s1542 + $0x10] sm:$0xff]
  %v1546 = vld [vmem:[%s1542 + $0x18] sm:$0xff]
  %v1547 = vld [vmem:[%s1542 + $0x20] sm:$0xff]
  %v1548 = vld [vmem:[%s1542 + $0x28] sm:$0xff]
  %v1549 = vld [vmem:[%s1542 + $0x30] sm:$0xff]
  %v1550 = vld [vmem:[%s1542 + $0x38] sm:$0xff]
  %v1551 = vld [vmem:[#allocation3 + $0x2] sm:$0xff]
  %v1552 = vld [vmem:[#allocation3 + $0x12] sm:$0xff]
  %v1553 = vld [vmem:[#allocation3 + $0x22] sm:$0xff]
  %v1554 = vld [vmem:[#allocation3 + $0x32] sm:$0xff]
  %v1555 = vld [vmem:[#allocation3 + $0x42] sm:$0xff]
  %v1556 = vld [vmem:[#allocation3 + $0x52] sm:$0xff]
  %v1557 = vld [vmem:[#allocation3 + $0x62] sm:$0xff]
  %v1558 = vld [vmem:[#allocation3 + $0x92] sm:$0xff]
  %v1559 = vld [vmem:[#allocation3 + $0xa2] sm:$0xff]
  %v1560 = vld [vmem:[#allocation3 + $0xb2] sm:$0xff]
  %v1561 = vld [vmem:[#allocation3 + $0xc2] sm:$0xff]
  %v1562 = vld [vmem:[#allocation3 + $0xd2] sm:$0xff]
  %v1563 = vld [vmem:[#allocation3 + $0xe2] sm:$0xff]
  %v1564 = vld [vmem:[#allocation3 + $0xf2] sm:$0xff]
  %s1565 = scalar_lea.vmem %s4, 128
  %v1566 = vld [vmem:[%s1565] sm:$0xff]
  %v1567 = vld [vmem:[%s1565 + $0x8] sm:$0xff]
  %v1568 = vld [vmem:[%s1565 + $0x10] sm:$0xff]
  %v1569 = vld [vmem:[%s1565 + $0x18] sm:$0xff]
  %v1570 = vld [vmem:[%s1565 + $0x20] sm:$0xff]
  %v1571 = vld [vmem:[%s1565 + $0x28] sm:$0xff]
  %v1572 = vld [vmem:[%s1565 + $0x30] sm:$0xff]
  %v1573 = vld [vmem:[%s1565 + $0x38] sm:$0xff]
  %v1575 = vsel %vm804, %v1551, 0
  %v1578 = vsel %vm804, %v1552, 0
  %v1581 = vsel %vm804, %v1553, 0
  %v1584 = vsel %vm804, %v1554, 0
  %v1587 = vsel %vm804, %v1555, 0
  %v1590 = vsel %vm804, %v1556, 0
  %v1593 = vsel %vm804, %v1557, 0
  %v1596 = vsel %vm804, %v1558, 0
  %v1599 = vsel %vm804, %v1559, 0
  %v1602 = vsel %vm804, %v1560, 0
  %v1605 = vsel %vm804, %v1561, 0
  %v1608 = vsel %vm804, %v1562, 0
  %v1611 = vsel %vm804, %v1563, 0
  %v1614 = vsel %vm804, %v1564, 0
  %1616 = vmatprep.subr.mxu0 0.0
  %1617 = vmatpush1.msra.mxu0 %v1566
  %1618 = vmatprep.subr.mxu0 0.0
  %1619 = vmatpush1.msra.mxu0 %v1567
  %1620 = vmatprep.subr.mxu0 0.0
  %1621 = vmatpush1.msra.mxu0 %v1568
  %1622 = vmatprep.subr.mxu0 0.0
  %1623 = vmatpush1.msra.mxu0 %v1569
  %1624 = vmatprep.subr.mxu0 0.0
  %1625 = vmatpush1.msra.mxu0 %v1570
  %1626 = vmatprep.subr.mxu0 0.0
  %1627 = vmatpush1.msra.mxu0 %v1571
  %1628 = vmatprep.subr.mxu0 0.0
  %1629 = vmatpush1.msra.mxu0 %v1572
  %1630 = vmatprep.subr.mxu0 0.0
  %1631 = vmatpush1.msra.mxu0 %v1573
  %1632 = vmatprep.subr.mxu0 0.0
  %1633 = vmatpush1.msra.mxu0 0.0
  %1634 = vmatprep.subr.mxu0 0.0
  %1635 = vmatpush1.msra.mxu0 0.0
  %1636 = vmatprep.subr.mxu0 0.0
  %1637 = vmatpush1.msra.mxu0 0.0
  %1638 = vmatprep.subr.mxu0 0.0
  %1639 = vmatpush1.msra.mxu0 0.0
  %1640 = vmatprep.subr.mxu0 0.0
  %1641 = vmatpush1.msra.mxu0 0.0
  %1642 = vmatprep.subr.mxu0 0.0
  %1643 = vmatpush1.msra.mxu0 0.0
  %1644 = vmatprep.subr.mxu0 0.0
  %1645 = vmatpush1.msra.mxu0 0.0
  %1646 = vmatprep.subr.mxu0 0.0
  %1647 = vmatpush1.msra.mxu0 0.0
  %1648 = vmatprep.subr.mxu0 0.0
  %1649 = vmatpush1.msra.mxu0 0.0
  %1650 = vmatprep.subr.mxu0 0.0
  %1651 = vmatpush1.msra.mxu0 0.0
  %1652 = vmatprep.subr.mxu0 0.0
  %1653 = vmatpush1.msra.mxu0 0.0
  %1654 = vmatprep.subr.mxu0 0.0
  %1655 = vmatpush1.msra.mxu0 0.0
  %1656 = vmatprep.subr.mxu0 0.0
  %1657 = vmatpush1.msra.mxu0 0.0
  %1658 = vmatprep.subr.mxu0 0.0
  %1659 = vmatpush1.msra.mxu0 0.0
  %1660 = vmatprep.subr.mxu0 0.0
  %1661 = vmatpush1.msra.mxu0 0.0
  %1662 = vmatprep.subr.mxu0 0.0
  %1663 = vmatpush1.msra.mxu0 0.0
  %1664 = vmatprep.subr.mxu0 0.0
  %1665 = vmatpush1.msra.mxu0 0.0
  %1666 = vmatprep.subr.mxu0 0.0
  %1667 = vmatpush1.msra.mxu0 0.0
  %1668 = vmatprep.subr.mxu0 0.0
  %1669 = vmatpush1.msra.mxu0 0.0
  %1670 = vmatprep.subr.mxu0 0.0
  %1671 = vmatpush1.msra.mxu0 0.0
  %1672 = vmatprep.subr.mxu0 0.0
  %1673 = vmatpush1.msra.mxu0 0.0
  %1674 = vmatprep.subr.mxu0 0.0
  %1675 = vmatpush1.msra.mxu0 0.0
  %1676 = vmatprep.subr.mxu0 0.0
  %1677 = vmatpush1.msra.mxu0 0.0
  %1678 = vmatprep.subr.mxu0 0.0
  %1679 = vmatpush1.msra.mxu0 0.0
  %1680 = vmatprep.mubr.f32.mxu0 0.0
  %1681 = vmatmul.mubr.f32.gmra.mrb[0].mxu0 %v1575
  %v1682 = vpop.f32.mrb[0].mxu0
  %v1683 = vadd.f32 0.0, %v1682
  %v1684 = vpop.f32.mrb[0].mxu0
  %1685 = vmatprep.mubr.f32.mxu0 0.0
  %1686 = vmatmul.mubr.f32.gmra.mrb[0].mxu0 %v1578
  %v1687 = vpop.f32.mrb[0].mxu0
  %v1688 = vadd.f32 0.0, %v1687
  %v1689 = vpop.f32.mrb[0].mxu0
  %1690 = vmatprep.mubr.f32.mxu0 0.0
  %1691 = vmatmul.mubr.f32.gmra.mrb[0].mxu0 %v1581
  %v1692 = vpop.f32.mrb[0].mxu0
  %v1693 = vadd.f32 0.0, %v1692
  %v1694 = vpop.f32.mrb[0].mxu0
  %1695 = vmatprep.mubr.f32.mxu0 0.0
  %1696 = vmatmul.mubr.f32.gmra.mrb[0].mxu0 %v1584
  %v1697 = vpop.f32.mrb[0].mxu0
  %v1698 = vadd.f32 0.0, %v1697
  %v1699 = vpop.f32.mrb[0].mxu0
  %1700 = vmatprep.mubr.f32.mxu0 0.0
  %1701 = vmatmul.mubr.f32.gmra.mrb[0].mxu0 %v1587
  %v1702 = vpop.f32.mrb[0].mxu0
  %v1703 = vadd.f32 0.0, %v1702
  %v1704 = vpop.f32.mrb[0].mxu0
  %1705 = vmatprep.mubr.f32.mxu0 0.0
  %1706 = vmatmul.mubr.f32.gmra.mrb[0].mxu0 %v1590
  %v1707 = vpop.f32.mrb[0].mxu0
  %v1708 = vadd.f32 0.0, %v1707
  %v1709 = vpop.f32.mrb[0].mxu0
  %1710 = vmatprep.mubr.f32.mxu0 0.0
  %1711 = vmatmul.mubr.f32.gmra.mrb[0].mxu0 %v1593
  %v1712 = vpop.f32.mrb[0].mxu0
  %v1713 = vadd.f32 0.0, %v1712
  %v1714 = vpop.f32.mrb[0].mxu0
  %1715 = vmatprep.mubr.f32.mxu0 0.0
  %1716 = vmatmul.mubr.f32.gmra.mrb[0].mxu0 %v1596
  %v1717 = vpop.f32.mrb[0].mxu0
  %v1718 = vadd.f32 0.0, %v1717
  %v1719 = vpop.f32.mrb[0].mxu0
  %1720 = vmatprep.mubr.f32.mxu0 0.0
  %1721 = vmatmul.mubr.f32.gmra.mrb[0].mxu0 %v1599
  %v1722 = vpop.f32.mrb[0].mxu0
  %v1723 = vadd.f32 0.0, %v1722
  %v1724 = vpop.f32.mrb[0].mxu0
  %1725 = vmatprep.mubr.f32.mxu0 0.0
  %1726 = vmatmul.mubr.f32.gmra.mrb[0].mxu0 %v1602
  %v1727 = vpop.f32.mrb[0].mxu0
  %v1728 = vadd.f32 0.0, %v1727
  %v1729 = vpop.f32.mrb[0].mxu0
  %1730 = vmatprep.mubr.f32.mxu0 0.0
  %1731 = vmatmul.mubr.f32.gmra.mrb[0].mxu0 %v1605
  %v1732 = vpop.f32.mrb[0].mxu0
  %v1733 = vadd.f32 0.0, %v1732
  %v1734 = vpop.f32.mrb[0].mxu0
  %1735 = vmatprep.mubr.f32.mxu0 0.0
  %1736 = vmatmul.mubr.f32.gmra.mrb[0].mxu0 %v1608
  %v1737 = vpop.f32.mrb[0].mxu0
  %v1738 = vadd.f32 0.0, %v1737
  %v1739 = vpop.f32.mrb[0].mxu0
  %1740 = vmatprep.mubr.f32.mxu0 0.0
  %1741 = vmatmul.mubr.f32.gmra.mrb[0].mxu0 %v1611
  %v1742 = vpop.f32.mrb[0].mxu0
  %v1743 = vadd.f32 0.0, %v1742
  %v1744 = vpop.f32.mrb[0].mxu0
  %1745 = vmatprep.mubr.f32.mxu0 0.0
  %1746 = vmatmul.mubr.f32.gmra.mrb[0].mxu0 %v1614
  %v1747 = vpop.f32.mrb[0].mxu0
  %v1748 = vadd.f32 0.0, %v1747
  %v1749 = vpop.f32.mrb[0].mxu0
  %1750 = vdwg.mxu0
  %v1751 = vld [vmem:[%s1306] sm:$0xff]
  %v1752 = vld [vmem:[%s1306 + $0x10] sm:$0xff]
  %v1753 = vld [vmem:[%s1306 + $0x20] sm:$0xff]
  %v1754 = vld [vmem:[%s1306 + $0x30] sm:$0xff]
  %v1755 = vld [vmem:[%s1306 + $0x40] sm:$0xff]
  %v1756 = vld [vmem:[%s1306 + $0x50] sm:$0xff]
  %v1757 = vld [vmem:[%s1306 + $0x60] sm:$0xff]
  %v1758 = vld [vmem:[%s1306 + $0x90] sm:$0xff]
  %v1759 = vld [vmem:[%s1306 + $0xa0] sm:$0xff]
  %v1760 = vld [vmem:[%s1306 + $0xb0] sm:$0xff]
  %v1761 = vld [vmem:[%s1306 + $0xc0] sm:$0xff]
  %v1762 = vld [vmem:[%s1306 + $0xd0] sm:$0xff]
  %v1763 = vld [vmem:[%s1306 + $0xe0] sm:$0xff]
  %v1764 = vld [vmem:[%s1306 + $0xf0] sm:$0xff]
  %s1765 = scalar_lea.vmem %s4, 192
  %v1766 = vld [vmem:[%s1765] sm:$0xff]
  %v1767 = vld [vmem:[%s1765 + $0x8] sm:$0xff]
  %v1768 = vld [vmem:[%s1765 + $0x10] sm:$0xff]
  %v1769 = vld [vmem:[%s1765 + $0x18] sm:$0xff]
  %v1770 = vld [vmem:[%s1765 + $0x20] sm:$0xff]
  %v1771 = vld [vmem:[%s1765 + $0x28] sm:$0xff]
  %v1772 = vld [vmem:[%s1765 + $0x30] sm:$0xff]
  %v1773 = vld [vmem:[%s1765 + $0x38] sm:$0xff]
  %v1774 = vld [vmem:[%s1306 + $0x1] sm:$0xff]
  %v1775 = vld [vmem:[%s1306 + $0x11] sm:$0xff]
  %v1776 = vld [vmem:[%s1306 + $0x21] sm:$0xff]
  %v1777 = vld [vmem:[%s1306 + $0x31] sm:$0xff]
  %v1778 = vld [vmem:[%s1306 + $0x41] sm:$0xff]
  %v1779 = vld [vmem:[%s1306 + $0x51] sm:$0xff]
  %v1780 = vld [vmem:[%s1306 + $0x61] sm:$0xff]
  %v1781 = vld [vmem:[%s1306 + $0x91] sm:$0xff]
  %v1782 = vld [vmem:[%s1306 + $0xa1] sm:$0xff]
  %v1783 = vld [vmem:[%s1306 + $0xb1] sm:$0xff]
  %v1784 = vld [vmem:[%s1306 + $0xc1] sm:$0xff]
  %v1785 = vld [vmem:[%s1306 + $0xd1] sm:$0xff]
  %v1786 = vld [vmem:[%s1306 + $0xe1] sm:$0xff]
  %v1787 = vld [vmem:[%s1306 + $0xf1] sm:$0xff]
  %s1788 = scalar_lea.vmem %s4, 256
  %v1789 = vld [vmem:[%s1788] sm:$0xff]
  %v1790 = vld [vmem:[%s1788 + $0x8] sm:$0xff]
  %v1791 = vld [vmem:[%s1788 + $0x10] sm:$0xff]
  %v1792 = vld [vmem:[%s1788 + $0x18] sm:$0xff]
  %v1793 = vld [vmem:[%s1788 + $0x20] sm:$0xff]
  %v1794 = vld [vmem:[%s1788 + $0x28] sm:$0xff]
  %v1795 = vld [vmem:[%s1788 + $0x30] sm:$0xff]
  %v1796 = vld [vmem:[%s1788 + $0x38] sm:$0xff]
  %v1798 = vsel %vm804, %v1774, 0
  %v1801 = vsel %vm804, %v1775, 0
  %v1804 = vsel %vm804, %v1776, 0
  %v1807 = vsel %vm804, %v1777, 0
  %v1810 = vsel %vm804, %v1778, 0
  %v1813 = vsel %vm804, %v1779, 0
  %v1816 = vsel %vm804, %v1780, 0
  %v1819 = vsel %vm804, %v1781, 0
  %v1822 = vsel %vm804, %v1782, 0
  %v1825 = vsel %vm804, %v1783, 0
  %v1828 = vsel %vm804, %v1784, 0
  %v1831 = vsel %vm804, %v1785, 0
  %v1834 = vsel %vm804, %v1786, 0
  %v1837 = vsel %vm804, %v1787, 0
  %1839 = vmatprep.subr.mxu0 0.0
  %1840 = vmatpush1.msra.mxu0 %v1789
  %1841 = vmatprep.subr.mxu0 0.0
  %1842 = vmatpush1.msra.mxu0 %v1790
  %1843 = vmatprep.subr.mxu0 0.0
  %1844 = vmatpush1.msra.mxu0 %v1791
  %1845 = vmatprep.subr.mxu0 0.0
  %1846 = vmatpush1.msra.mxu0 %v1792
  %1847 = vmatprep.subr.mxu0 0.0
  %1848 = vmatpush1.msra.mxu0 %v1793
  %1849 = vmatprep.subr.mxu0 0.0
  %1850 = vmatpush1.msra.mxu0 %v1794
  %1851 = vmatprep.subr.mxu0 0.0
  %1852 = vmatpush1.msra.mxu0 %v1795
  %1853 = vmatprep.subr.mxu0 0.0
  %1854 = vmatpush1.msra.mxu0 %v1796
  %1855 = vmatprep.subr.mxu0 0.0
  %1856 = vmatpush1.msra.mxu0 0.0
  %1857 = vmatprep.subr.mxu0 0.0
  %1858 = vmatpush1.msra.mxu0 0.0
  %1859 = vmatprep.subr.mxu0 0.0
  %1860 = vmatpush1.msra.mxu0 0.0
  %1861 = vmatprep.subr.mxu0 0.0
  %1862 = vmatpush1.msra.mxu0 0.0
  %1863 = vmatprep.subr.mxu0 0.0
  %1864 = vmatpush1.msra.mxu0 0.0
  %1865 = vmatprep.subr.mxu0 0.0
  %1866 = vmatpush1.msra.mxu0 0.0
  %1867 = vmatprep.subr.mxu0 0.0
  %1868 = vmatpush1.msra.mxu0 0.0
  %1869 = vmatprep.subr.mxu0 0.0
  %1870 = vmatpush1.msra.mxu0 0.0
  %1871 = vmatprep.subr.mxu0 0.0
  %1872 = vmatpush1.msra.mxu0 0.0
  %1873 = vmatprep.subr.mxu0 0.0
  %1874 = vmatpush1.msra.mxu0 0.0
  %1875 = vmatprep.subr.mxu0 0.0
  %1876 = vmatpush1.msra.mxu0 0.0
  %1877 = vmatprep.subr.mxu0 0.0
  %1878 = vmatpush1.msra.mxu0 0.0
  %1879 = vmatprep.subr.mxu0 0.0
  %1880 = vmatpush1.msra.mxu0 0.0
  %1881 = vmatprep.subr.mxu0 0.0
  %1882 = vmatpush1.msra.mxu0 0.0
  %1883 = vmatprep.subr.mxu0 0.0
  %1884 = vmatpush1.msra.mxu0 0.0
  %1885 = vmatprep.subr.mxu0 0.0
  %1886 = vmatpush1.msra.mxu0 0.0
  %1887 = vmatprep.subr.mxu0 0.0
  %1888 = vmatpush1.msra.mxu0 0.0
  %1889 = vmatprep.subr.mxu0 0.0
  %1890 = vmatpush1.msra.mxu0 0.0
  %1891 = vmatprep.subr.mxu0 0.0
  %1892 = vmatpush1.msra.mxu0 0.0
  %1893 = vmatprep.subr.mxu0 0.0
  %1894 = vmatpush1.msra.mxu0 0.0
  %1895 = vmatprep.subr.mxu0 0.0
  %1896 = vmatpush1.msra.mxu0 0.0
  %1897 = vmatprep.subr.mxu0 0.0
  %1898 = vmatpush1.msra.mxu0 0.0
  %1899 = vmatprep.subr.mxu0 0.0
  %1900 = vmatpush1.msra.mxu0 0.0
  %1901 = vmatprep.subr.mxu0 0.0
  %1902 = vmatpush1.msra.mxu0 0.0
  %1903 = vmatprep.mubr.f32.mxu0 0.0
  %1904 = vmatmul.mubr.f32.gmra.mrb[0].mxu0 %v1798
  %v1905 = vpop.f32.mrb[0].mxu0
  %v1906 = vadd.f32 0.0, %v1905
  %v1907 = vpop.f32.mrb[0].mxu0
  %1908 = vmatprep.mubr.f32.mxu0 0.0
  %1909 = vmatmul.mubr.f32.gmra.mrb[0].mxu0 %v1801
  %v1910 = vpop.f32.mrb[0].mxu0
  %v1911 = vadd.f32 0.0, %v1910
  %v1912 = vpop.f32.mrb[0].mxu0
  %1913 = vmatprep.mubr.f32.mxu0 0.0
  %1914 = vmatmul.mubr.f32.gmra.mrb[0].mxu0 %v1804
  %v1915 = vpop.f32.mrb[0].mxu0
  %v1916 = vadd.f32 0.0, %v1915
  %v1917 = vpop.f32.mrb[0].mxu0
  %1918 = vmatprep.mubr.f32.mxu0 0.0
  %1919 = vmatmul.mubr.f32.gmra.mrb[0].mxu0 %v1807
  %v1920 = vpop.f32.mrb[0].mxu0
  %v1921 = vadd.f32 0.0, %v1920
  %v1922 = vpop.f32.mrb[0].mxu0
  %1923 = vmatprep.mubr.f32.mxu0 0.0
  %1924 = vmatmul.mubr.f32.gmra.mrb[0].mxu0 %v1810
  %v1925 = vpop.f32.mrb[0].mxu0
  %v1926 = vadd.f32 0.0, %v1925
  %v1927 = vpop.f32.mrb[0].mxu0
  %1928 = vmatprep.mubr.f32.mxu0 0.0
  %1929 = vmatmul.mubr.f32.gmra.mrb[0].mxu0 %v1813
  %v1930 = vpop.f32.mrb[0].mxu0
  %v1931 = vadd.f32 0.0, %v1930
  %v1932 = vpop.f32.mrb[0].mxu0
  %1933 = vmatprep.mubr.f32.mxu0 0.0
  %1934 = vmatmul.mubr.f32.gmra.mrb[0].mxu0 %v1816
  %v1935 = vpop.f32.mrb[0].mxu0
  %v1936 = vadd.f32 0.0, %v1935
  %v1937 = vpop.f32.mrb[0].mxu0
  %1938 = vmatprep.mubr.f32.mxu0 0.0
  %1939 = vmatmul.mubr.f32.gmra.mrb[0].mxu0 %v1819
  %v1940 = vpop.f32.mrb[0].mxu0
  %v1941 = vadd.f32 0.0, %v1940
  %v1942 = vpop.f32.mrb[0].mxu0
  %1943 = vmatprep.mubr.f32.mxu0 0.0
  %1944 = vmatmul.mubr.f32.gmra.mrb[0].mxu0 %v1822
  %v1945 = vpop.f32.mrb[0].mxu0
  %v1946 = vadd.f32 0.0, %v1945
  %v1947 = vpop.f32.mrb[0].mxu0
  %1948 = vmatprep.mubr.f32.mxu0 0.0
  %1949 = vmatmul.mubr.f32.gmra.mrb[0].mxu0 %v1825
  %v1950 = vpop.f32.mrb[0].mxu0
  %v1951 = vadd.f32 0.0, %v1950
  %v1952 = vpop.f32.mrb[0].mxu0
  %1953 = vmatprep.mubr.f32.mxu0 0.0
  %1954 = vmatmul.mubr.f32.gmra.mrb[0].mxu0 %v1828
  %v1955 = vpop.f32.mrb[0].mxu0
  %v1956 = vadd.f32 0.0, %v1955
  %v1957 = vpop.f32.mrb[0].mxu0
  %1958 = vmatprep.mubr.f32.mxu0 0.0
  %1959 = vmatmul.mubr.f32.gmra.mrb[0].mxu0 %v1831
  %v1960 = vpop.f32.mrb[0].mxu0
  %v1961 = vadd.f32 0.0, %v1960
  %v1962 = vpop.f32.mrb[0].mxu0
  %1963 = vmatprep.mubr.f32.mxu0 0.0
  %1964 = vmatmul.mubr.f32.gmra.mrb[0].mxu0 %v1834
  %v1965 = vpop.f32.mrb[0].mxu0
  %v1966 = vadd.f32 0.0, %v1965
  %v1967 = vpop.f32.mrb[0].mxu0
  %1968 = vmatprep.mubr.f32.mxu0 0.0
  %1969 = vmatmul.mubr.f32.gmra.mrb[0].mxu0 %v1837
  %v1970 = vpop.f32.mrb[0].mxu0
  %v1971 = vadd.f32 0.0, %v1970
  %v1972 = vpop.f32.mrb[0].mxu0
  %1973 = vdwg.mxu0
  %v1974 = vld [vmem:[%s1306 + $0x2] sm:$0xff]
  %v1975 = vld [vmem:[%s1306 + $0x12] sm:$0xff]
  %v1976 = vld [vmem:[%s1306 + $0x22] sm:$0xff]
  %v1977 = vld [vmem:[%s1306 + $0x32] sm:$0xff]
  %v1978 = vld [vmem:[%s1306 + $0x42] sm:$0xff]
  %v1979 = vld [vmem:[%s1306 + $0x52] sm:$0xff]
  %v1980 = vld [vmem:[%s1306 + $0x62] sm:$0xff]
  %v1981 = vld [vmem:[%s1306 + $0x92] sm:$0xff]
  %v1982 = vld [vmem:[%s1306 + $0xa2] sm:$0xff]
  %v1983 = vld [vmem:[%s1306 + $0xb2] sm:$0xff]
  %v1984 = vld [vmem:[%s1306 + $0xc2] sm:$0xff]
  %v1985 = vld [vmem:[%s1306 + $0xd2] sm:$0xff]
  %v1986 = vld [vmem:[%s1306 + $0xe2] sm:$0xff]
  %v1987 = vld [vmem:[%s1306 + $0xf2] sm:$0xff]
  %s1988 = scalar_lea.vmem %s4, 320
  %v1989 = vld [vmem:[%s1988] sm:$0xff]
  %v1990 = vld [vmem:[%s1988 + $0x8] sm:$0xff]
  %v1991 = vld [vmem:[%s1988 + $0x10] sm:$0xff]
  %v1992 = vld [vmem:[%s1988 + $0x18] sm:$0xff]
  %v1993 = vld [vmem:[%s1988 + $0x20] sm:$0xff]
  %v1994 = vld [vmem:[%s1988 + $0x28] sm:$0xff]
  %v1995 = vld [vmem:[%s1988 + $0x30] sm:$0xff]
  %v1996 = vld [vmem:[%s1988 + $0x38] sm:$0xff]
  %s1997 = scalar_lea.vmem [#allocation3], 32
  %v1998 = vld [vmem:[%s1997] sm:$0xff]
  %v1999 = vld [vmem:[%s1997 + $0x10] sm:$0xff]
  %v2000 = vld [vmem:[%s1997 + $0x20] sm:$0xff]
  %v2001 = vld [vmem:[%s1997 + $0x30] sm:$0xff]
  %v2002 = vld [vmem:[%s1997 + $0x40] sm:$0xff]
  %v2003 = vld [vmem:[%s1997 + $0x50] sm:$0xff]
  %v2004 = vld [vmem:[%s1997 + $0x60] sm:$0xff]
  %v2005 = vld [vmem:[%s1997 + $0x90] sm:$0xff]
  %v2006 = vld [vmem:[%s1997 + $0xa0] sm:$0xff]
  %v2007 = vld [vmem:[%s1997 + $0xb0] sm:$0xff]
  %v2008 = vld [vmem:[%s1997 + $0xc0] sm:$0xff]
  %v2009 = vld [vmem:[%s1997 + $0xd0] sm:$0xff]
  %v2010 = vld [vmem:[%s1997 + $0xe0] sm:$0xff]
  %v2011 = vld [vmem:[%s1997 + $0xf0] sm:$0xff]
  %s2012 = scalar_lea.vmem %s4, 384
  %v2013 = vld [vmem:[%s2012] sm:$0xff]
  %v2014 = vld [vmem:[%s2012 + $0x8] sm:$0xff]
  %v2015 = vld [vmem:[%s2012 + $0x10] sm:$0xff]
  %v2016 = vld [vmem:[%s2012 + $0x18] sm:$0xff]
  %v2017 = vld [vmem:[%s2012 + $0x20] sm:$0xff]
  %v2018 = vld [vmem:[%s2012 + $0x28] sm:$0xff]
  %v2019 = vld [vmem:[%s2012 + $0x30] sm:$0xff]
  %v2020 = vld [vmem:[%s2012 + $0x38] sm:$0xff]
  %v2022 = vsel %vm804, %v1998, 0
  %v2025 = vsel %vm804, %v1999, 0
  %v2028 = vsel %vm804, %v2000, 0
  %v2031 = vsel %vm804, %v2001, 0
  %v2034 = vsel %vm804, %v2002, 0
  %v2037 = vsel %vm804, %v2003, 0
  %v2040 = vsel %vm804, %v2004, 0
  %v2043 = vsel %vm804, %v2005, 0
  %v2046 = vsel %vm804, %v2006, 0
  %v2049 = vsel %vm804, %v2007, 0
  %v2052 = vsel %vm804, %v2008, 0
  %v2055 = vsel %vm804, %v2009, 0
  %v2058 = vsel %vm804, %v2010, 0
  %v2061 = vsel %vm804, %v2011, 0
  %2063 = vmatprep.subr.mxu0 0.0
  %2064 = vmatpush1.msra.mxu0 %v2013
  %2065 = vmatprep.subr.mxu0 0.0
  %2066 = vmatpush1.msra.mxu0 %v2014
  %2067 = vmatprep.subr.mxu0 0.0
  %2068 = vmatpush1.msra.mxu0 %v2015
  %2069 = vmatprep.subr.mxu0 0.0
  %2070 = vmatpush1.msra.mxu0 %v2016
  %2071 = vmatprep.subr.mxu0 0.0
  %2072 = vmatpush1.msra.mxu0 %v2017
  %2073 = vmatprep.subr.mxu0 0.0
  %2074 = vmatpush1.msra.mxu0 %v2018
  %2075 = vmatprep.subr.mxu0 0.0
  %2076 = vmatpush1.msra.mxu0 %v2019
  %2077 = vmatprep.subr.mxu0 0.0
  %2078 = vmatpush1.msra.mxu0 %v2020
  %2079 = vmatprep.subr.mxu0 0.0
  %2080 = vmatpush1.msra.mxu0 0.0
  %2081 = vmatprep.subr.mxu0 0.0
  %2082 = vmatpush1.msra.mxu0 0.0
  %2083 = vmatprep.subr.mxu0 0.0
  %2084 = vmatpush1.msra.mxu0 0.0
  %2085 = vmatprep.subr.mxu0 0.0
  %2086 = vmatpush1.msra.mxu0 0.0
  %2087 = vmatprep.subr.mxu0 0.0
  %2088 = vmatpush1.msra.mxu0 0.0
  %2089 = vmatprep.subr.mxu0 0.0
  %2090 = vmatpush1.msra.mxu0 0.0
  %2091 = vmatprep.subr.mxu0 0.0
  %2092 = vmatpush1.msra.mxu0 0.0
  %2093 = vmatprep.subr.mxu0 0.0
  %2094 = vmatpush1.msra.mxu0 0.0
  %2095 = vmatprep.subr.mxu0 0.0
  %2096 = vmatpush1.msra.mxu0 0.0
  %2097 = vmatprep.subr.mxu0 0.0
  %2098 = vmatpush1.msra.mxu0 0.0
  %2099 = vmatprep.subr.mxu0 0.0
  %2100 = vmatpush1.msra.mxu0 0.0
  %2101 = vmatprep.subr.mxu0 0.0
  %2102 = vmatpush1.msra.mxu0 0.0
  %2103 = vmatprep.subr.mxu0 0.0
  %2104 = vmatpush1.msra.mxu0 0.0
  %2105 = vmatprep.subr.mxu0 0.0
  %2106 = vmatpush1.msra.mxu0 0.0
  %2107 = vmatprep.subr.mxu0 0.0
  %2108 = vmatpush1.msra.mxu0 0.0
  %2109 = vmatprep.subr.mxu0 0.0
  %2110 = vmatpush1.msra.mxu0 0.0
  %2111 = vmatprep.subr.mxu0 0.0
  %2112 = vmatpush1.msra.mxu0 0.0
  %2113 = vmatprep.subr.mxu0 0.0
  %2114 = vmatpush1.msra.mxu0 0.0
  %2115 = vmatprep.subr.mxu0 0.0
  %2116 = vmatpush1.msra.mxu0 0.0
  %2117 = vmatprep.subr.mxu0 0.0
  %2118 = vmatpush1.msra.mxu0 0.0
  %2119 = vmatprep.subr.mxu0 0.0
  %2120 = vmatpush1.msra.mxu0 0.0
  %2121 = vmatprep.subr.mxu0 0.0
  %2122 = vmatpush1.msra.mxu0 0.0
  %2123 = vmatprep.subr.mxu0 0.0
  %2124 = vmatpush1.msra.mxu0 0.0
  %2125 = vmatprep.subr.mxu0 0.0
  %2126 = vmatpush1.msra.mxu0 0.0
  %2127 = vmatprep.mubr.f32.mxu0 0.0
  %2128 = vmatmul.mubr.f32.gmra.mrb[0].mxu0 %v2022
  %v2129 = vpop.f32.mrb[0].mxu0
  %v2130 = vadd.f32 0.0, %v2129
  %v2131 = vpop.f32.mrb[0].mxu0
  %2132 = vmatprep.mubr.f32.mxu0 0.0
  %2133 = vmatmul.mubr.f32.gmra.mrb[0].mxu0 %v2025
  %v2134 = vpop.f32.mrb[0].mxu0
  %v2135 = vadd.f32 0.0, %v2134
  %v2136 = vpop.f32.mrb[0].mxu0
  %2137 = vmatprep.mubr.f32.mxu0 0.0
  %2138 = vmatmul.mubr.f32.gmra.mrb[0].mxu0 %v2028
  %v2139 = vpop.f32.mrb[0].mxu0
  %v2140 = vadd.f32 0.0, %v2139
  %v2141 = vpop.f32.mrb[0].mxu0
  %2142 = vmatprep.mubr.f32.mxu0 0.0
  %2143 = vmatmul.mubr.f32.gmra.mrb[0].mxu0 %v2031
  %v2144 = vpop.f32.mrb[0].mxu0
  %v2145 = vadd.f32 0.0, %v2144
  %v2146 = vpop.f32.mrb[0].mxu0
  %2147 = vmatprep.mubr.f32.mxu0 0.0
  %2148 = vmatmul.mubr.f32.gmra.mrb[0].mxu0 %v2034
  %v2149 = vpop.f32.mrb[0].mxu0
  %v2150 = vadd.f32 0.0, %v2149
  %v2151 = vpop.f32.mrb[0].mxu0
  %2152 = vmatprep.mubr.f32.mxu0 0.0
  %2153 = vmatmul.mubr.f32.gmra.mrb[0].mxu0 %v2037
  %v2154 = vpop.f32.mrb[0].mxu0
  %v2155 = vadd.f32 0.0, %v2154
  %v2156 = vpop.f32.mrb[0].mxu0
  %2157 = vmatprep.mubr.f32.mxu0 0.0
  %2158 = vmatmul.mubr.f32.gmra.mrb[0].mxu0 %v2040
  %v2159 = vpop.f32.mrb[0].mxu0
  %v2160 = vadd.f32 0.0, %v2159
  %v2161 = vpop.f32.mrb[0].mxu0
  %2162 = vmatprep.mubr.f32.mxu0 0.0
  %2163 = vmatmul.mubr.f32.gmra.mrb[0].mxu0 %v2043
  %v2164 = vpop.f32.mrb[0].mxu0
  %v2165 = vadd.f32 0.0, %v2164
  %v2166 = vpop.f32.mrb[0].mxu0
  %2167 = vmatprep.mubr.f32.mxu0 0.0
  %2168 = vmatmul.mubr.f32.gmra.mrb[0].mxu0 %v2046
  %v2169 = vpop.f32.mrb[0].mxu0
  %v2170 = vadd.f32 0.0, %v2169
  %v2171 = vpop.f32.mrb[0].mxu0
  %2172 = vmatprep.mubr.f32.mxu0 0.0
  %2173 = vmatmul.mubr.f32.gmra.mrb[0].mxu0 %v2049
  %v2174 = vpop.f32.mrb[0].mxu0
  %v2175 = vadd.f32 0.0, %v2174
  %v2176 = vpop.f32.mrb[0].mxu0
  %2177 = vmatprep.mubr.f32.mxu0 0.0
  %2178 = vmatmul.mubr.f32.gmra.mrb[0].mxu0 %v2052
  %v2179 = vpop.f32.mrb[0].mxu0
  %v2180 = vadd.f32 0.0, %v2179
  %v2181 = vpop.f32.mrb[0].mxu0
  %2182 = vmatprep.mubr.f32.mxu0 0.0
  %2183 = vmatmul.mubr.f32.gmra.mrb[0].mxu0 %v2055
  %v2184 = vpop.f32.mrb[0].mxu0
  %v2185 = vadd.f32 0.0, %v2184
  %v2186 = vpop.f32.mrb[0].mxu0
  %2187 = vmatprep.mubr.f32.mxu0 0.0
  %2188 = vmatmul.mubr.f32.gmra.mrb[0].mxu0 %v2058
  %v2189 = vpop.f32.mrb[0].mxu0
  %v2190 = vadd.f32 0.0, %v2189
  %v2191 = vpop.f32.mrb[0].mxu0
  %2192 = vmatprep.mubr.f32.mxu0 0.0
  %2193 = vmatmul.mubr.f32.gmra.mrb[0].mxu0 %v2061
  %v2194 = vpop.f32.mrb[0].mxu0
  %v2195 = vadd.f32 0.0, %v2194
  %v2196 = vpop.f32.mrb[0].mxu0
  %2197 = vdwg.mxu0
  %v2198 = vld [vmem:[%s1997 + $0x1] sm:$0xff]
  %v2199 = vld [vmem:[%s1997 + $0x11] sm:$0xff]
  %v2200 = vld [vmem:[%s1997 + $0x21] sm:$0xff]
  %v2201 = vld [vmem:[%s1997 + $0x31] sm:$0xff]
  %v2202 = vld [vmem:[%s1997 + $0x41] sm:$0xff]
  %v2203 = vld [vmem:[%s1997 + $0x51] sm:$0xff]
  %v2204 = vld [vmem:[%s1997 + $0x61] sm:$0xff]
  %v2205 = vld [vmem:[%s1997 + $0x91] sm:$0xff]
  %v2206 = vld [vmem:[%s1997 + $0xa1] sm:$0xff]
  %v2207 = vld [vmem:[%s1997 + $0xb1] sm:$0xff]
  %v2208 = vld [vmem:[%s1997 + $0xc1] sm:$0xff]
  %v2209 = vld [vmem:[%s1997 + $0xd1] sm:$0xff]
  %v2210 = vld [vmem:[%s1997 + $0xe1] sm:$0xff]
  %v2211 = vld [vmem:[%s1997 + $0xf1] sm:$0xff]
  %s2212 = scalar_lea.vmem %s4, 448
  %v2213 = vld [vmem:[%s2212] sm:$0xff]
  %v2214 = vld [vmem:[%s2212 + $0x8] sm:$0xff]
  %v2215 = vld [vmem:[%s2212 + $0x10] sm:$0xff]
  %v2216 = vld [vmem:[%s2212 + $0x18] sm:$0xff]
  %v2217 = vld [vmem:[%s2212 + $0x20] sm:$0xff]
  %v2218 = vld [vmem:[%s2212 + $0x28] sm:$0xff]
  %v2219 = vld [vmem:[%s2212 + $0x30] sm:$0xff]
  %v2220 = vld [vmem:[%s2212 + $0x38] sm:$0xff]
  %v2221 = vld [vmem:[%s1997 + $0x2] sm:$0xff]
  %v2222 = vld [vmem:[%s1997 + $0x12] sm:$0xff]
  %v2223 = vld [vmem:[%s1997 + $0x22] sm:$0xff]
  %v2224 = vld [vmem:[%s1997 + $0x32] sm:$0xff]
  %v2225 = vld [vmem:[%s1997 + $0x42] sm:$0xff]
  %v2226 = vld [vmem:[%s1997 + $0x52] sm:$0xff]
  %v2227 = vld [vmem:[%s1997 + $0x62] sm:$0xff]
  %v2228 = vld [vmem:[%s1997 + $0x92] sm:$0xff]
  %v2229 = vld [vmem:[%s1997 + $0xa2] sm:$0xff]
  %v2230 = vld [vmem:[%s1997 + $0xb2] sm:$0xff]
  %v2231 = vld [vmem:[%s1997 + $0xc2] sm:$0xff]
  %v2232 = vld [vmem:[%s1997 + $0xd2] sm:$0xff]
  %v2233 = vld [vmem:[%s1997 + $0xe2] sm:$0xff]
  %v2234 = vld [vmem:[%s1997 + $0xf2] sm:$0xff]
  %s2235 = scalar_lea.vmem %s4, 512
  %v2236 = vld [vmem:[%s2235] sm:$0xff]
  %v2237 = vld [vmem:[%s2235 + $0x8] sm:$0xff]
  %v2238 = vld [vmem:[%s2235 + $0x10] sm:$0xff]
  %v2239 = vld [vmem:[%s2235 + $0x18] sm:$0xff]
  %v2240 = vld [vmem:[%s2235 + $0x20] sm:$0xff]
  %v2241 = vld [vmem:[%s2235 + $0x28] sm:$0xff]
  %v2242 = vld [vmem:[%s2235 + $0x30] sm:$0xff]
  %v2243 = vld [vmem:[%s2235 + $0x38] sm:$0xff]
  %v2245 = vsel %vm804, %v2221, 0
  %v2248 = vsel %vm804, %v2222, 0
  %v2251 = vsel %vm804, %v2223, 0
  %v2254 = vsel %vm804, %v2224, 0
  %v2257 = vsel %vm804, %v2225, 0
  %v2260 = vsel %vm804, %v2226, 0
  %v2263 = vsel %vm804, %v2227, 0
  %v2266 = vsel %vm804, %v2228, 0
  %v2269 = vsel %vm804, %v2229, 0
  %v2272 = vsel %vm804, %v2230, 0
  %v2275 = vsel %vm804, %v2231, 0
  %v2278 = vsel %vm804, %v2232, 0
  %v2281 = vsel %vm804, %v2233, 0
  %v2284 = vsel %vm804, %v2234, 0
  %2286 = vmatprep.subr.mxu0 0.0
  %2287 = vmatpush1.msra.mxu0 %v2236
  %2288 = vmatprep.subr.mxu0 0.0
  %2289 = vmatpush1.msra.mxu0 %v2237
  %2290 = vmatprep.subr.mxu0 0.0
  %2291 = vmatpush1.msra.mxu0 %v2238
  %2292 = vmatprep.subr.mxu0 0.0
  %2293 = vmatpush1.msra.mxu0 %v2239
  %2294 = vmatprep.subr.mxu0 0.0
  %2295 = vmatpush1.msra.mxu0 %v2240
  %2296 = vmatprep.subr.mxu0 0.0
  %2297 = vmatpush1.msra.mxu0 %v2241
  %2298 = vmatprep.subr.mxu0 0.0
  %2299 = vmatpush1.msra.mxu0 %v2242
  %2300 = vmatprep.subr.mxu0 0.0
  %2301 = vmatpush1.msra.mxu0 %v2243
  %2302 = vmatprep.subr.mxu0 0.0
  %2303 = vmatpush1.msra.mxu0 0.0
  %2304 = vmatprep.subr.mxu0 0.0
  %2305 = vmatpush1.msra.mxu0 0.0
  %2306 = vmatprep.subr.mxu0 0.0
  %2307 = vmatpush1.msra.mxu0 0.0
  %2308 = vmatprep.subr.mxu0 0.0
  %2309 = vmatpush1.msra.mxu0 0.0
  %2310 = vmatprep.subr.mxu0 0.0
  %2311 = vmatpush1.msra.mxu0 0.0
  %2312 = vmatprep.subr.mxu0 0.0
  %2313 = vmatpush1.msra.mxu0 0.0
  %2314 = vmatprep.subr.mxu0 0.0
  %2315 = vmatpush1.msra.mxu0 0.0
  %2316 = vmatprep.subr.mxu0 0.0
  %2317 = vmatpush1.msra.mxu0 0.0
  %2318 = vmatprep.subr.mxu0 0.0
  %2319 = vmatpush1.msra.mxu0 0.0
  %2320 = vmatprep.subr.mxu0 0.0
  %2321 = vmatpush1.msra.mxu0 0.0
  %2322 = vmatprep.subr.mxu0 0.0
  %2323 = vmatpush1.msra.mxu0 0.0
  %2324 = vmatprep.subr.mxu0 0.0
  %2325 = vmatpush1.msra.mxu0 0.0
  %2326 = vmatprep.subr.mxu0 0.0
  %2327 = vmatpush1.msra.mxu0 0.0
  %2328 = vmatprep.subr.mxu0 0.0
  %2329 = vmatpush1.msra.mxu0 0.0
  %2330 = vmatprep.subr.mxu0 0.0
  %2331 = vmatpush1.msra.mxu0 0.0
  %2332 = vmatprep.subr.mxu0 0.0
  %2333 = vmatpush1.msra.mxu0 0.0
  %2334 = vmatprep.subr.mxu0 0.0
  %2335 = vmatpush1.msra.mxu0 0.0
  %2336 = vmatprep.subr.mxu0 0.0
  %2337 = vmatpush1.msra.mxu0 0.0
  %2338 = vmatprep.subr.mxu0 0.0
  %2339 = vmatpush1.msra.mxu0 0.0
  %2340 = vmatprep.subr.mxu0 0.0
  %2341 = vmatpush1.msra.mxu0 0.0
  %2342 = vmatprep.subr.mxu0 0.0
  %2343 = vmatpush1.msra.mxu0 0.0
  %2344 = vmatprep.subr.mxu0 0.0
  %2345 = vmatpush1.msra.mxu0 0.0
  %2346 = vmatprep.subr.mxu0 0.0
  %2347 = vmatpush1.msra.mxu0 0.0
  %2348 = vmatprep.subr.mxu0 0.0
  %2349 = vmatpush1.msra.mxu0 0.0
  %2350 = vmatprep.mubr.f32.mxu0 0.0
  %2351 = vmatmul.mubr.f32.gmra.mrb[0].mxu0 %v2245
  %v2352 = vpop.f32.mrb[0].mxu0
  %v2353 = vadd.f32 0.0, %v2352
  %v2354 = vpop.f32.mrb[0].mxu0
  %2355 = vmatprep.mubr.f32.mxu0 0.0
  %2356 = vmatmul.mubr.f32.gmra.mrb[0].mxu0 %v2248
  %v2357 = vpop.f32.mrb[0].mxu0
  %v2358 = vadd.f32 0.0, %v2357
  %v2359 = vpop.f32.mrb[0].mxu0
  %2360 = vmatprep.mubr.f32.mxu0 0.0
  %2361 = vmatmul.mubr.f32.gmra.mrb[0].mxu0 %v2251
  %v2362 = vpop.f32.mrb[0].mxu0
  %v2363 = vadd.f32 0.0, %v2362
  %v2364 = vpop.f32.mrb[0].mxu0
  %2365 = vmatprep.mubr.f32.mxu0 0.0
  %2366 = vmatmul.mubr.f32.gmra.mrb[0].mxu0 %v2254
  %v2367 = vpop.f32.mrb[0].mxu0
  %v2368 = vadd.f32 0.0, %v2367
  %v2369 = vpop.f32.mrb[0].mxu0
  %2370 = vmatprep.mubr.f32.mxu0 0.0
  %2371 = vmatmul.mubr.f32.gmra.mrb[0].mxu0 %v2257
  %v2372 = vpop.f32.mrb[0].mxu0
  %v2373 = vadd.f32 0.0, %v2372
  %v2374 = vpop.f32.mrb[0].mxu0
  %2375 = vmatprep.mubr.f32.mxu0 0.0
  %2376 = vmatmul.mubr.f32.gmra.mrb[0].mxu0 %v2260
  %v2377 = vpop.f32.mrb[0].mxu0
  %v2378 = vadd.f32 0.0, %v2377
  %v2379 = vpop.f32.mrb[0].mxu0
  %2380 = vmatprep.mubr.f32.mxu0 0.0
  %2381 = vmatmul.mubr.f32.gmra.mrb[0].mxu0 %v2263
  %v2382 = vpop.f32.mrb[0].mxu0
  %v2383 = vadd.f32 0.0, %v2382
  %v2384 = vpop.f32.mrb[0].mxu0
  %2385 = vmatprep.mubr.f32.mxu0 0.0
  %2386 = vmatmul.mubr.f32.gmra.mrb[0].mxu0 %v2266
  %v2387 = vpop.f32.mrb[0].mxu0
  %v2388 = vadd.f32 0.0, %v2387
  %v2389 = vpop.f32.mrb[0].mxu0
  %2390 = vmatprep.mubr.f32.mxu0 0.0
  %2391 = vmatmul.mubr.f32.gmra.mrb[0].mxu0 %v2269
  %v2392 = vpop.f32.mrb[0].mxu0
  %v2393 = vadd.f32 0.0, %v2392
  %v2394 = vpop.f32.mrb[0].mxu0
  %2395 = vmatprep.mubr.f32.mxu0 0.0
  %2396 = vmatmul.mubr.f32.gmra.mrb[0].mxu0 %v2272
  %v2397 = vpop.f32.mrb[0].mxu0
  %v2398 = vadd.f32 0.0, %v2397
  %v2399 = vpop.f32.mrb[0].mxu0
  %2400 = vmatprep.mubr.f32.mxu0 0.0
  %2401 = vmatmul.mubr.f32.gmra.mrb[0].mxu0 %v2275
  %v2402 = vpop.f32.mrb[0].mxu0
  %v2403 = vadd.f32 0.0, %v2402
  %v2404 = vpop.f32.mrb[0].mxu0
  %2405 = vmatprep.mubr.f32.mxu0 0.0
  %2406 = vmatmul.mubr.f32.gmra.mrb[0].mxu0 %v2278
  %v2407 = vpop.f32.mrb[0].mxu0
  %v2408 = vadd.f32 0.0, %v2407
  %v2409 = vpop.f32.mrb[0].mxu0
  %2410 = vmatprep.mubr.f32.mxu0 0.0
  %2411 = vmatmul.mubr.f32.gmra.mrb[0].mxu0 %v2281
  %v2412 = vpop.f32.mrb[0].mxu0
  %v2413 = vadd.f32 0.0, %v2412
  %v2414 = vpop.f32.mrb[0].mxu0
  %2415 = vmatprep.mubr.f32.mxu0 0.0
  %2416 = vmatmul.mubr.f32.gmra.mrb[0].mxu0 %v2284
  %v2417 = vpop.f32.mrb[0].mxu0
  %v2418 = vadd.f32 0.0, %v2417
  %v2419 = vpop.f32.mrb[0].mxu0
  %2420 = vdwg.mxu0
  %v2421 = vadd.f32 %v1327, %v1460
  %v2422 = vadd.f32 %v1327, %v1465
  %v2423 = vadd.f32 %v1327, %v1470
  %v2424 = vadd.f32 %v1327, %v1475
  %v2425 = vadd.f32 %v1327, %v1480
  %v2426 = vadd.f32 %v1327, %v1485
  %v2427 = vadd.f32 %v1327, %v1490
  %v2428 = vadd.f32 %v1327, %v1495
  %v2429 = vadd.f32 %v1327, %v1500
  %v2430 = vadd.f32 %v1327, %v1505
  %v2431 = vadd.f32 %v1327, %v1510
  %v2432 = vadd.f32 %v1327, %v1515
  %v2433 = vadd.f32 %v1327, %v1520
  %v2434 = vadd.f32 %v1327, %v1525
  %v2436 = vsel %vm804, %v1528, 0
  %v2439 = vsel %vm804, %v1529, 0
  %v2442 = vsel %vm804, %v1530, 0
  %v2445 = vsel %vm804, %v1531, 0
  %v2448 = vsel %vm804, %v1532, 0
  %v2451 = vsel %vm804, %v1533, 0
  %v2454 = vsel %vm804, %v1534, 0
  %v2457 = vsel %vm804, %v1535, 0
  %v2460 = vsel %vm804, %v1536, 0
  %v2463 = vsel %vm804, %v1537, 0
  %v2466 = vsel %vm804, %v1538, 0
  %v2469 = vsel %vm804, %v1539, 0
  %v2472 = vsel %vm804, %v1540, 0
  %v2475 = vsel %vm804, %v1541, 0
  %2477 = vmatprep.subr.mxu0 0.0
  %2478 = vmatpush1.msra.mxu0 %v1543
  %2479 = vmatprep.subr.mxu0 0.0
  %2480 = vmatpush1.msra.mxu0 %v1544
  %2481 = vmatprep.subr.mxu0 0.0
  %2482 = vmatpush1.msra.mxu0 %v1545
  %2483 = vmatprep.subr.mxu0 0.0
  %2484 = vmatpush1.msra.mxu0 %v1546
  %2485 = vmatprep.subr.mxu0 0.0
  %2486 = vmatpush1.msra.mxu0 %v1547
  %2487 = vmatprep.subr.mxu0 0.0
  %2488 = vmatpush1.msra.mxu0 %v1548
  %2489 = vmatprep.subr.mxu0 0.0
  %2490 = vmatpush1.msra.mxu0 %v1549
  %2491 = vmatprep.subr.mxu0 0.0
  %2492 = vmatpush1.msra.mxu0 %v1550
  %2493 = vmatprep.subr.mxu0 0.0
  %2494 = vmatpush1.msra.mxu0 0.0
  %2495 = vmatprep.subr.mxu0 0.0
  %2496 = vmatpush1.msra.mxu0 0.0
  %2497 = vmatprep.subr.mxu0 0.0
  %2498 = vmatpush1.msra.mxu0 0.0
  %2499 = vmatprep.subr.mxu0 0.0
  %2500 = vmatpush1.msra.mxu0 0.0
  %2501 = vmatprep.subr.mxu0 0.0
  %2502 = vmatpush1.msra.mxu0 0.0
  %2503 = vmatprep.subr.mxu0 0.0
  %2504 = vmatpush1.msra.mxu0 0.0
  %2505 = vmatprep.subr.mxu0 0.0
  %2506 = vmatpush1.msra.mxu0 0.0
  %2507 = vmatprep.subr.mxu0 0.0
  %2508 = vmatpush1.msra.mxu0 0.0
  %2509 = vmatprep.subr.mxu0 0.0
  %2510 = vmatpush1.msra.mxu0 0.0
  %2511 = vmatprep.subr.mxu0 0.0
  %2512 = vmatpush1.msra.mxu0 0.0
  %2513 = vmatprep.subr.mxu0 0.0
  %2514 = vmatpush1.msra.mxu0 0.0
  %2515 = vmatprep.subr.mxu0 0.0
  %2516 = vmatpush1.msra.mxu0 0.0
  %2517 = vmatprep.subr.mxu0 0.0
  %2518 = vmatpush1.msra.mxu0 0.0
  %2519 = vmatprep.subr.mxu0 0.0
  %2520 = vmatpush1.msra.mxu0 0.0
  %2521 = vmatprep.subr.mxu0 0.0
  %2522 = vmatpush1.msra.mxu0 0.0
  %2523 = vmatprep.subr.mxu0 0.0
  %2524 = vmatpush1.msra.mxu0 0.0
  %2525 = vmatprep.subr.mxu0 0.0
  %2526 = vmatpush1.msra.mxu0 0.0
  %2527 = vmatprep.subr.mxu0 0.0
  %2528 = vmatpush1.msra.mxu0 0.0
  %2529 = vmatprep.subr.mxu0 0.0
  %2530 = vmatpush1.msra.mxu0 0.0
  %2531 = vmatprep.subr.mxu0 0.0
  %2532 = vmatpush1.msra.mxu0 0.0
  %2533 = vmatprep.subr.mxu0 0.0
  %2534 = vmatpush1.msra.mxu0 0.0
  %2535 = vmatprep.subr.mxu0 0.0
  %2536 = vmatpush1.msra.mxu0 0.0
  %2537 = vmatprep.subr.mxu0 0.0
  %2538 = vmatpush1.msra.mxu0 0.0
  %2539 = vmatprep.subr.mxu0 0.0
  %2540 = vmatpush1.msra.mxu0 0.0
  %2541 = vmatprep.mubr.f32.mxu0 0.0
  %2542 = vmatmul.mubr.f32.gmra.mrb[0].mxu0 %v2436
  %v2543 = vpop.f32.mrb[0].mxu0
  %v2544 = vadd.f32 %v1683, %v2543
  %v2545 = vpop.f32.mrb[0].mxu0
  %2546 = vmatprep.mubr.f32.mxu0 0.0
  %2547 = vmatmul.mubr.f32.gmra.mrb[0].mxu0 %v2439
  %v2548 = vpop.f32.mrb[0].mxu0
  %v2549 = vadd.f32 %v1688, %v2548
  %v2550 = vpop.f32.mrb[0].mxu0
  %2551 = vmatprep.mubr.f32.mxu0 0.0
  %2552 = vmatmul.mubr.f32.gmra.mrb[0].mxu0 %v2442
  %v2553 = vpop.f32.mrb[0].mxu0
  %v2554 = vadd.f32 %v1693, %v2553
  %v2555 = vpop.f32.mrb[0].mxu0
  %2556 = vmatprep.mubr.f32.mxu0 0.0
  %2557 = vmatmul.mubr.f32.gmra.mrb[0].mxu0 %v2445
  %v2558 = vpop.f32.mrb[0].mxu0
  %v2559 = vadd.f32 %v1698, %v2558
  %v2560 = vpop.f32.mrb[0].mxu0
  %2561 = vmatprep.mubr.f32.mxu0 0.0
  %2562 = vmatmul.mubr.f32.gmra.mrb[0].mxu0 %v2448
  %v2563 = vpop.f32.mrb[0].mxu0
  %v2564 = vadd.f32 %v1703, %v2563
  %v2565 = vpop.f32.mrb[0].mxu0
  %2566 = vmatprep.mubr.f32.mxu0 0.0
  %2567 = vmatmul.mubr.f32.gmra.mrb[0].mxu0 %v2451
  %v2568 = vpop.f32.mrb[0].mxu0
  %v2569 = vadd.f32 %v1708, %v2568
  %v2570 = vpop.f32.mrb[0].mxu0
  %2571 = vmatprep.mubr.f32.mxu0 0.0
  %2572 = vmatmul.mubr.f32.gmra.mrb[0].mxu0 %v2454
  %v2573 = vpop.f32.mrb[0].mxu0
  %v2574 = vadd.f32 %v1713, %v2573
  %v2575 = vpop.f32.mrb[0].mxu0
  %2576 = vmatprep.mubr.f32.mxu0 0.0
  %2577 = vmatmul.mubr.f32.gmra.mrb[0].mxu0 %v2457
  %v2578 = vpop.f32.mrb[0].mxu0
  %v2579 = vadd.f32 %v1718, %v2578
  %v2580 = vpop.f32.mrb[0].mxu0
  %2581 = vmatprep.mubr.f32.mxu0 0.0
  %2582 = vmatmul.mubr.f32.gmra.mrb[0].mxu0 %v2460
  %v2583 = vpop.f32.mrb[0].mxu0
  %v2584 = vadd.f32 %v1723, %v2583
  %v2585 = vpop.f32.mrb[0].mxu0
  %2586 = vmatprep.mubr.f32.mxu0 0.0
  %2587 = vmatmul.mubr.f32.gmra.mrb[0].mxu0 %v2463
  %v2588 = vpop.f32.mrb[0].mxu0
  %v2589 = vadd.f32 %v1728, %v2588
  %v2590 = vpop.f32.mrb[0].mxu0
  %2591 = vmatprep.mubr.f32.mxu0 0.0
  %2592 = vmatmul.mubr.f32.gmra.mrb[0].mxu0 %v2466
  %v2593 = vpop.f32.mrb[0].mxu0
  %v2594 = vadd.f32 %v1733, %v2593
  %v2595 = vpop.f32.mrb[0].mxu0
  %2596 = vmatprep.mubr.f32.mxu0 0.0
  %2597 = vmatmul.mubr.f32.gmra.mrb[0].mxu0 %v2469
  %v2598 = vpop.f32.mrb[0].mxu0
  %v2599 = vadd.f32 %v1738, %v2598
  %v2600 = vpop.f32.mrb[0].mxu0
  %2601 = vmatprep.mubr.f32.mxu0 0.0
  %2602 = vmatmul.mubr.f32.gmra.mrb[0].mxu0 %v2472
  %v2603 = vpop.f32.mrb[0].mxu0
  %v2604 = vadd.f32 %v1743, %v2603
  %v2605 = vpop.f32.mrb[0].mxu0
  %2606 = vmatprep.mubr.f32.mxu0 0.0
  %2607 = vmatmul.mubr.f32.gmra.mrb[0].mxu0 %v2475
  %v2608 = vpop.f32.mrb[0].mxu0
  %v2609 = vadd.f32 %v1748, %v2608
  %v2610 = vpop.f32.mrb[0].mxu0
  %2611 = vdwg.mxu0
  %v2613 = vsel %vm804, %v1751, 0
  %v2616 = vsel %vm804, %v1752, 0
  %v2619 = vsel %vm804, %v1753, 0
  %v2622 = vsel %vm804, %v1754, 0
  %v2625 = vsel %vm804, %v1755, 0
  %v2628 = vsel %vm804, %v1756, 0
  %v2631 = vsel %vm804, %v1757, 0
  %v2634 = vsel %vm804, %v1758, 0
  %v2637 = vsel %vm804, %v1759, 0
  %v2640 = vsel %vm804, %v1760, 0
  %v2643 = vsel %vm804, %v1761, 0
  %v2646 = vsel %vm804, %v1762, 0
  %v2649 = vsel %vm804, %v1763, 0
  %v2652 = vsel %vm804, %v1764, 0
  %2654 = vmatprep.subr.mxu0 0.0
  %2655 = vmatpush1.msra.mxu0 %v1766
  %2656 = vmatprep.subr.mxu0 0.0
  %2657 = vmatpush1.msra.mxu0 %v1767
  %2658 = vmatprep.subr.mxu0 0.0
  %2659 = vmatpush1.msra.mxu0 %v1768
  %2660 = vmatprep.subr.mxu0 0.0
  %2661 = vmatpush1.msra.mxu0 %v1769
  %2662 = vmatprep.subr.mxu0 0.0
  %2663 = vmatpush1.msra.mxu0 %v1770
  %2664 = vmatprep.subr.mxu0 0.0
  %2665 = vmatpush1.msra.mxu0 %v1771
  %2666 = vmatprep.subr.mxu0 0.0
  %2667 = vmatpush1.msra.mxu0 %v1772
  %2668 = vmatprep.subr.mxu0 0.0
  %2669 = vmatpush1.msra.mxu0 %v1773
  %2670 = vmatprep.subr.mxu0 0.0
  %2671 = vmatpush1.msra.mxu0 0.0
  %2672 = vmatprep.subr.mxu0 0.0
  %2673 = vmatpush1.msra.mxu0 0.0
  %2674 = vmatprep.subr.mxu0 0.0
  %2675 = vmatpush1.msra.mxu0 0.0
  %2676 = vmatprep.subr.mxu0 0.0
  %2677 = vmatpush1.msra.mxu0 0.0
  %2678 = vmatprep.subr.mxu0 0.0
  %2679 = vmatpush1.msra.mxu0 0.0
  %2680 = vmatprep.subr.mxu0 0.0
  %2681 = vmatpush1.msra.mxu0 0.0
  %2682 = vmatprep.subr.mxu0 0.0
  %2683 = vmatpush1.msra.mxu0 0.0
  %2684 = vmatprep.subr.mxu0 0.0
  %2685 = vmatpush1.msra.mxu0 0.0
  %2686 = vmatprep.subr.mxu0 0.0
  %2687 = vmatpush1.msra.mxu0 0.0
  %2688 = vmatprep.subr.mxu0 0.0
  %2689 = vmatpush1.msra.mxu0 0.0
  %2690 = vmatprep.subr.mxu0 0.0
  %2691 = vmatpush1.msra.mxu0 0.0
  %2692 = vmatprep.subr.mxu0 0.0
  %2693 = vmatpush1.msra.mxu0 0.0
  %2694 = vmatprep.subr.mxu0 0.0
  %2695 = vmatpush1.msra.mxu0 0.0
  %2696 = vmatprep.subr.mxu0 0.0
  %2697 = vmatpush1.msra.mxu0 0.0
  %2698 = vmatprep.subr.mxu0 0.0
  %2699 = vmatpush1.msra.mxu0 0.0
  %2700 = vmatprep.subr.mxu0 0.0
  %2701 = vmatpush1.msra.mxu0 0.0
  %2702 = vmatprep.subr.mxu0 0.0
  %2703 = vmatpush1.msra.mxu0 0.0
  %2704 = vmatprep.subr.mxu0 0.0
  %2705 = vmatpush1.msra.mxu0 0.0
  %2706 = vmatprep.subr.mxu0 0.0
  %2707 = vmatpush1.msra.mxu0 0.0
  %2708 = vmatprep.subr.mxu0 0.0
  %2709 = vmatpush1.msra.mxu0 0.0
  %2710 = vmatprep.subr.mxu0 0.0
  %2711 = vmatpush1.msra.mxu0 0.0
  %2712 = vmatprep.subr.mxu0 0.0
  %2713 = vmatpush1.msra.mxu0 0.0
  %2714 = vmatprep.subr.mxu0 0.0
  %2715 = vmatpush1.msra.mxu0 0.0
  %2716 = vmatprep.subr.mxu0 0.0
  %2717 = vmatpush1.msra.mxu0 0.0
  %2718 = vmatprep.mubr.f32.mxu0 0.0
  %2719 = vmatmul.mubr.f32.gmra.mrb[0].mxu0 %v2613
  %v2720 = vpop.f32.mrb[0].mxu0
  %v2721 = vadd.f32 %v1906, %v2720
  %v2722 = vpop.f32.mrb[0].mxu0
  %2723 = vmatprep.mubr.f32.mxu0 0.0
  %2724 = vmatmul.mubr.f32.gmra.mrb[0].mxu0 %v2616
  %v2725 = vpop.f32.mrb[0].mxu0
  %v2726 = vadd.f32 %v1911, %v2725
  %v2727 = vpop.f32.mrb[0].mxu0
  %2728 = vmatprep.mubr.f32.mxu0 0.0
  %2729 = vmatmul.mubr.f32.gmra.mrb[0].mxu0 %v2619
  %v2730 = vpop.f32.mrb[0].mxu0
  %v2731 = vadd.f32 %v1916, %v2730
  %v2732 = vpop.f32.mrb[0].mxu0
  %2733 = vmatprep.mubr.f32.mxu0 0.0
  %2734 = vmatmul.mubr.f32.gmra.mrb[0].mxu0 %v2622
  %v2735 = vpop.f32.mrb[0].mxu0
  %v2736 = vadd.f32 %v1921, %v2735
  %v2737 = vpop.f32.mrb[0].mxu0
  %2738 = vmatprep.mubr.f32.mxu0 0.0
  %2739 = vmatmul.mubr.f32.gmra.mrb[0].mxu0 %v2625
  %v2740 = vpop.f32.mrb[0].mxu0
  %v2741 = vadd.f32 %v1926, %v2740
  %v2742 = vpop.f32.mrb[0].mxu0
  %2743 = vmatprep.mubr.f32.mxu0 0.0
  %2744 = vmatmul.mubr.f32.gmra.mrb[0].mxu0 %v2628
  %v2745 = vpop.f32.mrb[0].mxu0
  %v2746 = vadd.f32 %v1931, %v2745
  %v2747 = vpop.f32.mrb[0].mxu0
  %2748 = vmatprep.mubr.f32.mxu0 0.0
  %2749 = vmatmul.mubr.f32.gmra.mrb[0].mxu0 %v2631
  %v2750 = vpop.f32.mrb[0].mxu0
  %v2751 = vadd.f32 %v1936, %v2750
  %v2752 = vpop.f32.mrb[0].mxu0
  %2753 = vmatprep.mubr.f32.mxu0 0.0
  %2754 = vmatmul.mubr.f32.gmra.mrb[0].mxu0 %v2634
  %v2755 = vpop.f32.mrb[0].mxu0
  %v2756 = vadd.f32 %v1941, %v2755
  %v2757 = vpop.f32.mrb[0].mxu0
  %2758 = vmatprep.mubr.f32.mxu0 0.0
  %2759 = vmatmul.mubr.f32.gmra.mrb[0].mxu0 %v2637
  %v2760 = vpop.f32.mrb[0].mxu0
  %v2761 = vadd.f32 %v1946, %v2760
  %v2762 = vpop.f32.mrb[0].mxu0
  %2763 = vmatprep.mubr.f32.mxu0 0.0
  %2764 = vmatmul.mubr.f32.gmra.mrb[0].mxu0 %v2640
  %v2765 = vpop.f32.mrb[0].mxu0
  %v2766 = vadd.f32 %v1951, %v2765
  %v2767 = vpop.f32.mrb[0].mxu0
  %2768 = vmatprep.mubr.f32.mxu0 0.0
  %2769 = vmatmul.mubr.f32.gmra.mrb[0].mxu0 %v2643
  %v2770 = vpop.f32.mrb[0].mxu0
  %v2771 = vadd.f32 %v1956, %v2770
  %v2772 = vpop.f32.mrb[0].mxu0
  %2773 = vmatprep.mubr.f32.mxu0 0.0
  %2774 = vmatmul.mubr.f32.gmra.mrb[0].mxu0 %v2646
  %v2775 = vpop.f32.mrb[0].mxu0
  %v2776 = vadd.f32 %v1961, %v2775
  %v2777 = vpop.f32.mrb[0].mxu0
  %2778 = vmatprep.mubr.f32.mxu0 0.0
  %2779 = vmatmul.mubr.f32.gmra.mrb[0].mxu0 %v2649
  %v2780 = vpop.f32.mrb[0].mxu0
  %v2781 = vadd.f32 %v1966, %v2780
  %v2782 = vpop.f32.mrb[0].mxu0
  %2783 = vmatprep.mubr.f32.mxu0 0.0
  %2784 = vmatmul.mubr.f32.gmra.mrb[0].mxu0 %v2652
  %v2785 = vpop.f32.mrb[0].mxu0
  %v2786 = vadd.f32 %v1971, %v2785
  %v2787 = vpop.f32.mrb[0].mxu0
  %2788 = vdwg.mxu0
  %v2790 = vsel %vm804, %v1974, 0
  %v2793 = vsel %vm804, %v1975, 0
  %v2796 = vsel %vm804, %v1976, 0
  %v2799 = vsel %vm804, %v1977, 0
  %v2802 = vsel %vm804, %v1978, 0
  %v2805 = vsel %vm804, %v1979, 0
  %v2808 = vsel %vm804, %v1980, 0
  %v2811 = vsel %vm804, %v1981, 0
  %v2814 = vsel %vm804, %v1982, 0
  %v2817 = vsel %vm804, %v1983, 0
  %v2820 = vsel %vm804, %v1984, 0
  %v2823 = vsel %vm804, %v1985, 0
  %v2826 = vsel %vm804, %v1986, 0
  %v2829 = vsel %vm804, %v1987, 0
  %2831 = vmatprep.subr.mxu0 0.0
  %2832 = vmatpush1.msra.mxu0 %v1989
  %2833 = vmatprep.subr.mxu0 0.0
  %2834 = vmatpush1.msra.mxu0 %v1990
  %2835 = vmatprep.subr.mxu0 0.0
  %2836 = vmatpush1.msra.mxu0 %v1991
  %2837 = vmatprep.subr.mxu0 0.0
  %2838 = vmatpush1.msra.mxu0 %v1992
  %2839 = vmatprep.subr.mxu0 0.0
  %2840 = vmatpush1.msra.mxu0 %v1993
  %2841 = vmatprep.subr.mxu0 0.0
  %2842 = vmatpush1.msra.mxu0 %v1994
  %2843 = vmatprep.subr.mxu0 0.0
  %2844 = vmatpush1.msra.mxu0 %v1995
  %2845 = vmatprep.subr.mxu0 0.0
  %2846 = vmatpush1.msra.mxu0 %v1996
  %2847 = vmatprep.subr.mxu0 0.0
  %2848 = vmatpush1.msra.mxu0 0.0
  %2849 = vmatprep.subr.mxu0 0.0
  %2850 = vmatpush1.msra.mxu0 0.0
  %2851 = vmatprep.subr.mxu0 0.0
  %2852 = vmatpush1.msra.mxu0 0.0
  %2853 = vmatprep.subr.mxu0 0.0
  %2854 = vmatpush1.msra.mxu0 0.0
  %2855 = vmatprep.subr.mxu0 0.0
  %2856 = vmatpush1.msra.mxu0 0.0
  %2857 = vmatprep.subr.mxu0 0.0
  %2858 = vmatpush1.msra.mxu0 0.0
  %2859 = vmatprep.subr.mxu0 0.0
  %2860 = vmatpush1.msra.mxu0 0.0
  %2861 = vmatprep.subr.mxu0 0.0
  %2862 = vmatpush1.msra.mxu0 0.0
  %2863 = vmatprep.subr.mxu0 0.0
  %2864 = vmatpush1.msra.mxu0 0.0
  %2865 = vmatprep.subr.mxu0 0.0
  %2866 = vmatpush1.msra.mxu0 0.0
  %2867 = vmatprep.subr.mxu0 0.0
  %2868 = vmatpush1.msra.mxu0 0.0
  %2869 = vmatprep.subr.mxu0 0.0
  %2870 = vmatpush1.msra.mxu0 0.0
  %2871 = vmatprep.subr.mxu0 0.0
  %2872 = vmatpush1.msra.mxu0 0.0
  %2873 = vmatprep.subr.mxu0 0.0
  %2874 = vmatpush1.msra.mxu0 0.0
  %2875 = vmatprep.subr.mxu0 0.0
  %2876 = vmatpush1.msra.mxu0 0.0
  %2877 = vmatprep.subr.mxu0 0.0
  %2878 = vmatpush1.msra.mxu0 0.0
  %2879 = vmatprep.subr.mxu0 0.0
  %2880 = vmatpush1.msra.mxu0 0.0
  %2881 = vmatprep.subr.mxu0 0.0
  %2882 = vmatpush1.msra.mxu0 0.0
  %2883 = vmatprep.subr.mxu0 0.0
  %2884 = vmatpush1.msra.mxu0 0.0
  %2885 = vmatprep.subr.mxu0 0.0
  %2886 = vmatpush1.msra.mxu0 0.0
  %2887 = vmatprep.subr.mxu0 0.0
  %2888 = vmatpush1.msra.mxu0 0.0
  %2889 = vmatprep.subr.mxu0 0.0
  %2890 = vmatpush1.msra.mxu0 0.0
  %2891 = vmatprep.subr.mxu0 0.0
  %2892 = vmatpush1.msra.mxu0 0.0
  %2893 = vmatprep.subr.mxu0 0.0
  %2894 = vmatpush1.msra.mxu0 0.0
  %2895 = vmatprep.mubr.f32.mxu0 0.0
  %2896 = vmatmul.mubr.f32.gmra.mrb[0].mxu0 %v2790
  %v2897 = vpop.f32.mrb[0].mxu0
  %v2898 = vadd.f32 %v2130, %v2897
  %v2899 = vpop.f32.mrb[0].mxu0
  %2900 = vmatprep.mubr.f32.mxu0 0.0
  %2901 = vmatmul.mubr.f32.gmra.mrb[0].mxu0 %v2793
  %v2902 = vpop.f32.mrb[0].mxu0
  %v2903 = vadd.f32 %v2135, %v2902
  %v2904 = vpop.f32.mrb[0].mxu0
  %2905 = vmatprep.mubr.f32.mxu0 0.0
  %2906 = vmatmul.mubr.f32.gmra.mrb[0].mxu0 %v2796
  %v2907 = vpop.f32.mrb[0].mxu0
  %v2908 = vadd.f32 %v2140, %v2907
  %v2909 = vpop.f32.mrb[0].mxu0
  %2910 = vmatprep.mubr.f32.mxu0 0.0
  %2911 = vmatmul.mubr.f32.gmra.mrb[0].mxu0 %v2799
  %v2912 = vpop.f32.mrb[0].mxu0
  %v2913 = vadd.f32 %v2145, %v2912
  %v2914 = vpop.f32.mrb[0].mxu0
  %2915 = vmatprep.mubr.f32.mxu0 0.0
  %2916 = vmatmul.mubr.f32.gmra.mrb[0].mxu0 %v2802
  %v2917 = vpop.f32.mrb[0].mxu0
  %v2918 = vadd.f32 %v2150, %v2917
  %v2919 = vpop.f32.mrb[0].mxu0
  %2920 = vmatprep.mubr.f32.mxu0 0.0
  %2921 = vmatmul.mubr.f32.gmra.mrb[0].mxu0 %v2805
  %v2922 = vpop.f32.mrb[0].mxu0
  %v2923 = vadd.f32 %v2155, %v2922
  %v2924 = vpop.f32.mrb[0].mxu0
  %2925 = vmatprep.mubr.f32.mxu0 0.0
  %2926 = vmatmul.mubr.f32.gmra.mrb[0].mxu0 %v2808
  %v2927 = vpop.f32.mrb[0].mxu0
  %v2928 = vadd.f32 %v2160, %v2927
  %v2929 = vpop.f32.mrb[0].mxu0
  %2930 = vmatprep.mubr.f32.mxu0 0.0
  %2931 = vmatmul.mubr.f32.gmra.mrb[0].mxu0 %v2811
  %v2932 = vpop.f32.mrb[0].mxu0
  %v2933 = vadd.f32 %v2165, %v2932
  %v2934 = vpop.f32.mrb[0].mxu0
  %2935 = vmatprep.mubr.f32.mxu0 0.0
  %2936 = vmatmul.mubr.f32.gmra.mrb[0].mxu0 %v2814
  %v2937 = vpop.f32.mrb[0].mxu0
  %v2938 = vadd.f32 %v2170, %v2937
  %v2939 = vpop.f32.mrb[0].mxu0
  %2940 = vmatprep.mubr.f32.mxu0 0.0
  %2941 = vmatmul.mubr.f32.gmra.mrb[0].mxu0 %v2817
  %v2942 = vpop.f32.mrb[0].mxu0
  %v2943 = vadd.f32 %v2175, %v2942
  %v2944 = vpop.f32.mrb[0].mxu0
  %2945 = vmatprep.mubr.f32.mxu0 0.0
  %2946 = vmatmul.mubr.f32.gmra.mrb[0].mxu0 %v2820
  %v2947 = vpop.f32.mrb[0].mxu0
  %v2948 = vadd.f32 %v2180, %v2947
  %v2949 = vpop.f32.mrb[0].mxu0
  %2950 = vmatprep.mubr.f32.mxu0 0.0
  %2951 = vmatmul.mubr.f32.gmra.mrb[0].mxu0 %v2823
  %v2952 = vpop.f32.mrb[0].mxu0
  %v2953 = vadd.f32 %v2185, %v2952
  %v2954 = vpop.f32.mrb[0].mxu0
  %2955 = vmatprep.mubr.f32.mxu0 0.0
  %2956 = vmatmul.mubr.f32.gmra.mrb[0].mxu0 %v2826
  %v2957 = vpop.f32.mrb[0].mxu0
  %v2958 = vadd.f32 %v2190, %v2957
  %v2959 = vpop.f32.mrb[0].mxu0
  %2960 = vmatprep.mubr.f32.mxu0 0.0
  %2961 = vmatmul.mubr.f32.gmra.mrb[0].mxu0 %v2829
  %v2962 = vpop.f32.mrb[0].mxu0
  %v2963 = vadd.f32 %v2195, %v2962
  %v2964 = vpop.f32.mrb[0].mxu0
  %2965 = vdwg.mxu0
  %v2967 = vsel %vm804, %v2198, 0
  %v2970 = vsel %vm804, %v2199, 0
  %v2973 = vsel %vm804, %v2200, 0
  %v2976 = vsel %vm804, %v2201, 0
  %v2979 = vsel %vm804, %v2202, 0
  %v2982 = vsel %vm804, %v2203, 0
  %v2985 = vsel %vm804, %v2204, 0
  %v2988 = vsel %vm804, %v2205, 0
  %v2991 = vsel %vm804, %v2206, 0
  %v2994 = vsel %vm804, %v2207, 0
  %v2997 = vsel %vm804, %v2208, 0
  %v3000 = vsel %vm804, %v2209, 0
  %v3003 = vsel %vm804, %v2210, 0
  %v3006 = vsel %vm804, %v2211, 0
  %3008 = vmatprep.subr.mxu0 0.0
  %3009 = vmatpush1.msra.mxu0 %v2213
  %3010 = vmatprep.subr.mxu0 0.0
  %3011 = vmatpush1.msra.mxu0 %v2214
  %3012 = vmatprep.subr.mxu0 0.0
  %3013 = vmatpush1.msra.mxu0 %v2215
  %3014 = vmatprep.subr.mxu0 0.0
  %3015 = vmatpush1.msra.mxu0 %v2216
  %3016 = vmatprep.subr.mxu0 0.0
  %3017 = vmatpush1.msra.mxu0 %v2217
  %3018 = vmatprep.subr.mxu0 0.0
  %3019 = vmatpush1.msra.mxu0 %v2218
  %3020 = vmatprep.subr.mxu0 0.0
  %3021 = vmatpush1.msra.mxu0 %v2219
  %3022 = vmatprep.subr.mxu0 0.0
  %3023 = vmatpush1.msra.mxu0 %v2220
  %3024 = vmatprep.subr.mxu0 0.0
  %3025 = vmatpush1.msra.mxu0 0.0
  %3026 = vmatprep.subr.mxu0 0.0
  %3027 = vmatpush1.msra.mxu0 0.0
  %3028 = vmatprep.subr.mxu0 0.0
  %3029 = vmatpush1.msra.mxu0 0.0
  %3030 = vmatprep.subr.mxu0 0.0
  %3031 = vmatpush1.msra.mxu0 0.0
  %3032 = vmatprep.subr.mxu0 0.0
  %3033 = vmatpush1.msra.mxu0 0.0
  %3034 = vmatprep.subr.mxu0 0.0
  %3035 = vmatpush1.msra.mxu0 0.0
  %3036 = vmatprep.subr.mxu0 0.0
  %3037 = vmatpush1.msra.mxu0 0.0
  %3038 = vmatprep.subr.mxu0 0.0
  %3039 = vmatpush1.msra.mxu0 0.0
  %3040 = vmatprep.subr.mxu0 0.0
  %3041 = vmatpush1.msra.mxu0 0.0
  %3042 = vmatprep.subr.mxu0 0.0
  %3043 = vmatpush1.msra.mxu0 0.0
  %3044 = vmatprep.subr.mxu0 0.0
  %3045 = vmatpush1.msra.mxu0 0.0
  %3046 = vmatprep.subr.mxu0 0.0
  %3047 = vmatpush1.msra.mxu0 0.0
  %3048 = vmatprep.subr.mxu0 0.0
  %3049 = vmatpush1.msra.mxu0 0.0
  %3050 = vmatprep.subr.mxu0 0.0
  %3051 = vmatpush1.msra.mxu0 0.0
  %3052 = vmatprep.subr.mxu0 0.0
  %3053 = vmatpush1.msra.mxu0 0.0
  %3054 = vmatprep.subr.mxu0 0.0
  %3055 = vmatpush1.msra.mxu0 0.0
  %3056 = vmatprep.subr.mxu0 0.0
  %3057 = vmatpush1.msra.mxu0 0.0
  %3058 = vmatprep.subr.mxu0 0.0
  %3059 = vmatpush1.msra.mxu0 0.0
  %3060 = vmatprep.subr.mxu0 0.0
  %3061 = vmatpush1.msra.mxu0 0.0
  %3062 = vmatprep.subr.mxu0 0.0
  %3063 = vmatpush1.msra.mxu0 0.0
  %3064 = vmatprep.subr.mxu0 0.0
  %3065 = vmatpush1.msra.mxu0 0.0
  %3066 = vmatprep.subr.mxu0 0.0
  %3067 = vmatpush1.msra.mxu0 0.0
  %3068 = vmatprep.subr.mxu0 0.0
  %3069 = vmatpush1.msra.mxu0 0.0
  %3070 = vmatprep.subr.mxu0 0.0
  %3071 = vmatpush1.msra.mxu0 0.0
  %3072 = vmatprep.mubr.f32.mxu0 0.0
  %3073 = vmatmul.mubr.f32.gmra.mrb[0].mxu0 %v2967
  %v3074 = vpop.f32.mrb[0].mxu0
  %v3075 = vadd.f32 %v2353, %v3074
  %v3076 = vpop.f32.mrb[0].mxu0
  %3077 = vmatprep.mubr.f32.mxu0 0.0
  %3078 = vmatmul.mubr.f32.gmra.mrb[0].mxu0 %v2970
  %v3079 = vpop.f32.mrb[0].mxu0
  %v3080 = vadd.f32 %v2358, %v3079
  %v3081 = vpop.f32.mrb[0].mxu0
  %3082 = vmatprep.mubr.f32.mxu0 0.0
  %3083 = vmatmul.mubr.f32.gmra.mrb[0].mxu0 %v2973
  %v3084 = vpop.f32.mrb[0].mxu0
  %v3085 = vadd.f32 %v2363, %v3084
  %v3086 = vpop.f32.mrb[0].mxu0
  %3087 = vmatprep.mubr.f32.mxu0 0.0
  %3088 = vmatmul.mubr.f32.gmra.mrb[0].mxu0 %v2976
  %v3089 = vpop.f32.mrb[0].mxu0
  %v3090 = vadd.f32 %v2368, %v3089
  %v3091 = vpop.f32.mrb[0].mxu0
  %3092 = vmatprep.mubr.f32.mxu0 0.0
  %3093 = vmatmul.mubr.f32.gmra.mrb[0].mxu0 %v2979
  %v3094 = vpop.f32.mrb[0].mxu0
  %v3095 = vadd.f32 %v2373, %v3094
  %v3096 = vpop.f32.mrb[0].mxu0
  %3097 = vmatprep.mubr.f32.mxu0 0.0
  %3098 = vmatmul.mubr.f32.gmra.mrb[0].mxu0 %v2982
  %v3099 = vpop.f32.mrb[0].mxu0
  %v3100 = vadd.f32 %v2378, %v3099
  %v3101 = vpop.f32.mrb[0].mxu0
  %3102 = vmatprep.mubr.f32.mxu0 0.0
  %3103 = vmatmul.mubr.f32.gmra.mrb[0].mxu0 %v2985
  %v3104 = vpop.f32.mrb[0].mxu0
  %v3105 = vadd.f32 %v2383, %v3104
  %v3106 = vpop.f32.mrb[0].mxu0
  %3107 = vmatprep.mubr.f32.mxu0 0.0
  %3108 = vmatmul.mubr.f32.gmra.mrb[0].mxu0 %v2988
  %v3109 = vpop.f32.mrb[0].mxu0
  %v3110 = vadd.f32 %v2388, %v3109
  %v3111 = vpop.f32.mrb[0].mxu0
  %3112 = vmatprep.mubr.f32.mxu0 0.0
  %3113 = vmatmul.mubr.f32.gmra.mrb[0].mxu0 %v2991
  %v3114 = vpop.f32.mrb[0].mxu0
  %v3115 = vadd.f32 %v2393, %v3114
  %v3116 = vpop.f32.mrb[0].mxu0
  %3117 = vmatprep.mubr.f32.mxu0 0.0
  %3118 = vmatmul.mubr.f32.gmra.mrb[0].mxu0 %v2994
  %v3119 = vpop.f32.mrb[0].mxu0
  %v3120 = vadd.f32 %v2398, %v3119
  %v3121 = vpop.f32.mrb[0].mxu0
  %3122 = vmatprep.mubr.f32.mxu0 0.0
  %3123 = vmatmul.mubr.f32.gmra.mrb[0].mxu0 %v2997
  %v3124 = vpop.f32.mrb[0].mxu0
  %v3125 = vadd.f32 %v2403, %v3124
  %v3126 = vpop.f32.mrb[0].mxu0
  %3127 = vmatprep.mubr.f32.mxu0 0.0
  %3128 = vmatmul.mubr.f32.gmra.mrb[0].mxu0 %v3000
  %v3129 = vpop.f32.mrb[0].mxu0
  %v3130 = vadd.f32 %v2408, %v3129
  %v3131 = vpop.f32.mrb[0].mxu0
  %3132 = vmatprep.mubr.f32.mxu0 0.0
  %3133 = vmatmul.mubr.f32.gmra.mrb[0].mxu0 %v3003
  %v3134 = vpop.f32.mrb[0].mxu0
  %v3135 = vadd.f32 %v2413, %v3134
  %v3136 = vpop.f32.mrb[0].mxu0
  %3137 = vmatprep.mubr.f32.mxu0 0.0
  %3138 = vmatmul.mubr.f32.gmra.mrb[0].mxu0 %v3006
  %v3139 = vpop.f32.mrb[0].mxu0
  %v3140 = vadd.f32 %v2418, %v3139
  %v3141 = vpop.f32.mrb[0].mxu0
  %3142 = vdwg.mxu0
  %v3143 = vadd.f32 %v2421, %v2544
  %v3144 = vadd.f32 %v2422, %v2549
  %v3145 = vadd.f32 %v2423, %v2554
  %v3146 = vadd.f32 %v2424, %v2559
  %v3147 = vadd.f32 %v2425, %v2564
  %v3148 = vadd.f32 %v2426, %v2569
  %v3149 = vadd.f32 %v2427, %v2574
  %v3150 = vadd.f32 %v2428, %v2579
  %v3151 = vadd.f32 %v2429, %v2584
  %v3152 = vadd.f32 %v2430, %v2589
  %v3153 = vadd.f32 %v2431, %v2594
  %v3154 = vadd.f32 %v2432, %v2599
  %v3155 = vadd.f32 %v2433, %v2604
  %v3156 = vadd.f32 %v2434, %v2609
  %v3157 = vadd.f32 %v2721, %v2898
  %v3158 = vadd.f32 %v2726, %v2903
  %v3159 = vadd.f32 %v2731, %v2908
  %v3160 = vadd.f32 %v2736, %v2913
  %v3161 = vadd.f32 %v2741, %v2918
  %v3162 = vadd.f32 %v2746, %v2923
  %v3163 = vadd.f32 %v2751, %v2928
  %v3164 = vadd.f32 %v2756, %v2933
  %v3165 = vadd.f32 %v2761, %v2938
  %v3166 = vadd.f32 %v2766, %v2943
  %v3167 = vadd.f32 %v2771, %v2948
  %v3168 = vadd.f32 %v2776, %v2953
  %v3169 = vadd.f32 %v2781, %v2958
  %v3170 = vadd.f32 %v2786, %v2963
  %v3171 = vadd.f32 %v3143, %v3157
  %v3172 = vadd.f32 %v3144, %v3158
  %v3173 = vadd.f32 %v3145, %v3159
  %v3174 = vadd.f32 %v3146, %v3160
  %v3175 = vadd.f32 %v3147, %v3161
  %v3176 = vadd.f32 %v3148, %v3162
  %v3177 = vadd.f32 %v3149, %v3163
  %v3178 = vadd.f32 %v3150, %v3164
  %v3179 = vadd.f32 %v3151, %v3165
  %v3180 = vadd.f32 %v3152, %v3166
  %v3181 = vadd.f32 %v3153, %v3167
  %v3182 = vadd.f32 %v3154, %v3168
  %v3183 = vadd.f32 %v3155, %v3169
  %v3184 = vadd.f32 %v3156, %v3170
  %v3185 = vadd.f32 %v3171, %v3075
  %v3186 = vadd.f32 %v3172, %v3080
  %v3187 = vadd.f32 %v3173, %v3085
  %v3188 = vadd.f32 %v3174, %v3090
  %v3189 = vadd.f32 %v3175, %v3095
  %v3190 = vadd.f32 %v3176, %v3100
  %v3191 = vadd.f32 %v3177, %v3105
  %v3192 = vadd.f32 %v3178, %v3110
  %v3193 = vadd.f32 %v3179, %v3115
  %v3194 = vadd.f32 %v3180, %v3120
  %v3195 = vadd.f32 %v3181, %v3125
  %v3196 = vadd.f32 %v3182, %v3130
  %v3197 = vadd.f32 %v3183, %v3135
  %v3198 = vadd.f32 %v3184, %v3140
  %v3199 = vmax.f32 %v3185, 0.0
  %v3200 = vmax.f32 %v3186, 0.0
  %v3201 = vmax.f32 %v3187, 0.0
  %v3202 = vmax.f32 %v3188, 0.0
  %v3203 = vmax.f32 %v3189, 0.0
  %v3204 = vmax.f32 %v3190, 0.0
  %v3205 = vmax.f32 %v3191, 0.0
  %v3206 = vmax.f32 %v3192, 0.0
  %v3207 = vmax.f32 %v3193, 0.0
  %v3208 = vmax.f32 %v3194, 0.0
  %v3209 = vmax.f32 %v3195, 0.0
  %v3210 = vmax.f32 %v3196, 0.0
  %v3211 = vmax.f32 %v3197, 0.0
  %v3212 = vmax.f32 %v3198, 0.0
  %vm3213 = vcmask 261120
  %3214 = vst.msk [vmem:[#allocation4] sm:$0xff] %vm3213, 0.0
  %vm3215 = vcmask 254976
  %3216 = vst.msk [vmem:[#allocation4 + $0x8] sm:$0x3] %vm3215, 0.0
  %3217 = vst.msk [vmem:[#allocation4 + $0x10] sm:$0xff] %vm3213, 0.0
  %3218 = vst.msk [vmem:[#allocation4 + $0x18] sm:$0x3] %vm3215, 0.0
  %3219 = vst.msk [vmem:[#allocation4 + $0x20] sm:$0xff] %vm3213, 0.0
  %3220 = vst.msk [vmem:[#allocation4 + $0x28] sm:$0x3] %vm3215, 0.0
  %3221 = vst.msk [vmem:[#allocation4 + $0x30] sm:$0xff] %vm3213, 0.0
  %3222 = vst.msk [vmem:[#allocation4 + $0x38] sm:$0x3] %vm3215, 0.0
  %3223 = vst.msk [vmem:[#allocation4 + $0x40] sm:$0xff] %vm3213, 0.0
  %3224 = vst.msk [vmem:[#allocation4 + $0x48] sm:$0x3] %vm3215, 0.0
  %3225 = vst.msk [vmem:[#allocation4 + $0x50] sm:$0xff] %vm3213, 0.0
  %3226 = vst.msk [vmem:[#allocation4 + $0x58] sm:$0x3] %vm3215, 0.0
  %3227 = vst.msk [vmem:[#allocation4 + $0x60] sm:$0xff] %vm3213, 0.0
  %3228 = vst.msk [vmem:[#allocation4 + $0x68] sm:$0x3] %vm3215, 0.0
  %3229 = vst.msk [vmem:[#allocation4 + $0x70] sm:$0xff] %vm3213, 0.0
  %3230 = vst.msk [vmem:[#allocation4 + $0x78] sm:$0x3] %vm3215, 0.0
  %3231 = vst.msk [vmem:[#allocation4 + $0x80] sm:$0xff] %vm3213, 0.0
  %3232 = vst.msk [vmem:[#allocation4 + $0x88] sm:$0x3] %vm3215, 0.0
  %3233 = vst.msk [vmem:[#allocation4 + $0x90] sm:$0xff] %vm3213, 0.0
  %3234 = vst.msk [vmem:[#allocation4 + $0x98] sm:$0x3] %vm3215, 0.0
  %3235 = vst.msk [vmem:[#allocation4 + $0xa0] sm:$0xff] %vm3213, 0.0
  %3236 = vst.msk [vmem:[#allocation4 + $0xa8] sm:$0x3] %vm3215, 0.0
  %3237 = vst.msk [vmem:[#allocation4 + $0xb0] sm:$0xff] %vm3213, 0.0
  %3238 = vst.msk [vmem:[#allocation4 + $0xb8] sm:$0x3] %vm3215, 0.0
  %3239 = vst.msk [vmem:[#allocation4 + $0xc0] sm:$0xff] %vm3213, 0.0
  %3240 = vst.msk [vmem:[#allocation4 + $0xc8] sm:$0x3] %vm3215, 0.0
  %3241 = vst.msk [vmem:[#allocation4 + $0xd0] sm:$0xff] %vm3213, 0.0
  %3242 = vst.msk [vmem:[#allocation4 + $0xd8] sm:$0x3] %vm3215, 0.0
  %3243 = vst.msk [vmem:[#allocation4 + $0xe0] sm:$0xff] %vm3213, 0.0
  %3244 = vst.msk [vmem:[#allocation4 + $0xe8] sm:$0x3] %vm3215, 0.0
  %3245 = vst.msk [vmem:[#allocation4 + $0xf0] sm:$0xff] %vm3213, 0.0
  %3246 = vst.msk [vmem:[#allocation4 + $0xf8] sm:$0x3] %vm3215, 0.0
  %3247 = vst.msk [vmem:[#allocation4 + $0x100] sm:$0xff] %vm3213, 0.0
  %3248 = vst.msk [vmem:[#allocation4 + $0x108] sm:$0x3] %vm3215, 0.0
  %3249 = vst.msk [vmem:[#allocation4 + $0x110] sm:$0xff] %vm3213, 0.0
  %3250 = vst.msk [vmem:[#allocation4 + $0x118] sm:$0x3] %vm3215, 0.0
  %s3251 = scalar_lea.vmem [#allocation4], 16
  %vm3252 = vcmask 260096
  %3253 = vst.msk [vmem:[%s3251 + $0x1] sm:$0x7f] %vm3252, %v3199
  %3254 = vst.msk [vmem:[%s3251 + $0x11] sm:$0x7f] %vm3252, %v3200
  %3255 = vst.msk [vmem:[%s3251 + $0x21] sm:$0x7f] %vm3252, %v3201
  %3256 = vst.msk [vmem:[%s3251 + $0x31] sm:$0x7f] %vm3252, %v3202
  %3257 = vst.msk [vmem:[%s3251 + $0x41] sm:$0x7f] %vm3252, %v3203
  %3258 = vst.msk [vmem:[%s3251 + $0x51] sm:$0x7f] %vm3252, %v3204
  %3259 = vst.msk [vmem:[%s3251 + $0x61] sm:$0x7f] %vm3252, %v3205
  %3260 = vst.msk [vmem:[%s3251 + $0x91] sm:$0x7f] %vm3252, %v3206
  %3261 = vst.msk [vmem:[%s3251 + $0xa1] sm:$0x7f] %vm3252, %v3207
  %3262 = vst.msk [vmem:[%s3251 + $0xb1] sm:$0x7f] %vm3252, %v3208
  %3263 = vst.msk [vmem:[%s3251 + $0xc1] sm:$0x7f] %vm3252, %v3209
  %3264 = vst.msk [vmem:[%s3251 + $0xd1] sm:$0x7f] %vm3252, %v3210
  %3265 = vst.msk [vmem:[%s3251 + $0xe1] sm:$0x7f] %vm3252, %v3211
  %3266 = vst.msk [vmem:[%s3251 + $0xf1] sm:$0x7f] %vm3252, %v3212
  %v3267 = vld [vmem:[%s7] sm:$0x1]
  %v3269 = vlaneseq
  %v3270 = vshrl.u32 %v3269, 7
  %v3271 = vsub.s32 0, %v3270
  %v3272 = vrot.slane %v3267, %v3271
  %v3274 = vld [vmem:[#allocation4] sm:$0xff]
  %v3275 = vld [vmem:[#allocation4 + $0x10] sm:$0xff]
  %v3276 = vld [vmem:[#allocation4 + $0x20] sm:$0xff]
  %v3277 = vld [vmem:[#allocation4 + $0x30] sm:$0xff]
  %v3278 = vld [vmem:[#allocation4 + $0x40] sm:$0xff]
  %v3279 = vld [vmem:[#allocation4 + $0x50] sm:$0xff]
  %v3280 = vld [vmem:[#allocation4 + $0x60] sm:$0xff]
  %v3281 = vld [vmem:[#allocation4 + $0x90] sm:$0xff]
  %v3282 = vld [vmem:[#allocation4 + $0xa0] sm:$0xff]
  %v3283 = vld [vmem:[#allocation4 + $0xb0] sm:$0xff]
  %v3284 = vld [vmem:[#allocation4 + $0xc0] sm:$0xff]
  %v3285 = vld [vmem:[#allocation4 + $0xd0] sm:$0xff]
  %v3286 = vld [vmem:[#allocation4 + $0xe0] sm:$0xff]
  %v3287 = vld [vmem:[#allocation4 + $0xf0] sm:$0xff]
  %v3288 = vld [vmem:[%s6] sm:$0xff]
  %v3289 = vld [vmem:[%s6 + $0x8] sm:$0xff]
  %v3290 = vld [vmem:[%s6 + $0x10] sm:$0xff]
  %v3291 = vld [vmem:[%s6 + $0x18] sm:$0xff]
  %v3293 = vsel %vm3213, %v3274, 0
  %v3296 = vsel %vm3213, %v3275, 0
  %v3299 = vsel %vm3213, %v3276, 0
  %v3302 = vsel %vm3213, %v3277, 0
  %v3305 = vsel %vm3213, %v3278, 0
  %v3308 = vsel %vm3213, %v3279, 0
  %v3311 = vsel %vm3213, %v3280, 0
  %v3314 = vsel %vm3213, %v3281, 0
  %v3317 = vsel %vm3213, %v3282, 0
  %v3320 = vsel %vm3213, %v3283, 0
  %v3323 = vsel %vm3213, %v3284, 0
  %v3326 = vsel %vm3213, %v3285, 0
  %v3329 = vsel %vm3213, %v3286, 0
  %v3332 = vsel %vm3213, %v3287, 0
  %3334 = vmatprep.subr.mxu0 0.0
  %3335 = vmatpush1.msra.mxu0 %v3288
  %3336 = vmatprep.subr.mxu0 0.0
  %3337 = vmatpush1.msra.mxu0 %v3289
  %3338 = vmatprep.subr.mxu0 0.0
  %3339 = vmatpush1.msra.mxu0 %v3290
  %3340 = vmatprep.subr.mxu0 0.0
  %3341 = vmatpush1.msra.mxu0 %v3291
  %3342 = vmatprep.subr.mxu0 0.0
  %3343 = vmatpush1.msra.mxu0 0.0
  %3344 = vmatprep.subr.mxu0 0.0
  %3345 = vmatpush1.msra.mxu0 0.0
  %3346 = vmatprep.subr.mxu0 0.0
  %3347 = vmatpush1.msra.mxu0 0.0
  %3348 = vmatprep.subr.mxu0 0.0
  %3349 = vmatpush1.msra.mxu0 0.0
  %3350 = vmatprep.subr.mxu0 0.0
  %3351 = vmatpush1.msra.mxu0 0.0
  %3352 = vmatprep.subr.mxu0 0.0
  %3353 = vmatpush1.msra.mxu0 0.0
  %3354 = vmatprep.subr.mxu0 0.0
  %3355 = vmatpush1.msra.mxu0 0.0
  %3356 = vmatprep.subr.mxu0 0.0
  %3357 = vmatpush1.msra.mxu0 0.0
  %3358 = vmatprep.subr.mxu0 0.0
  %3359 = vmatpush1.msra.mxu0 0.0
  %3360 = vmatprep.subr.mxu0 0.0
  %3361 = vmatpush1.msra.mxu0 0.0
  %3362 = vmatprep.subr.mxu0 0.0
  %3363 = vmatpush1.msra.mxu0 0.0
  %3364 = vmatprep.subr.mxu0 0.0
  %3365 = vmatpush1.msra.mxu0 0.0
  %3366 = vmatprep.subr.mxu0 0.0
  %3367 = vmatpush1.msra.mxu0 0.0
  %3368 = vmatprep.subr.mxu0 0.0
  %3369 = vmatpush1.msra.mxu0 0.0
  %3370 = vmatprep.subr.mxu0 0.0
  %3371 = vmatpush1.msra.mxu0 0.0
  %3372 = vmatprep.subr.mxu0 0.0
  %3373 = vmatpush1.msra.mxu0 0.0
  %3374 = vmatprep.subr.mxu0 0.0
  %3375 = vmatpush1.msra.mxu0 0.0
  %3376 = vmatprep.subr.mxu0 0.0
  %3377 = vmatpush1.msra.mxu0 0.0
  %3378 = vmatprep.subr.mxu0 0.0
  %3379 = vmatpush1.msra.mxu0 0.0
  %3380 = vmatprep.subr.mxu0 0.0
  %3381 = vmatpush1.msra.mxu0 0.0
  %3382 = vmatprep.subr.mxu0 0.0
  %3383 = vmatpush1.msra.mxu0 0.0
  %3384 = vmatprep.subr.mxu0 0.0
  %3385 = vmatpush1.msra.mxu0 0.0
  %3386 = vmatprep.subr.mxu0 0.0
  %3387 = vmatpush1.msra.mxu0 0.0
  %3388 = vmatprep.subr.mxu0 0.0
  %3389 = vmatpush1.msra.mxu0 0.0
  %3390 = vmatprep.subr.mxu0 0.0
  %3391 = vmatpush1.msra.mxu0 0.0
  %3392 = vmatprep.subr.mxu0 0.0
  %3393 = vmatpush1.msra.mxu0 0.0
  %3394 = vmatprep.subr.mxu0 0.0
  %3395 = vmatpush1.msra.mxu0 0.0
  %3396 = vmatprep.subr.mxu0 0.0
  %3397 = vmatpush1.msra.mxu0 0.0
  %3398 = vmatprep.mubr.f32.mxu0 0.0
  %3399 = vmatmul.mubr.f32.gmra.mrb[0].mxu0 %v3293
  %v3400 = vpop.f32.mrb[0].mxu0
  %v3401 = vadd.f32 0.0, %v3400
  %v3402 = vpop.f32.mrb[0].mxu0
  %3403 = vmatprep.mubr.f32.mxu0 0.0
  %3404 = vmatmul.mubr.f32.gmra.mrb[0].mxu0 %v3296
  %v3405 = vpop.f32.mrb[0].mxu0
  %v3406 = vadd.f32 0.0, %v3405
  %v3407 = vpop.f32.mrb[0].mxu0
  %3408 = vmatprep.mubr.f32.mxu0 0.0
  %3409 = vmatmul.mubr.f32.gmra.mrb[0].mxu0 %v3299
  %v3410 = vpop.f32.mrb[0].mxu0
  %v3411 = vadd.f32 0.0, %v3410
  %v3412 = vpop.f32.mrb[0].mxu0
  %3413 = vmatprep.mubr.f32.mxu0 0.0
  %3414 = vmatmul.mubr.f32.gmra.mrb[0].mxu0 %v3302
  %v3415 = vpop.f32.mrb[0].mxu0
  %v3416 = vadd.f32 0.0, %v3415
  %v3417 = vpop.f32.mrb[0].mxu0
  %3418 = vmatprep.mubr.f32.mxu0 0.0
  %3419 = vmatmul.mubr.f32.gmra.mrb[0].mxu0 %v3305
  %v3420 = vpop.f32.mrb[0].mxu0
  %v3421 = vadd.f32 0.0, %v3420
  %v3422 = vpop.f32.mrb[0].mxu0
  %3423 = vmatprep.mubr.f32.mxu0 0.0
  %3424 = vmatmul.mubr.f32.gmra.mrb[0].mxu0 %v3308
  %v3425 = vpop.f32.mrb[0].mxu0
  %v3426 = vadd.f32 0.0, %v3425
  %v3427 = vpop.f32.mrb[0].mxu0
  %3428 = vmatprep.mubr.f32.mxu0 0.0
  %3429 = vmatmul.mubr.f32.gmra.mrb[0].mxu0 %v3311
  %v3430 = vpop.f32.mrb[0].mxu0
  %v3431 = vadd.f32 0.0, %v3430
  %v3432 = vpop.f32.mrb[0].mxu0
  %3433 = vmatprep.mubr.f32.mxu0 0.0
  %3434 = vmatmul.mubr.f32.gmra.mrb[0].mxu0 %v3314
  %v3435 = vpop.f32.mrb[0].mxu0
  %v3436 = vadd.f32 0.0, %v3435
  %v3437 = vpop.f32.mrb[0].mxu0
  %3438 = vmatprep.mubr.f32.mxu0 0.0
  %3439 = vmatmul.mubr.f32.gmra.mrb[0].mxu0 %v3317
  %v3440 = vpop.f32.mrb[0].mxu0
  %v3441 = vadd.f32 0.0, %v3440
  %v3442 = vpop.f32.mrb[0].mxu0
  %3443 = vmatprep.mubr.f32.mxu0 0.0
  %3444 = vmatmul.mubr.f32.gmra.mrb[0].mxu0 %v3320
  %v3445 = vpop.f32.mrb[0].mxu0
  %v3446 = vadd.f32 0.0, %v3445
  %v3447 = vpop.f32.mrb[0].mxu0
  %3448 = vmatprep.mubr.f32.mxu0 0.0
  %3449 = vmatmul.mubr.f32.gmra.mrb[0].mxu0 %v3323
  %v3450 = vpop.f32.mrb[0].mxu0
  %v3451 = vadd.f32 0.0, %v3450
  %v3452 = vpop.f32.mrb[0].mxu0
  %3453 = vmatprep.mubr.f32.mxu0 0.0
  %3454 = vmatmul.mubr.f32.gmra.mrb[0].mxu0 %v3326
  %v3455 = vpop.f32.mrb[0].mxu0
  %v3456 = vadd.f32 0.0, %v3455
  %v3457 = vpop.f32.mrb[0].mxu0
  %3458 = vmatprep.mubr.f32.mxu0 0.0
  %3459 = vmatmul.mubr.f32.gmra.mrb[0].mxu0 %v3329
  %v3460 = vpop.f32.mrb[0].mxu0
  %v3461 = vadd.f32 0.0, %v3460
  %v3462 = vpop.f32.mrb[0].mxu0
  %3463 = vmatprep.mubr.f32.mxu0 0.0
  %3464 = vmatmul.mubr.f32.gmra.mrb[0].mxu0 %v3332
  %v3465 = vpop.f32.mrb[0].mxu0
  %v3466 = vadd.f32 0.0, %v3465
  %v3467 = vpop.f32.mrb[0].mxu0
  %3468 = vdwg.mxu0
  %v3469 = vld [vmem:[#allocation4 + $0x1] sm:$0xff]
  %v3470 = vld [vmem:[#allocation4 + $0x11] sm:$0xff]
  %v3471 = vld [vmem:[#allocation4 + $0x21] sm:$0xff]
  %v3472 = vld [vmem:[#allocation4 + $0x31] sm:$0xff]
  %v3473 = vld [vmem:[#allocation4 + $0x41] sm:$0xff]
  %v3474 = vld [vmem:[#allocation4 + $0x51] sm:$0xff]
  %v3475 = vld [vmem:[#allocation4 + $0x61] sm:$0xff]
  %v3476 = vld [vmem:[#allocation4 + $0x91] sm:$0xff]
  %v3477 = vld [vmem:[#allocation4 + $0xa1] sm:$0xff]
  %v3478 = vld [vmem:[#allocation4 + $0xb1] sm:$0xff]
  %v3479 = vld [vmem:[#allocation4 + $0xc1] sm:$0xff]
  %v3480 = vld [vmem:[#allocation4 + $0xd1] sm:$0xff]
  %v3481 = vld [vmem:[#allocation4 + $0xe1] sm:$0xff]
  %v3482 = vld [vmem:[#allocation4 + $0xf1] sm:$0xff]
  %s3483 = scalar_lea.vmem %s6, 32
  %v3484 = vld [vmem:[%s3483] sm:$0xff]
  %v3485 = vld [vmem:[%s3483 + $0x8] sm:$0xff]
  %v3486 = vld [vmem:[%s3483 + $0x10] sm:$0xff]
  %v3487 = vld [vmem:[%s3483 + $0x18] sm:$0xff]
  %v3488 = vld [vmem:[#allocation4 + $0x2] sm:$0xff]
  %v3489 = vld [vmem:[#allocation4 + $0x12] sm:$0xff]
  %v3490 = vld [vmem:[#allocation4 + $0x22] sm:$0xff]
  %v3491 = vld [vmem:[#allocation4 + $0x32] sm:$0xff]
  %v3492 = vld [vmem:[#allocation4 + $0x42] sm:$0xff]
  %v3493 = vld [vmem:[#allocation4 + $0x52] sm:$0xff]
  %v3494 = vld [vmem:[#allocation4 + $0x62] sm:$0xff]
  %v3495 = vld [vmem:[#allocation4 + $0x92] sm:$0xff]
  %v3496 = vld [vmem:[#allocation4 + $0xa2] sm:$0xff]
  %v3497 = vld [vmem:[#allocation4 + $0xb2] sm:$0xff]
  %v3498 = vld [vmem:[#allocation4 + $0xc2] sm:$0xff]
  %v3499 = vld [vmem:[#allocation4 + $0xd2] sm:$0xff]
  %v3500 = vld [vmem:[#allocation4 + $0xe2] sm:$0xff]
  %v3501 = vld [vmem:[#allocation4 + $0xf2] sm:$0xff]
  %s3502 = scalar_lea.vmem %s6, 64
  %v3503 = vld [vmem:[%s3502] sm:$0xff]
  %v3504 = vld [vmem:[%s3502 + $0x8] sm:$0xff]
  %v3505 = vld [vmem:[%s3502 + $0x10] sm:$0xff]
  %v3506 = vld [vmem:[%s3502 + $0x18] sm:$0xff]
  %v3508 = vsel %vm3213, %v3488, 0
  %v3511 = vsel %vm3213, %v3489, 0
  %v3514 = vsel %vm3213, %v3490, 0
  %v3517 = vsel %vm3213, %v3491, 0
  %v3520 = vsel %vm3213, %v3492, 0
  %v3523 = vsel %vm3213, %v3493, 0
  %v3526 = vsel %vm3213, %v3494, 0
  %v3529 = vsel %vm3213, %v3495, 0
  %v3532 = vsel %vm3213, %v3496, 0
  %v3535 = vsel %vm3213, %v3497, 0
  %v3538 = vsel %vm3213, %v3498, 0
  %v3541 = vsel %vm3213, %v3499, 0
  %v3544 = vsel %vm3213, %v3500, 0
  %v3547 = vsel %vm3213, %v3501, 0
  %3549 = vmatprep.subr.mxu0 0.0
  %3550 = vmatpush1.msra.mxu0 %v3503
  %3551 = vmatprep.subr.mxu0 0.0
  %3552 = vmatpush1.msra.mxu0 %v3504
  %3553 = vmatprep.subr.mxu0 0.0
  %3554 = vmatpush1.msra.mxu0 %v3505
  %3555 = vmatprep.subr.mxu0 0.0
  %3556 = vmatpush1.msra.mxu0 %v3506
  %3557 = vmatprep.subr.mxu0 0.0
  %3558 = vmatpush1.msra.mxu0 0.0
  %3559 = vmatprep.subr.mxu0 0.0
  %3560 = vmatpush1.msra.mxu0 0.0
  %3561 = vmatprep.subr.mxu0 0.0
  %3562 = vmatpush1.msra.mxu0 0.0
  %3563 = vmatprep.subr.mxu0 0.0
  %3564 = vmatpush1.msra.mxu0 0.0
  %3565 = vmatprep.subr.mxu0 0.0
  %3566 = vmatpush1.msra.mxu0 0.0
  %3567 = vmatprep.subr.mxu0 0.0
  %3568 = vmatpush1.msra.mxu0 0.0
  %3569 = vmatprep.subr.mxu0 0.0
  %3570 = vmatpush1.msra.mxu0 0.0
  %3571 = vmatprep.subr.mxu0 0.0
  %3572 = vmatpush1.msra.mxu0 0.0
  %3573 = vmatprep.subr.mxu0 0.0
  %3574 = vmatpush1.msra.mxu0 0.0
  %3575 = vmatprep.subr.mxu0 0.0
  %3576 = vmatpush1.msra.mxu0 0.0
  %3577 = vmatprep.subr.mxu0 0.0
  %3578 = vmatpush1.msra.mxu0 0.0
  %3579 = vmatprep.subr.mxu0 0.0
  %3580 = vmatpush1.msra.mxu0 0.0
  %3581 = vmatprep.subr.mxu0 0.0
  %3582 = vmatpush1.msra.mxu0 0.0
  %3583 = vmatprep.subr.mxu0 0.0
  %3584 = vmatpush1.msra.mxu0 0.0
  %3585 = vmatprep.subr.mxu0 0.0
  %3586 = vmatpush1.msra.mxu0 0.0
  %3587 = vmatprep.subr.mxu0 0.0
  %3588 = vmatpush1.msra.mxu0 0.0
  %3589 = vmatprep.subr.mxu0 0.0
  %3590 = vmatpush1.msra.mxu0 0.0
  %3591 = vmatprep.subr.mxu0 0.0
  %3592 = vmatpush1.msra.mxu0 0.0
  %3593 = vmatprep.subr.mxu0 0.0
  %3594 = vmatpush1.msra.mxu0 0.0
  %3595 = vmatprep.subr.mxu0 0.0
  %3596 = vmatpush1.msra.mxu0 0.0
  %3597 = vmatprep.subr.mxu0 0.0
  %3598 = vmatpush1.msra.mxu0 0.0
  %3599 = vmatprep.subr.mxu0 0.0
  %3600 = vmatpush1.msra.mxu0 0.0
  %3601 = vmatprep.subr.mxu0 0.0
  %3602 = vmatpush1.msra.mxu0 0.0
  %3603 = vmatprep.subr.mxu0 0.0
  %3604 = vmatpush1.msra.mxu0 0.0
  %3605 = vmatprep.subr.mxu0 0.0
  %3606 = vmatpush1.msra.mxu0 0.0
  %3607 = vmatprep.subr.mxu0 0.0
  %3608 = vmatpush1.msra.mxu0 0.0
  %3609 = vmatprep.subr.mxu0 0.0
  %3610 = vmatpush1.msra.mxu0 0.0
  %3611 = vmatprep.subr.mxu0 0.0
  %3612 = vmatpush1.msra.mxu0 0.0
  %3613 = vmatprep.mubr.f32.mxu0 0.0
  %3614 = vmatmul.mubr.f32.gmra.mrb[0].mxu0 %v3508
  %v3615 = vpop.f32.mrb[0].mxu0
  %v3616 = vadd.f32 0.0, %v3615
  %v3617 = vpop.f32.mrb[0].mxu0
  %3618 = vmatprep.mubr.f32.mxu0 0.0
  %3619 = vmatmul.mubr.f32.gmra.mrb[0].mxu0 %v3511
  %v3620 = vpop.f32.mrb[0].mxu0
  %v3621 = vadd.f32 0.0, %v3620
  %v3622 = vpop.f32.mrb[0].mxu0
  %3623 = vmatprep.mubr.f32.mxu0 0.0
  %3624 = vmatmul.mubr.f32.gmra.mrb[0].mxu0 %v3514
  %v3625 = vpop.f32.mrb[0].mxu0
  %v3626 = vadd.f32 0.0, %v3625
  %v3627 = vpop.f32.mrb[0].mxu0
  %3628 = vmatprep.mubr.f32.mxu0 0.0
  %3629 = vmatmul.mubr.f32.gmra.mrb[0].mxu0 %v3517
  %v3630 = vpop.f32.mrb[0].mxu0
  %v3631 = vadd.f32 0.0, %v3630
  %v3632 = vpop.f32.mrb[0].mxu0
  %3633 = vmatprep.mubr.f32.mxu0 0.0
  %3634 = vmatmul.mubr.f32.gmra.mrb[0].mxu0 %v3520
  %v3635 = vpop.f32.mrb[0].mxu0
  %v3636 = vadd.f32 0.0, %v3635
  %v3637 = vpop.f32.mrb[0].mxu0
  %3638 = vmatprep.mubr.f32.mxu0 0.0
  %3639 = vmatmul.mubr.f32.gmra.mrb[0].mxu0 %v3523
  %v3640 = vpop.f32.mrb[0].mxu0
  %v3641 = vadd.f32 0.0, %v3640
  %v3642 = vpop.f32.mrb[0].mxu0
  %3643 = vmatprep.mubr.f32.mxu0 0.0
  %3644 = vmatmul.mubr.f32.gmra.mrb[0].mxu0 %v3526
  %v3645 = vpop.f32.mrb[0].mxu0
  %v3646 = vadd.f32 0.0, %v3645
  %v3647 = vpop.f32.mrb[0].mxu0
  %3648 = vmatprep.mubr.f32.mxu0 0.0
  %3649 = vmatmul.mubr.f32.gmra.mrb[0].mxu0 %v3529
  %v3650 = vpop.f32.mrb[0].mxu0
  %v3651 = vadd.f32 0.0, %v3650
  %v3652 = vpop.f32.mrb[0].mxu0
  %3653 = vmatprep.mubr.f32.mxu0 0.0
  %3654 = vmatmul.mubr.f32.gmra.mrb[0].mxu0 %v3532
  %v3655 = vpop.f32.mrb[0].mxu0
  %v3656 = vadd.f32 0.0, %v3655
  %v3657 = vpop.f32.mrb[0].mxu0
  %3658 = vmatprep.mubr.f32.mxu0 0.0
  %3659 = vmatmul.mubr.f32.gmra.mrb[0].mxu0 %v3535
  %v3660 = vpop.f32.mrb[0].mxu0
  %v3661 = vadd.f32 0.0, %v3660
  %v3662 = vpop.f32.mrb[0].mxu0
  %3663 = vmatprep.mubr.f32.mxu0 0.0
  %3664 = vmatmul.mubr.f32.gmra.mrb[0].mxu0 %v3538
  %v3665 = vpop.f32.mrb[0].mxu0
  %v3666 = vadd.f32 0.0, %v3665
  %v3667 = vpop.f32.mrb[0].mxu0
  %3668 = vmatprep.mubr.f32.mxu0 0.0
  %3669 = vmatmul.mubr.f32.gmra.mrb[0].mxu0 %v3541
  %v3670 = vpop.f32.mrb[0].mxu0
  %v3671 = vadd.f32 0.0, %v3670
  %v3672 = vpop.f32.mrb[0].mxu0
  %3673 = vmatprep.mubr.f32.mxu0 0.0
  %3674 = vmatmul.mubr.f32.gmra.mrb[0].mxu0 %v3544
  %v3675 = vpop.f32.mrb[0].mxu0
  %v3676 = vadd.f32 0.0, %v3675
  %v3677 = vpop.f32.mrb[0].mxu0
  %3678 = vmatprep.mubr.f32.mxu0 0.0
  %3679 = vmatmul.mubr.f32.gmra.mrb[0].mxu0 %v3547
  %v3680 = vpop.f32.mrb[0].mxu0
  %v3681 = vadd.f32 0.0, %v3680
  %v3682 = vpop.f32.mrb[0].mxu0
  %3683 = vdwg.mxu0
  %v3684 = vld [vmem:[%s3251] sm:$0xff]
  %v3685 = vld [vmem:[%s3251 + $0x10] sm:$0xff]
  %v3686 = vld [vmem:[%s3251 + $0x20] sm:$0xff]
  %v3687 = vld [vmem:[%s3251 + $0x30] sm:$0xff]
  %v3688 = vld [vmem:[%s3251 + $0x40] sm:$0xff]
  %v3689 = vld [vmem:[%s3251 + $0x50] sm:$0xff]
  %v3690 = vld [vmem:[%s3251 + $0x60] sm:$0xff]
  %v3691 = vld [vmem:[%s3251 + $0x90] sm:$0xff]
  %v3692 = vld [vmem:[%s3251 + $0xa0] sm:$0xff]
  %v3693 = vld [vmem:[%s3251 + $0xb0] sm:$0xff]
  %v3694 = vld [vmem:[%s3251 + $0xc0] sm:$0xff]
  %v3695 = vld [vmem:[%s3251 + $0xd0] sm:$0xff]
  %v3696 = vld [vmem:[%s3251 + $0xe0] sm:$0xff]
  %v3697 = vld [vmem:[%s3251 + $0xf0] sm:$0xff]
  %s3698 = scalar_lea.vmem %s6, 96
  %v3699 = vld [vmem:[%s3698] sm:$0xff]
  %v3700 = vld [vmem:[%s3698 + $0x8] sm:$0xff]
  %v3701 = vld [vmem:[%s3698 + $0x10] sm:$0xff]
  %v3702 = vld [vmem:[%s3698 + $0x18] sm:$0xff]
  %v3703 = vld [vmem:[%s3251 + $0x1] sm:$0xff]
  %v3704 = vld [vmem:[%s3251 + $0x11] sm:$0xff]
  %v3705 = vld [vmem:[%s3251 + $0x21] sm:$0xff]
  %v3706 = vld [vmem:[%s3251 + $0x31] sm:$0xff]
  %v3707 = vld [vmem:[%s3251 + $0x41] sm:$0xff]
  %v3708 = vld [vmem:[%s3251 + $0x51] sm:$0xff]
  %v3709 = vld [vmem:[%s3251 + $0x61] sm:$0xff]
  %v3710 = vld [vmem:[%s3251 + $0x91] sm:$0xff]
  %v3711 = vld [vmem:[%s3251 + $0xa1] sm:$0xff]
  %v3712 = vld [vmem:[%s3251 + $0xb1] sm:$0xff]
  %v3713 = vld [vmem:[%s3251 + $0xc1] sm:$0xff]
  %v3714 = vld [vmem:[%s3251 + $0xd1] sm:$0xff]
  %v3715 = vld [vmem:[%s3251 + $0xe1] sm:$0xff]
  %v3716 = vld [vmem:[%s3251 + $0xf1] sm:$0xff]
  %s3717 = scalar_lea.vmem %s6, 128
  %v3718 = vld [vmem:[%s3717] sm:$0xff]
  %v3719 = vld [vmem:[%s3717 + $0x8] sm:$0xff]
  %v3720 = vld [vmem:[%s3717 + $0x10] sm:$0xff]
  %v3721 = vld [vmem:[%s3717 + $0x18] sm:$0xff]
  %v3723 = vsel %vm3213, %v3703, 0
  %v3726 = vsel %vm3213, %v3704, 0
  %v3729 = vsel %vm3213, %v3705, 0
  %v3732 = vsel %vm3213, %v3706, 0
  %v3735 = vsel %vm3213, %v3707, 0
  %v3738 = vsel %vm3213, %v3708, 0
  %v3741 = vsel %vm3213, %v3709, 0
  %v3744 = vsel %vm3213, %v3710, 0
  %v3747 = vsel %vm3213, %v3711, 0
  %v3750 = vsel %vm3213, %v3712, 0
  %v3753 = vsel %vm3213, %v3713, 0
  %v3756 = vsel %vm3213, %v3714, 0
  %v3759 = vsel %vm3213, %v3715, 0
  %v3762 = vsel %vm3213, %v3716, 0
  %3764 = vmatprep.subr.mxu0 0.0
  %3765 = vmatpush1.msra.mxu0 %v3718
  %3766 = vmatprep.subr.mxu0 0.0
  %3767 = vmatpush1.msra.mxu0 %v3719
  %3768 = vmatprep.subr.mxu0 0.0
  %3769 = vmatpush1.msra.mxu0 %v3720
  %3770 = vmatprep.subr.mxu0 0.0
  %3771 = vmatpush1.msra.mxu0 %v3721
  %3772 = vmatprep.subr.mxu0 0.0
  %3773 = vmatpush1.msra.mxu0 0.0
  %3774 = vmatprep.subr.mxu0 0.0
  %3775 = vmatpush1.msra.mxu0 0.0
  %3776 = vmatprep.subr.mxu0 0.0
  %3777 = vmatpush1.msra.mxu0 0.0
  %3778 = vmatprep.subr.mxu0 0.0
  %3779 = vmatpush1.msra.mxu0 0.0
  %3780 = vmatprep.subr.mxu0 0.0
  %3781 = vmatpush1.msra.mxu0 0.0
  %3782 = vmatprep.subr.mxu0 0.0
  %3783 = vmatpush1.msra.mxu0 0.0
  %3784 = vmatprep.subr.mxu0 0.0
  %3785 = vmatpush1.msra.mxu0 0.0
  %3786 = vmatprep.subr.mxu0 0.0
  %3787 = vmatpush1.msra.mxu0 0.0
  %3788 = vmatprep.subr.mxu0 0.0
  %3789 = vmatpush1.msra.mxu0 0.0
  %3790 = vmatprep.subr.mxu0 0.0
  %3791 = vmatpush1.msra.mxu0 0.0
  %3792 = vmatprep.subr.mxu0 0.0
  %3793 = vmatpush1.msra.mxu0 0.0
  %3794 = vmatprep.subr.mxu0 0.0
  %3795 = vmatpush1.msra.mxu0 0.0
  %3796 = vmatprep.subr.mxu0 0.0
  %3797 = vmatpush1.msra.mxu0 0.0
  %3798 = vmatprep.subr.mxu0 0.0
  %3799 = vmatpush1.msra.mxu0 0.0
  %3800 = vmatprep.subr.mxu0 0.0
  %3801 = vmatpush1.msra.mxu0 0.0
  %3802 = vmatprep.subr.mxu0 0.0
  %3803 = vmatpush1.msra.mxu0 0.0
  %3804 = vmatprep.subr.mxu0 0.0
  %3805 = vmatpush1.msra.mxu0 0.0
  %3806 = vmatprep.subr.mxu0 0.0
  %3807 = vmatpush1.msra.mxu0 0.0
  %3808 = vmatprep.subr.mxu0 0.0
  %3809 = vmatpush1.msra.mxu0 0.0
  %3810 = vmatprep.subr.mxu0 0.0
  %3811 = vmatpush1.msra.mxu0 0.0
  %3812 = vmatprep.subr.mxu0 0.0
  %3813 = vmatpush1.msra.mxu0 0.0
  %3814 = vmatprep.subr.mxu0 0.0
  %3815 = vmatpush1.msra.mxu0 0.0
  %3816 = vmatprep.subr.mxu0 0.0
  %3817 = vmatpush1.msra.mxu0 0.0
  %3818 = vmatprep.subr.mxu0 0.0
  %3819 = vmatpush1.msra.mxu0 0.0
  %3820 = vmatprep.subr.mxu0 0.0
  %3821 = vmatpush1.msra.mxu0 0.0
  %3822 = vmatprep.subr.mxu0 0.0
  %3823 = vmatpush1.msra.mxu0 0.0
  %3824 = vmatprep.subr.mxu0 0.0
  %3825 = vmatpush1.msra.mxu0 0.0
  %3826 = vmatprep.subr.mxu0 0.0
  %3827 = vmatpush1.msra.mxu0 0.0
  %3828 = vmatprep.mubr.f32.mxu0 0.0
  %3829 = vmatmul.mubr.f32.gmra.mrb[0].mxu0 %v3723
  %v3830 = vpop.f32.mrb[0].mxu0
  %v3831 = vadd.f32 0.0, %v3830
  %v3832 = vpop.f32.mrb[0].mxu0
  %3833 = vmatprep.mubr.f32.mxu0 0.0
  %3834 = vmatmul.mubr.f32.gmra.mrb[0].mxu0 %v3726
  %v3835 = vpop.f32.mrb[0].mxu0
  %v3836 = vadd.f32 0.0, %v3835
  %v3837 = vpop.f32.mrb[0].mxu0
  %3838 = vmatprep.mubr.f32.mxu0 0.0
  %3839 = vmatmul.mubr.f32.gmra.mrb[0].mxu0 %v3729
  %v3840 = vpop.f32.mrb[0].mxu0
  %v3841 = vadd.f32 0.0, %v3840
  %v3842 = vpop.f32.mrb[0].mxu0
  %3843 = vmatprep.mubr.f32.mxu0 0.0
  %3844 = vmatmul.mubr.f32.gmra.mrb[0].mxu0 %v3732
  %v3845 = vpop.f32.mrb[0].mxu0
  %v3846 = vadd.f32 0.0, %v3845
  %v3847 = vpop.f32.mrb[0].mxu0
  %3848 = vmatprep.mubr.f32.mxu0 0.0
  %3849 = vmatmul.mubr.f32.gmra.mrb[0].mxu0 %v3735
  %v3850 = vpop.f32.mrb[0].mxu0
  %v3851 = vadd.f32 0.0, %v3850
  %v3852 = vpop.f32.mrb[0].mxu0
  %3853 = vmatprep.mubr.f32.mxu0 0.0
  %3854 = vmatmul.mubr.f32.gmra.mrb[0].mxu0 %v3738
  %v3855 = vpop.f32.mrb[0].mxu0
  %v3856 = vadd.f32 0.0, %v3855
  %v3857 = vpop.f32.mrb[0].mxu0
  %3858 = vmatprep.mubr.f32.mxu0 0.0
  %3859 = vmatmul.mubr.f32.gmra.mrb[0].mxu0 %v3741
  %v3860 = vpop.f32.mrb[0].mxu0
  %v3861 = vadd.f32 0.0, %v3860
  %v3862 = vpop.f32.mrb[0].mxu0
  %3863 = vmatprep.mubr.f32.mxu0 0.0
  %3864 = vmatmul.mubr.f32.gmra.mrb[0].mxu0 %v3744
  %v3865 = vpop.f32.mrb[0].mxu0
  %v3866 = vadd.f32 0.0, %v3865
  %v3867 = vpop.f32.mrb[0].mxu0
  %3868 = vmatprep.mubr.f32.mxu0 0.0
  %3869 = vmatmul.mubr.f32.gmra.mrb[0].mxu0 %v3747
  %v3870 = vpop.f32.mrb[0].mxu0
  %v3871 = vadd.f32 0.0, %v3870
  %v3872 = vpop.f32.mrb[0].mxu0
  %3873 = vmatprep.mubr.f32.mxu0 0.0
  %3874 = vmatmul.mubr.f32.gmra.mrb[0].mxu0 %v3750
  %v3875 = vpop.f32.mrb[0].mxu0
  %v3876 = vadd.f32 0.0, %v3875
  %v3877 = vpop.f32.mrb[0].mxu0
  %3878 = vmatprep.mubr.f32.mxu0 0.0
  %3879 = vmatmul.mubr.f32.gmra.mrb[0].mxu0 %v3753
  %v3880 = vpop.f32.mrb[0].mxu0
  %v3881 = vadd.f32 0.0, %v3880
  %v3882 = vpop.f32.mrb[0].mxu0
  %3883 = vmatprep.mubr.f32.mxu0 0.0
  %3884 = vmatmul.mubr.f32.gmra.mrb[0].mxu0 %v3756
  %v3885 = vpop.f32.mrb[0].mxu0
  %v3886 = vadd.f32 0.0, %v3885
  %v3887 = vpop.f32.mrb[0].mxu0
  %3888 = vmatprep.mubr.f32.mxu0 0.0
  %3889 = vmatmul.mubr.f32.gmra.mrb[0].mxu0 %v3759
  %v3890 = vpop.f32.mrb[0].mxu0
  %v3891 = vadd.f32 0.0, %v3890
  %v3892 = vpop.f32.mrb[0].mxu0
  %3893 = vmatprep.mubr.f32.mxu0 0.0
  %3894 = vmatmul.mubr.f32.gmra.mrb[0].mxu0 %v3762
  %v3895 = vpop.f32.mrb[0].mxu0
  %v3896 = vadd.f32 0.0, %v3895
  %v3897 = vpop.f32.mrb[0].mxu0
  %3898 = vdwg.mxu0
  %v3899 = vld [vmem:[%s3251 + $0x2] sm:$0xff]
  %v3900 = vld [vmem:[%s3251 + $0x12] sm:$0xff]
  %v3901 = vld [vmem:[%s3251 + $0x22] sm:$0xff]
  %v3902 = vld [vmem:[%s3251 + $0x32] sm:$0xff]
  %v3903 = vld [vmem:[%s3251 + $0x42] sm:$0xff]
  %v3904 = vld [vmem:[%s3251 + $0x52] sm:$0xff]
  %v3905 = vld [vmem:[%s3251 + $0x62] sm:$0xff]
  %v3906 = vld [vmem:[%s3251 + $0x92] sm:$0xff]
  %v3907 = vld [vmem:[%s3251 + $0xa2] sm:$0xff]
  %v3908 = vld [vmem:[%s3251 + $0xb2] sm:$0xff]
  %v3909 = vld [vmem:[%s3251 + $0xc2] sm:$0xff]
  %v3910 = vld [vmem:[%s3251 + $0xd2] sm:$0xff]
  %v3911 = vld [vmem:[%s3251 + $0xe2] sm:$0xff]
  %v3912 = vld [vmem:[%s3251 + $0xf2] sm:$0xff]
  %s3913 = scalar_lea.vmem %s6, 160
  %v3914 = vld [vmem:[%s3913] sm:$0xff]
  %v3915 = vld [vmem:[%s3913 + $0x8] sm:$0xff]
  %v3916 = vld [vmem:[%s3913 + $0x10] sm:$0xff]
  %v3917 = vld [vmem:[%s3913 + $0x18] sm:$0xff]
  %s3918 = scalar_lea.vmem [#allocation4], 32
  %v3919 = vld [vmem:[%s3918] sm:$0xff]
  %v3920 = vld [vmem:[%s3918 + $0x10] sm:$0xff]
  %v3921 = vld [vmem:[%s3918 + $0x20] sm:$0xff]
  %v3922 = vld [vmem:[%s3918 + $0x30] sm:$0xff]
  %v3923 = vld [vmem:[%s3918 + $0x40] sm:$0xff]
  %v3924 = vld [vmem:[%s3918 + $0x50] sm:$0xff]
  %v3925 = vld [vmem:[%s3918 + $0x60] sm:$0xff]
  %v3926 = vld [vmem:[%s3918 + $0x90] sm:$0xff]
  %v3927 = vld [vmem:[%s3918 + $0xa0] sm:$0xff]
  %v3928 = vld [vmem:[%s3918 + $0xb0] sm:$0xff]
  %v3929 = vld [vmem:[%s3918 + $0xc0] sm:$0xff]
  %v3930 = vld [vmem:[%s3918 + $0xd0] sm:$0xff]
  %v3931 = vld [vmem:[%s3918 + $0xe0] sm:$0xff]
  %v3932 = vld [vmem:[%s3918 + $0xf0] sm:$0xff]
  %s3933 = scalar_lea.vmem %s6, 192
  %v3934 = vld [vmem:[%s3933] sm:$0xff]
  %v3935 = vld [vmem:[%s3933 + $0x8] sm:$0xff]
  %v3936 = vld [vmem:[%s3933 + $0x10] sm:$0xff]
  %v3937 = vld [vmem:[%s3933 + $0x18] sm:$0xff]
  %v3939 = vsel %vm3213, %v3919, 0
  %v3942 = vsel %vm3213, %v3920, 0
  %v3945 = vsel %vm3213, %v3921, 0
  %v3948 = vsel %vm3213, %v3922, 0
  %v3951 = vsel %vm3213, %v3923, 0
  %v3954 = vsel %vm3213, %v3924, 0
  %v3957 = vsel %vm3213, %v3925, 0
  %v3960 = vsel %vm3213, %v3926, 0
  %v3963 = vsel %vm3213, %v3927, 0
  %v3966 = vsel %vm3213, %v3928, 0
  %v3969 = vsel %vm3213, %v3929, 0
  %v3972 = vsel %vm3213, %v3930, 0
  %v3975 = vsel %vm3213, %v3931, 0
  %v3978 = vsel %vm3213, %v3932, 0
  %3980 = vmatprep.subr.mxu0 0.0
  %3981 = vmatpush1.msra.mxu0 %v3934
  %3982 = vmatprep.subr.mxu0 0.0
  %3983 = vmatpush1.msra.mxu0 %v3935
  %3984 = vmatprep.subr.mxu0 0.0
  %3985 = vmatpush1.msra.mxu0 %v3936
  %3986 = vmatprep.subr.mxu0 0.0
  %3987 = vmatpush1.msra.mxu0 %v3937
  %3988 = vmatprep.subr.mxu0 0.0
  %3989 = vmatpush1.msra.mxu0 0.0
  %3990 = vmatprep.subr.mxu0 0.0
  %3991 = vmatpush1.msra.mxu0 0.0
  %3992 = vmatprep.subr.mxu0 0.0
  %3993 = vmatpush1.msra.mxu0 0.0
  %3994 = vmatprep.subr.mxu0 0.0
  %3995 = vmatpush1.msra.mxu0 0.0
  %3996 = vmatprep.subr.mxu0 0.0
  %3997 = vmatpush1.msra.mxu0 0.0
  %3998 = vmatprep.subr.mxu0 0.0
  %3999 = vmatpush1.msra.mxu0 0.0
  %4000 = vmatprep.subr.mxu0 0.0
  %4001 = vmatpush1.msra.mxu0 0.0
  %4002 = vmatprep.subr.mxu0 0.0
  %4003 = vmatpush1.msra.mxu0 0.0
  %4004 = vmatprep.subr.mxu0 0.0
  %4005 = vmatpush1.msra.mxu0 0.0
  %4006 = vmatprep.subr.mxu0 0.0
  %4007 = vmatpush1.msra.mxu0 0.0
  %4008 = vmatprep.subr.mxu0 0.0
  %4009 = vmatpush1.msra.mxu0 0.0
  %4010 = vmatprep.subr.mxu0 0.0
  %4011 = vmatpush1.msra.mxu0 0.0
  %4012 = vmatprep.subr.mxu0 0.0
  %4013 = vmatpush1.msra.mxu0 0.0
  %4014 = vmatprep.subr.mxu0 0.0
  %4015 = vmatpush1.msra.mxu0 0.0
  %4016 = vmatprep.subr.mxu0 0.0
  %4017 = vmatpush1.msra.mxu0 0.0
  %4018 = vmatprep.subr.mxu0 0.0
  %4019 = vmatpush1.msra.mxu0 0.0
  %4020 = vmatprep.subr.mxu0 0.0
  %4021 = vmatpush1.msra.mxu0 0.0
  %4022 = vmatprep.subr.mxu0 0.0
  %4023 = vmatpush1.msra.mxu0 0.0
  %4024 = vmatprep.subr.mxu0 0.0
  %4025 = vmatpush1.msra.mxu0 0.0
  %4026 = vmatprep.subr.mxu0 0.0
  %4027 = vmatpush1.msra.mxu0 0.0
  %4028 = vmatprep.subr.mxu0 0.0
  %4029 = vmatpush1.msra.mxu0 0.0
  %4030 = vmatprep.subr.mxu0 0.0
  %4031 = vmatpush1.msra.mxu0 0.0
  %4032 = vmatprep.subr.mxu0 0.0
  %4033 = vmatpush1.msra.mxu0 0.0
  %4034 = vmatprep.subr.mxu0 0.0
  %4035 = vmatpush1.msra.mxu0 0.0
  %4036 = vmatprep.subr.mxu0 0.0
  %4037 = vmatpush1.msra.mxu0 0.0
  %4038 = vmatprep.subr.mxu0 0.0
  %4039 = vmatpush1.msra.mxu0 0.0
  %4040 = vmatprep.subr.mxu0 0.0
  %4041 = vmatpush1.msra.mxu0 0.0
  %4042 = vmatprep.subr.mxu0 0.0
  %4043 = vmatpush1.msra.mxu0 0.0
  %4044 = vmatprep.mubr.f32.mxu0 0.0
  %4045 = vmatmul.mubr.f32.gmra.mrb[0].mxu0 %v3939
  %v4046 = vpop.f32.mrb[0].mxu0
  %v4047 = vadd.f32 0.0, %v4046
  %v4048 = vpop.f32.mrb[0].mxu0
  %4049 = vmatprep.mubr.f32.mxu0 0.0
  %4050 = vmatmul.mubr.f32.gmra.mrb[0].mxu0 %v3942
  %v4051 = vpop.f32.mrb[0].mxu0
  %v4052 = vadd.f32 0.0, %v4051
  %v4053 = vpop.f32.mrb[0].mxu0
  %4054 = vmatprep.mubr.f32.mxu0 0.0
  %4055 = vmatmul.mubr.f32.gmra.mrb[0].mxu0 %v3945
  %v4056 = vpop.f32.mrb[0].mxu0
  %v4057 = vadd.f32 0.0, %v4056
  %v4058 = vpop.f32.mrb[0].mxu0
  %4059 = vmatprep.mubr.f32.mxu0 0.0
  %4060 = vmatmul.mubr.f32.gmra.mrb[0].mxu0 %v3948
  %v4061 = vpop.f32.mrb[0].mxu0
  %v4062 = vadd.f32 0.0, %v4061
  %v4063 = vpop.f32.mrb[0].mxu0
  %4064 = vmatprep.mubr.f32.mxu0 0.0
  %4065 = vmatmul.mubr.f32.gmra.mrb[0].mxu0 %v3951
  %v4066 = vpop.f32.mrb[0].mxu0
  %v4067 = vadd.f32 0.0, %v4066
  %v4068 = vpop.f32.mrb[0].mxu0
  %4069 = vmatprep.mubr.f32.mxu0 0.0
  %4070 = vmatmul.mubr.f32.gmra.mrb[0].mxu0 %v3954
  %v4071 = vpop.f32.mrb[0].mxu0
  %v4072 = vadd.f32 0.0, %v4071
  %v4073 = vpop.f32.mrb[0].mxu0
  %4074 = vmatprep.mubr.f32.mxu0 0.0
  %4075 = vmatmul.mubr.f32.gmra.mrb[0].mxu0 %v3957
  %v4076 = vpop.f32.mrb[0].mxu0
  %v4077 = vadd.f32 0.0, %v4076
  %v4078 = vpop.f32.mrb[0].mxu0
  %4079 = vmatprep.mubr.f32.mxu0 0.0
  %4080 = vmatmul.mubr.f32.gmra.mrb[0].mxu0 %v3960
  %v4081 = vpop.f32.mrb[0].mxu0
  %v4082 = vadd.f32 0.0, %v4081
  %v4083 = vpop.f32.mrb[0].mxu0
  %4084 = vmatprep.mubr.f32.mxu0 0.0
  %4085 = vmatmul.mubr.f32.gmra.mrb[0].mxu0 %v3963
  %v4086 = vpop.f32.mrb[0].mxu0
  %v4087 = vadd.f32 0.0, %v4086
  %v4088 = vpop.f32.mrb[0].mxu0
  %4089 = vmatprep.mubr.f32.mxu0 0.0
  %4090 = vmatmul.mubr.f32.gmra.mrb[0].mxu0 %v3966
  %v4091 = vpop.f32.mrb[0].mxu0
  %v4092 = vadd.f32 0.0, %v4091
  %v4093 = vpop.f32.mrb[0].mxu0
  %4094 = vmatprep.mubr.f32.mxu0 0.0
  %4095 = vmatmul.mubr.f32.gmra.mrb[0].mxu0 %v3969
  %v4096 = vpop.f32.mrb[0].mxu0
  %v4097 = vadd.f32 0.0, %v4096
  %v4098 = vpop.f32.mrb[0].mxu0
  %4099 = vmatprep.mubr.f32.mxu0 0.0
  %4100 = vmatmul.mubr.f32.gmra.mrb[0].mxu0 %v3972
  %v4101 = vpop.f32.mrb[0].mxu0
  %v4102 = vadd.f32 0.0, %v4101
  %v4103 = vpop.f32.mrb[0].mxu0
  %4104 = vmatprep.mubr.f32.mxu0 0.0
  %4105 = vmatmul.mubr.f32.gmra.mrb[0].mxu0 %v3975
  %v4106 = vpop.f32.mrb[0].mxu0
  %v4107 = vadd.f32 0.0, %v4106
  %v4108 = vpop.f32.mrb[0].mxu0
  %4109 = vmatprep.mubr.f32.mxu0 0.0
  %4110 = vmatmul.mubr.f32.gmra.mrb[0].mxu0 %v3978
  %v4111 = vpop.f32.mrb[0].mxu0
  %v4112 = vadd.f32 0.0, %v4111
  %v4113 = vpop.f32.mrb[0].mxu0
  %4114 = vdwg.mxu0
  %v4115 = vld [vmem:[%s3918 + $0x1] sm:$0xff]
  %v4116 = vld [vmem:[%s3918 + $0x11] sm:$0xff]
  %v4117 = vld [vmem:[%s3918 + $0x21] sm:$0xff]
  %v4118 = vld [vmem:[%s3918 + $0x31] sm:$0xff]
  %v4119 = vld [vmem:[%s3918 + $0x41] sm:$0xff]
  %v4120 = vld [vmem:[%s3918 + $0x51] sm:$0xff]
  %v4121 = vld [vmem:[%s3918 + $0x61] sm:$0xff]
  %v4122 = vld [vmem:[%s3918 + $0x91] sm:$0xff]
  %v4123 = vld [vmem:[%s3918 + $0xa1] sm:$0xff]
  %v4124 = vld [vmem:[%s3918 + $0xb1] sm:$0xff]
  %v4125 = vld [vmem:[%s3918 + $0xc1] sm:$0xff]
  %v4126 = vld [vmem:[%s3918 + $0xd1] sm:$0xff]
  %v4127 = vld [vmem:[%s3918 + $0xe1] sm:$0xff]
  %v4128 = vld [vmem:[%s3918 + $0xf1] sm:$0xff]
  %s4129 = scalar_lea.vmem %s6, 224
  %v4130 = vld [vmem:[%s4129] sm:$0xff]
  %v4131 = vld [vmem:[%s4129 + $0x8] sm:$0xff]
  %v4132 = vld [vmem:[%s4129 + $0x10] sm:$0xff]
  %v4133 = vld [vmem:[%s4129 + $0x18] sm:$0xff]
  %v4134 = vld [vmem:[%s3918 + $0x2] sm:$0xff]
  %v4135 = vld [vmem:[%s3918 + $0x12] sm:$0xff]
  %v4136 = vld [vmem:[%s3918 + $0x22] sm:$0xff]
  %v4137 = vld [vmem:[%s3918 + $0x32] sm:$0xff]
  %v4138 = vld [vmem:[%s3918 + $0x42] sm:$0xff]
  %v4139 = vld [vmem:[%s3918 + $0x52] sm:$0xff]
  %v4140 = vld [vmem:[%s3918 + $0x62] sm:$0xff]
  %v4141 = vld [vmem:[%s3918 + $0x92] sm:$0xff]
  %v4142 = vld [vmem:[%s3918 + $0xa2] sm:$0xff]
  %v4143 = vld [vmem:[%s3918 + $0xb2] sm:$0xff]
  %v4144 = vld [vmem:[%s3918 + $0xc2] sm:$0xff]
  %v4145 = vld [vmem:[%s3918 + $0xd2] sm:$0xff]
  %v4146 = vld [vmem:[%s3918 + $0xe2] sm:$0xff]
  %v4147 = vld [vmem:[%s3918 + $0xf2] sm:$0xff]
  %s4148 = scalar_lea.vmem %s6, 256
  %v4149 = vld [vmem:[%s4148] sm:$0xff]
  %v4150 = vld [vmem:[%s4148 + $0x8] sm:$0xff]
  %v4151 = vld [vmem:[%s4148 + $0x10] sm:$0xff]
  %v4152 = vld [vmem:[%s4148 + $0x18] sm:$0xff]
  %v4154 = vsel %vm3213, %v4134, 0
  %v4157 = vsel %vm3213, %v4135, 0
  %v4160 = vsel %vm3213, %v4136, 0
  %v4163 = vsel %vm3213, %v4137, 0
  %v4166 = vsel %vm3213, %v4138, 0
  %v4169 = vsel %vm3213, %v4139, 0
  %v4172 = vsel %vm3213, %v4140, 0
  %v4175 = vsel %vm3213, %v4141, 0
  %v4178 = vsel %vm3213, %v4142, 0
  %v4181 = vsel %vm3213, %v4143, 0
  %v4184 = vsel %vm3213, %v4144, 0
  %v4187 = vsel %vm3213, %v4145, 0
  %v4190 = vsel %vm3213, %v4146, 0
  %v4193 = vsel %vm3213, %v4147, 0
  %4195 = vmatprep.subr.mxu0 0.0
  %4196 = vmatpush1.msra.mxu0 %v4149
  %4197 = vmatprep.subr.mxu0 0.0
  %4198 = vmatpush1.msra.mxu0 %v4150
  %4199 = vmatprep.subr.mxu0 0.0
  %4200 = vmatpush1.msra.mxu0 %v4151
  %4201 = vmatprep.subr.mxu0 0.0
  %4202 = vmatpush1.msra.mxu0 %v4152
  %4203 = vmatprep.subr.mxu0 0.0
  %4204 = vmatpush1.msra.mxu0 0.0
  %4205 = vmatprep.subr.mxu0 0.0
  %4206 = vmatpush1.msra.mxu0 0.0
  %4207 = vmatprep.subr.mxu0 0.0
  %4208 = vmatpush1.msra.mxu0 0.0
  %4209 = vmatprep.subr.mxu0 0.0
  %4210 = vmatpush1.msra.mxu0 0.0
  %4211 = vmatprep.subr.mxu0 0.0
  %4212 = vmatpush1.msra.mxu0 0.0
  %4213 = vmatprep.subr.mxu0 0.0
  %4214 = vmatpush1.msra.mxu0 0.0
  %4215 = vmatprep.subr.mxu0 0.0
  %4216 = vmatpush1.msra.mxu0 0.0
  %4217 = vmatprep.subr.mxu0 0.0
  %4218 = vmatpush1.msra.mxu0 0.0
  %4219 = vmatprep.subr.mxu0 0.0
  %4220 = vmatpush1.msra.mxu0 0.0
  %4221 = vmatprep.subr.mxu0 0.0
  %4222 = vmatpush1.msra.mxu0 0.0
  %4223 = vmatprep.subr.mxu0 0.0
  %4224 = vmatpush1.msra.mxu0 0.0
  %4225 = vmatprep.subr.mxu0 0.0
  %4226 = vmatpush1.msra.mxu0 0.0
  %4227 = vmatprep.subr.mxu0 0.0
  %4228 = vmatpush1.msra.mxu0 0.0
  %4229 = vmatprep.subr.mxu0 0.0
  %4230 = vmatpush1.msra.mxu0 0.0
  %4231 = vmatprep.subr.mxu0 0.0
  %4232 = vmatpush1.msra.mxu0 0.0
  %4233 = vmatprep.subr.mxu0 0.0
  %4234 = vmatpush1.msra.mxu0 0.0
  %4235 = vmatprep.subr.mxu0 0.0
  %4236 = vmatpush1.msra.mxu0 0.0
  %4237 = vmatprep.subr.mxu0 0.0
  %4238 = vmatpush1.msra.mxu0 0.0
  %4239 = vmatprep.subr.mxu0 0.0
  %4240 = vmatpush1.msra.mxu0 0.0
  %4241 = vmatprep.subr.mxu0 0.0
  %4242 = vmatpush1.msra.mxu0 0.0
  %4243 = vmatprep.subr.mxu0 0.0
  %4244 = vmatpush1.msra.mxu0 0.0
  %4245 = vmatprep.subr.mxu0 0.0
  %4246 = vmatpush1.msra.mxu0 0.0
  %4247 = vmatprep.subr.mxu0 0.0
  %4248 = vmatpush1.msra.mxu0 0.0
  %4249 = vmatprep.subr.mxu0 0.0
  %4250 = vmatpush1.msra.mxu0 0.0
  %4251 = vmatprep.subr.mxu0 0.0
  %4252 = vmatpush1.msra.mxu0 0.0
  %4253 = vmatprep.subr.mxu0 0.0
  %4254 = vmatpush1.msra.mxu0 0.0
  %4255 = vmatprep.subr.mxu0 0.0
  %4256 = vmatpush1.msra.mxu0 0.0
  %4257 = vmatprep.subr.mxu0 0.0
  %4258 = vmatpush1.msra.mxu0 0.0
  %4259 = vmatprep.mubr.f32.mxu0 0.0
  %4260 = vmatmul.mubr.f32.gmra.mrb[0].mxu0 %v4154
  %v4261 = vpop.f32.mrb[0].mxu0
  %v4262 = vadd.f32 0.0, %v4261
  %v4263 = vpop.f32.mrb[0].mxu0
  %4264 = vmatprep.mubr.f32.mxu0 0.0
  %4265 = vmatmul.mubr.f32.gmra.mrb[0].mxu0 %v4157
  %v4266 = vpop.f32.mrb[0].mxu0
  %v4267 = vadd.f32 0.0, %v4266
  %v4268 = vpop.f32.mrb[0].mxu0
  %4269 = vmatprep.mubr.f32.mxu0 0.0
  %4270 = vmatmul.mubr.f32.gmra.mrb[0].mxu0 %v4160
  %v4271 = vpop.f32.mrb[0].mxu0
  %v4272 = vadd.f32 0.0, %v4271
  %v4273 = vpop.f32.mrb[0].mxu0
  %4274 = vmatprep.mubr.f32.mxu0 0.0
  %4275 = vmatmul.mubr.f32.gmra.mrb[0].mxu0 %v4163
  %v4276 = vpop.f32.mrb[0].mxu0
  %v4277 = vadd.f32 0.0, %v4276
  %v4278 = vpop.f32.mrb[0].mxu0
  %4279 = vmatprep.mubr.f32.mxu0 0.0
  %4280 = vmatmul.mubr.f32.gmra.mrb[0].mxu0 %v4166
  %v4281 = vpop.f32.mrb[0].mxu0
  %v4282 = vadd.f32 0.0, %v4281
  %v4283 = vpop.f32.mrb[0].mxu0
  %4284 = vmatprep.mubr.f32.mxu0 0.0
  %4285 = vmatmul.mubr.f32.gmra.mrb[0].mxu0 %v4169
  %v4286 = vpop.f32.mrb[0].mxu0
  %v4287 = vadd.f32 0.0, %v4286
  %v4288 = vpop.f32.mrb[0].mxu0
  %4289 = vmatprep.mubr.f32.mxu0 0.0
  %4290 = vmatmul.mubr.f32.gmra.mrb[0].mxu0 %v4172
  %v4291 = vpop.f32.mrb[0].mxu0
  %v4292 = vadd.f32 0.0, %v4291
  %v4293 = vpop.f32.mrb[0].mxu0
  %4294 = vmatprep.mubr.f32.mxu0 0.0
  %4295 = vmatmul.mubr.f32.gmra.mrb[0].mxu0 %v4175
  %v4296 = vpop.f32.mrb[0].mxu0
  %v4297 = vadd.f32 0.0, %v4296
  %v4298 = vpop.f32.mrb[0].mxu0
  %4299 = vmatprep.mubr.f32.mxu0 0.0
  %4300 = vmatmul.mubr.f32.gmra.mrb[0].mxu0 %v4178
  %v4301 = vpop.f32.mrb[0].mxu0
  %v4302 = vadd.f32 0.0, %v4301
  %v4303 = vpop.f32.mrb[0].mxu0
  %4304 = vmatprep.mubr.f32.mxu0 0.0
  %4305 = vmatmul.mubr.f32.gmra.mrb[0].mxu0 %v4181
  %v4306 = vpop.f32.mrb[0].mxu0
  %v4307 = vadd.f32 0.0, %v4306
  %v4308 = vpop.f32.mrb[0].mxu0
  %4309 = vmatprep.mubr.f32.mxu0 0.0
  %4310 = vmatmul.mubr.f32.gmra.mrb[0].mxu0 %v4184
  %v4311 = vpop.f32.mrb[0].mxu0
  %v4312 = vadd.f32 0.0, %v4311
  %v4313 = vpop.f32.mrb[0].mxu0
  %4314 = vmatprep.mubr.f32.mxu0 0.0
  %4315 = vmatmul.mubr.f32.gmra.mrb[0].mxu0 %v4187
  %v4316 = vpop.f32.mrb[0].mxu0
  %v4317 = vadd.f32 0.0, %v4316
  %v4318 = vpop.f32.mrb[0].mxu0
  %4319 = vmatprep.mubr.f32.mxu0 0.0
  %4320 = vmatmul.mubr.f32.gmra.mrb[0].mxu0 %v4190
  %v4321 = vpop.f32.mrb[0].mxu0
  %v4322 = vadd.f32 0.0, %v4321
  %v4323 = vpop.f32.mrb[0].mxu0
  %4324 = vmatprep.mubr.f32.mxu0 0.0
  %4325 = vmatmul.mubr.f32.gmra.mrb[0].mxu0 %v4193
  %v4326 = vpop.f32.mrb[0].mxu0
  %v4327 = vadd.f32 0.0, %v4326
  %v4328 = vpop.f32.mrb[0].mxu0
  %4329 = vdwg.mxu0
  %v4330 = vadd.f32 %v3272, %v3401
  %v4331 = vadd.f32 %v3272, %v3406
  %v4332 = vadd.f32 %v3272, %v3411
  %v4333 = vadd.f32 %v3272, %v3416
  %v4334 = vadd.f32 %v3272, %v3421
  %v4335 = vadd.f32 %v3272, %v3426
  %v4336 = vadd.f32 %v3272, %v3431
  %v4337 = vadd.f32 %v3272, %v3436
  %v4338 = vadd.f32 %v3272, %v3441
  %v4339 = vadd.f32 %v3272, %v3446
  %v4340 = vadd.f32 %v3272, %v3451
  %v4341 = vadd.f32 %v3272, %v3456
  %v4342 = vadd.f32 %v3272, %v3461
  %v4343 = vadd.f32 %v3272, %v3466
  %v4345 = vsel %vm3213, %v3469, 0
  %v4348 = vsel %vm3213, %v3470, 0
  %v4351 = vsel %vm3213, %v3471, 0
  %v4354 = vsel %vm3213, %v3472, 0
  %v4357 = vsel %vm3213, %v3473, 0
  %v4360 = vsel %vm3213, %v3474, 0
  %v4363 = vsel %vm3213, %v3475, 0
  %v4366 = vsel %vm3213, %v3476, 0
  %v4369 = vsel %vm3213, %v3477, 0
  %v4372 = vsel %vm3213, %v3478, 0
  %v4375 = vsel %vm3213, %v3479, 0
  %v4378 = vsel %vm3213, %v3480, 0
  %v4381 = vsel %vm3213, %v3481, 0
  %v4384 = vsel %vm3213, %v3482, 0
  %4386 = vmatprep.subr.mxu0 0.0
  %4387 = vmatpush1.msra.mxu0 %v3484
  %4388 = vmatprep.subr.mxu0 0.0
  %4389 = vmatpush1.msra.mxu0 %v3485
  %4390 = vmatprep.subr.mxu0 0.0
  %4391 = vmatpush1.msra.mxu0 %v3486
  %4392 = vmatprep.subr.mxu0 0.0
  %4393 = vmatpush1.msra.mxu0 %v3487
  %4394 = vmatprep.subr.mxu0 0.0
  %4395 = vmatpush1.msra.mxu0 0.0
  %4396 = vmatprep.subr.mxu0 0.0
  %4397 = vmatpush1.msra.mxu0 0.0
  %4398 = vmatprep.subr.mxu0 0.0
  %4399 = vmatpush1.msra.mxu0 0.0
  %4400 = vmatprep.subr.mxu0 0.0
  %4401 = vmatpush1.msra.mxu0 0.0
  %4402 = vmatprep.subr.mxu0 0.0
  %4403 = vmatpush1.msra.mxu0 0.0
  %4404 = vmatprep.subr.mxu0 0.0
  %4405 = vmatpush1.msra.mxu0 0.0
  %4406 = vmatprep.subr.mxu0 0.0
  %4407 = vmatpush1.msra.mxu0 0.0
  %4408 = vmatprep.subr.mxu0 0.0
  %4409 = vmatpush1.msra.mxu0 0.0
  %4410 = vmatprep.subr.mxu0 0.0
  %4411 = vmatpush1.msra.mxu0 0.0
  %4412 = vmatprep.subr.mxu0 0.0
  %4413 = vmatpush1.msra.mxu0 0.0
  %4414 = vmatprep.subr.mxu0 0.0
  %4415 = vmatpush1.msra.mxu0 0.0
  %4416 = vmatprep.subr.mxu0 0.0
  %4417 = vmatpush1.msra.mxu0 0.0
  %4418 = vmatprep.subr.mxu0 0.0
  %4419 = vmatpush1.msra.mxu0 0.0
  %4420 = vmatprep.subr.mxu0 0.0
  %4421 = vmatpush1.msra.mxu0 0.0
  %4422 = vmatprep.subr.mxu0 0.0
  %4423 = vmatpush1.msra.mxu0 0.0
  %4424 = vmatprep.subr.mxu0 0.0
  %4425 = vmatpush1.msra.mxu0 0.0
  %4426 = vmatprep.subr.mxu0 0.0
  %4427 = vmatpush1.msra.mxu0 0.0
  %4428 = vmatprep.subr.mxu0 0.0
  %4429 = vmatpush1.msra.mxu0 0.0
  %4430 = vmatprep.subr.mxu0 0.0
  %4431 = vmatpush1.msra.mxu0 0.0
  %4432 = vmatprep.subr.mxu0 0.0
  %4433 = vmatpush1.msra.mxu0 0.0
  %4434 = vmatprep.subr.mxu0 0.0
  %4435 = vmatpush1.msra.mxu0 0.0
  %4436 = vmatprep.subr.mxu0 0.0
  %4437 = vmatpush1.msra.mxu0 0.0
  %4438 = vmatprep.subr.mxu0 0.0
  %4439 = vmatpush1.msra.mxu0 0.0
  %4440 = vmatprep.subr.mxu0 0.0
  %4441 = vmatpush1.msra.mxu0 0.0
  %4442 = vmatprep.subr.mxu0 0.0
  %4443 = vmatpush1.msra.mxu0 0.0
  %4444 = vmatprep.subr.mxu0 0.0
  %4445 = vmatpush1.msra.mxu0 0.0
  %4446 = vmatprep.subr.mxu0 0.0
  %4447 = vmatpush1.msra.mxu0 0.0
  %4448 = vmatprep.subr.mxu0 0.0
  %4449 = vmatpush1.msra.mxu0 0.0
  %4450 = vmatprep.mubr.f32.mxu0 0.0
  %4451 = vmatmul.mubr.f32.gmra.mrb[0].mxu0 %v4345
  %v4452 = vpop.f32.mrb[0].mxu0
  %v4453 = vadd.f32 %v3616, %v4452
  %v4454 = vpop.f32.mrb[0].mxu0
  %4455 = vmatprep.mubr.f32.mxu0 0.0
  %4456 = vmatmul.mubr.f32.gmra.mrb[0].mxu0 %v4348
  %v4457 = vpop.f32.mrb[0].mxu0
  %v4458 = vadd.f32 %v3621, %v4457
  %v4459 = vpop.f32.mrb[0].mxu0
  %4460 = vmatprep.mubr.f32.mxu0 0.0
  %4461 = vmatmul.mubr.f32.gmra.mrb[0].mxu0 %v4351
  %v4462 = vpop.f32.mrb[0].mxu0
  %v4463 = vadd.f32 %v3626, %v4462
  %v4464 = vpop.f32.mrb[0].mxu0
  %4465 = vmatprep.mubr.f32.mxu0 0.0
  %4466 = vmatmul.mubr.f32.gmra.mrb[0].mxu0 %v4354
  %v4467 = vpop.f32.mrb[0].mxu0
  %v4468 = vadd.f32 %v3631, %v4467
  %v4469 = vpop.f32.mrb[0].mxu0
  %4470 = vmatprep.mubr.f32.mxu0 0.0
  %4471 = vmatmul.mubr.f32.gmra.mrb[0].mxu0 %v4357
  %v4472 = vpop.f32.mrb[0].mxu0
  %v4473 = vadd.f32 %v3636, %v4472
  %v4474 = vpop.f32.mrb[0].mxu0
  %4475 = vmatprep.mubr.f32.mxu0 0.0
  %4476 = vmatmul.mubr.f32.gmra.mrb[0].mxu0 %v4360
  %v4477 = vpop.f32.mrb[0].mxu0
  %v4478 = vadd.f32 %v3641, %v4477
  %v4479 = vpop.f32.mrb[0].mxu0
  %4480 = vmatprep.mubr.f32.mxu0 0.0
  %4481 = vmatmul.mubr.f32.gmra.mrb[0].mxu0 %v4363
  %v4482 = vpop.f32.mrb[0].mxu0
  %v4483 = vadd.f32 %v3646, %v4482
  %v4484 = vpop.f32.mrb[0].mxu0
  %4485 = vmatprep.mubr.f32.mxu0 0.0
  %4486 = vmatmul.mubr.f32.gmra.mrb[0].mxu0 %v4366
  %v4487 = vpop.f32.mrb[0].mxu0
  %v4488 = vadd.f32 %v3651, %v4487
  %v4489 = vpop.f32.mrb[0].mxu0
  %4490 = vmatprep.mubr.f32.mxu0 0.0
  %4491 = vmatmul.mubr.f32.gmra.mrb[0].mxu0 %v4369
  %v4492 = vpop.f32.mrb[0].mxu0
  %v4493 = vadd.f32 %v3656, %v4492
  %v4494 = vpop.f32.mrb[0].mxu0
  %4495 = vmatprep.mubr.f32.mxu0 0.0
  %4496 = vmatmul.mubr.f32.gmra.mrb[0].mxu0 %v4372
  %v4497 = vpop.f32.mrb[0].mxu0
  %v4498 = vadd.f32 %v3661, %v4497
  %v4499 = vpop.f32.mrb[0].mxu0
  %4500 = vmatprep.mubr.f32.mxu0 0.0
  %4501 = vmatmul.mubr.f32.gmra.mrb[0].mxu0 %v4375
  %v4502 = vpop.f32.mrb[0].mxu0
  %v4503 = vadd.f32 %v3666, %v4502
  %v4504 = vpop.f32.mrb[0].mxu0
  %4505 = vmatprep.mubr.f32.mxu0 0.0
  %4506 = vmatmul.mubr.f32.gmra.mrb[0].mxu0 %v4378
  %v4507 = vpop.f32.mrb[0].mxu0
  %v4508 = vadd.f32 %v3671, %v4507
  %v4509 = vpop.f32.mrb[0].mxu0
  %4510 = vmatprep.mubr.f32.mxu0 0.0
  %4511 = vmatmul.mubr.f32.gmra.mrb[0].mxu0 %v4381
  %v4512 = vpop.f32.mrb[0].mxu0
  %v4513 = vadd.f32 %v3676, %v4512
  %v4514 = vpop.f32.mrb[0].mxu0
  %4515 = vmatprep.mubr.f32.mxu0 0.0
  %4516 = vmatmul.mubr.f32.gmra.mrb[0].mxu0 %v4384
  %v4517 = vpop.f32.mrb[0].mxu0
  %v4518 = vadd.f32 %v3681, %v4517
  %v4519 = vpop.f32.mrb[0].mxu0
  %4520 = vdwg.mxu0
  %v4522 = vsel %vm3213, %v3684, 0
  %v4525 = vsel %vm3213, %v3685, 0
  %v4528 = vsel %vm3213, %v3686, 0
  %v4531 = vsel %vm3213, %v3687, 0
  %v4534 = vsel %vm3213, %v3688, 0
  %v4537 = vsel %vm3213, %v3689, 0
  %v4540 = vsel %vm3213, %v3690, 0
  %v4543 = vsel %vm3213, %v3691, 0
  %v4546 = vsel %vm3213, %v3692, 0
  %v4549 = vsel %vm3213, %v3693, 0
  %v4552 = vsel %vm3213, %v3694, 0
  %v4555 = vsel %vm3213, %v3695, 0
  %v4558 = vsel %vm3213, %v3696, 0
  %v4561 = vsel %vm3213, %v3697, 0
  %4563 = vmatprep.subr.mxu0 0.0
  %4564 = vmatpush1.msra.mxu0 %v3699
  %4565 = vmatprep.subr.mxu0 0.0
  %4566 = vmatpush1.msra.mxu0 %v3700
  %4567 = vmatprep.subr.mxu0 0.0
  %4568 = vmatpush1.msra.mxu0 %v3701
  %4569 = vmatprep.subr.mxu0 0.0
  %4570 = vmatpush1.msra.mxu0 %v3702
  %4571 = vmatprep.subr.mxu0 0.0
  %4572 = vmatpush1.msra.mxu0 0.0
  %4573 = vmatprep.subr.mxu0 0.0
  %4574 = vmatpush1.msra.mxu0 0.0
  %4575 = vmatprep.subr.mxu0 0.0
  %4576 = vmatpush1.msra.mxu0 0.0
  %4577 = vmatprep.subr.mxu0 0.0
  %4578 = vmatpush1.msra.mxu0 0.0
  %4579 = vmatprep.subr.mxu0 0.0
  %4580 = vmatpush1.msra.mxu0 0.0
  %4581 = vmatprep.subr.mxu0 0.0
  %4582 = vmatpush1.msra.mxu0 0.0
  %4583 = vmatprep.subr.mxu0 0.0
  %4584 = vmatpush1.msra.mxu0 0.0
  %4585 = vmatprep.subr.mxu0 0.0
  %4586 = vmatpush1.msra.mxu0 0.0
  %4587 = vmatprep.subr.mxu0 0.0
  %4588 = vmatpush1.msra.mxu0 0.0
  %4589 = vmatprep.subr.mxu0 0.0
  %4590 = vmatpush1.msra.mxu0 0.0
  %4591 = vmatprep.subr.mxu0 0.0
  %4592 = vmatpush1.msra.mxu0 0.0
  %4593 = vmatprep.subr.mxu0 0.0
  %4594 = vmatpush1.msra.mxu0 0.0
  %4595 = vmatprep.subr.mxu0 0.0
  %4596 = vmatpush1.msra.mxu0 0.0
  %4597 = vmatprep.subr.mxu0 0.0
  %4598 = vmatpush1.msra.mxu0 0.0
  %4599 = vmatprep.subr.mxu0 0.0
  %4600 = vmatpush1.msra.mxu0 0.0
  %4601 = vmatprep.subr.mxu0 0.0
  %4602 = vmatpush1.msra.mxu0 0.0
  %4603 = vmatprep.subr.mxu0 0.0
  %4604 = vmatpush1.msra.mxu0 0.0
  %4605 = vmatprep.subr.mxu0 0.0
  %4606 = vmatpush1.msra.mxu0 0.0
  %4607 = vmatprep.subr.mxu0 0.0
  %4608 = vmatpush1.msra.mxu0 0.0
  %4609 = vmatprep.subr.mxu0 0.0
  %4610 = vmatpush1.msra.mxu0 0.0
  %4611 = vmatprep.subr.mxu0 0.0
  %4612 = vmatpush1.msra.mxu0 0.0
  %4613 = vmatprep.subr.mxu0 0.0
  %4614 = vmatpush1.msra.mxu0 0.0
  %4615 = vmatprep.subr.mxu0 0.0
  %4616 = vmatpush1.msra.mxu0 0.0
  %4617 = vmatprep.subr.mxu0 0.0
  %4618 = vmatpush1.msra.mxu0 0.0
  %4619 = vmatprep.subr.mxu0 0.0
  %4620 = vmatpush1.msra.mxu0 0.0
  %4621 = vmatprep.subr.mxu0 0.0
  %4622 = vmatpush1.msra.mxu0 0.0
  %4623 = vmatprep.subr.mxu0 0.0
  %4624 = vmatpush1.msra.mxu0 0.0
  %4625 = vmatprep.subr.mxu0 0.0
  %4626 = vmatpush1.msra.mxu0 0.0
  %4627 = vmatprep.mubr.f32.mxu0 0.0
  %4628 = vmatmul.mubr.f32.gmra.mrb[0].mxu0 %v4522
  %v4629 = vpop.f32.mrb[0].mxu0
  %v4630 = vadd.f32 %v3831, %v4629
  %v4631 = vpop.f32.mrb[0].mxu0
  %4632 = vmatprep.mubr.f32.mxu0 0.0
  %4633 = vmatmul.mubr.f32.gmra.mrb[0].mxu0 %v4525
  %v4634 = vpop.f32.mrb[0].mxu0
  %v4635 = vadd.f32 %v3836, %v4634
  %v4636 = vpop.f32.mrb[0].mxu0
  %4637 = vmatprep.mubr.f32.mxu0 0.0
  %4638 = vmatmul.mubr.f32.gmra.mrb[0].mxu0 %v4528
  %v4639 = vpop.f32.mrb[0].mxu0
  %v4640 = vadd.f32 %v3841, %v4639
  %v4641 = vpop.f32.mrb[0].mxu0
  %4642 = vmatprep.mubr.f32.mxu0 0.0
  %4643 = vmatmul.mubr.f32.gmra.mrb[0].mxu0 %v4531
  %v4644 = vpop.f32.mrb[0].mxu0
  %v4645 = vadd.f32 %v3846, %v4644
  %v4646 = vpop.f32.mrb[0].mxu0
  %4647 = vmatprep.mubr.f32.mxu0 0.0
  %4648 = vmatmul.mubr.f32.gmra.mrb[0].mxu0 %v4534
  %v4649 = vpop.f32.mrb[0].mxu0
  %v4650 = vadd.f32 %v3851, %v4649
  %v4651 = vpop.f32.mrb[0].mxu0
  %4652 = vmatprep.mubr.f32.mxu0 0.0
  %4653 = vmatmul.mubr.f32.gmra.mrb[0].mxu0 %v4537
  %v4654 = vpop.f32.mrb[0].mxu0
  %v4655 = vadd.f32 %v3856, %v4654
  %v4656 = vpop.f32.mrb[0].mxu0
  %4657 = vmatprep.mubr.f32.mxu0 0.0
  %4658 = vmatmul.mubr.f32.gmra.mrb[0].mxu0 %v4540
  %v4659 = vpop.f32.mrb[0].mxu0
  %v4660 = vadd.f32 %v3861, %v4659
  %v4661 = vpop.f32.mrb[0].mxu0
  %4662 = vmatprep.mubr.f32.mxu0 0.0
  %4663 = vmatmul.mubr.f32.gmra.mrb[0].mxu0 %v4543
  %v4664 = vpop.f32.mrb[0].mxu0
  %v4665 = vadd.f32 %v3866, %v4664
  %v4666 = vpop.f32.mrb[0].mxu0
  %4667 = vmatprep.mubr.f32.mxu0 0.0
  %4668 = vmatmul.mubr.f32.gmra.mrb[0].mxu0 %v4546
  %v4669 = vpop.f32.mrb[0].mxu0
  %v4670 = vadd.f32 %v3871, %v4669
  %v4671 = vpop.f32.mrb[0].mxu0
  %4672 = vmatprep.mubr.f32.mxu0 0.0
  %4673 = vmatmul.mubr.f32.gmra.mrb[0].mxu0 %v4549
  %v4674 = vpop.f32.mrb[0].mxu0
  %v4675 = vadd.f32 %v3876, %v4674
  %v4676 = vpop.f32.mrb[0].mxu0
  %4677 = vmatprep.mubr.f32.mxu0 0.0
  %4678 = vmatmul.mubr.f32.gmra.mrb[0].mxu0 %v4552
  %v4679 = vpop.f32.mrb[0].mxu0
  %v4680 = vadd.f32 %v3881, %v4679
  %v4681 = vpop.f32.mrb[0].mxu0
  %4682 = vmatprep.mubr.f32.mxu0 0.0
  %4683 = vmatmul.mubr.f32.gmra.mrb[0].mxu0 %v4555
  %v4684 = vpop.f32.mrb[0].mxu0
  %v4685 = vadd.f32 %v3886, %v4684
  %v4686 = vpop.f32.mrb[0].mxu0
  %4687 = vmatprep.mubr.f32.mxu0 0.0
  %4688 = vmatmul.mubr.f32.gmra.mrb[0].mxu0 %v4558
  %v4689 = vpop.f32.mrb[0].mxu0
  %v4690 = vadd.f32 %v3891, %v4689
  %v4691 = vpop.f32.mrb[0].mxu0
  %4692 = vmatprep.mubr.f32.mxu0 0.0
  %4693 = vmatmul.mubr.f32.gmra.mrb[0].mxu0 %v4561
  %v4694 = vpop.f32.mrb[0].mxu0
  %v4695 = vadd.f32 %v3896, %v4694
  %v4696 = vpop.f32.mrb[0].mxu0
  %4697 = vdwg.mxu0
  %v4699 = vsel %vm3213, %v3899, 0
  %v4702 = vsel %vm3213, %v3900, 0
  %v4705 = vsel %vm3213, %v3901, 0
  %v4708 = vsel %vm3213, %v3902, 0
  %v4711 = vsel %vm3213, %v3903, 0
  %v4714 = vsel %vm3213, %v3904, 0
  %v4717 = vsel %vm3213, %v3905, 0
  %v4720 = vsel %vm3213, %v3906, 0
  %v4723 = vsel %vm3213, %v3907, 0
  %v4726 = vsel %vm3213, %v3908, 0
  %v4729 = vsel %vm3213, %v3909, 0
  %v4732 = vsel %vm3213, %v3910, 0
  %v4735 = vsel %vm3213, %v3911, 0
  %v4738 = vsel %vm3213, %v3912, 0
  %4740 = vmatprep.subr.mxu0 0.0
  %4741 = vmatpush1.msra.mxu0 %v3914
  %4742 = vmatprep.subr.mxu0 0.0
  %4743 = vmatpush1.msra.mxu0 %v3915
  %4744 = vmatprep.subr.mxu0 0.0
  %4745 = vmatpush1.msra.mxu0 %v3916
  %4746 = vmatprep.subr.mxu0 0.0
  %4747 = vmatpush1.msra.mxu0 %v3917
  %4748 = vmatprep.subr.mxu0 0.0
  %4749 = vmatpush1.msra.mxu0 0.0
  %4750 = vmatprep.subr.mxu0 0.0
  %4751 = vmatpush1.msra.mxu0 0.0
  %4752 = vmatprep.subr.mxu0 0.0
  %4753 = vmatpush1.msra.mxu0 0.0
  %4754 = vmatprep.subr.mxu0 0.0
  %4755 = vmatpush1.msra.mxu0 0.0
  %4756 = vmatprep.subr.mxu0 0.0
  %4757 = vmatpush1.msra.mxu0 0.0
  %4758 = vmatprep.subr.mxu0 0.0
  %4759 = vmatpush1.msra.mxu0 0.0
  %4760 = vmatprep.subr.mxu0 0.0
  %4761 = vmatpush1.msra.mxu0 0.0
  %4762 = vmatprep.subr.mxu0 0.0
  %4763 = vmatpush1.msra.mxu0 0.0
  %4764 = vmatprep.subr.mxu0 0.0
  %4765 = vmatpush1.msra.mxu0 0.0
  %4766 = vmatprep.subr.mxu0 0.0
  %4767 = vmatpush1.msra.mxu0 0.0
  %4768 = vmatprep.subr.mxu0 0.0
  %4769 = vmatpush1.msra.mxu0 0.0
  %4770 = vmatprep.subr.mxu0 0.0
  %4771 = vmatpush1.msra.mxu0 0.0
  %4772 = vmatprep.subr.mxu0 0.0
  %4773 = vmatpush1.msra.mxu0 0.0
  %4774 = vmatprep.subr.mxu0 0.0
  %4775 = vmatpush1.msra.mxu0 0.0
  %4776 = vmatprep.subr.mxu0 0.0
  %4777 = vmatpush1.msra.mxu0 0.0
  %4778 = vmatprep.subr.mxu0 0.0
  %4779 = vmatpush1.msra.mxu0 0.0
  %4780 = vmatprep.subr.mxu0 0.0
  %4781 = vmatpush1.msra.mxu0 0.0
  %4782 = vmatprep.subr.mxu0 0.0
  %4783 = vmatpush1.msra.mxu0 0.0
  %4784 = vmatprep.subr.mxu0 0.0
  %4785 = vmatpush1.msra.mxu0 0.0
  %4786 = vmatprep.subr.mxu0 0.0
  %4787 = vmatpush1.msra.mxu0 0.0
  %4788 = vmatprep.subr.mxu0 0.0
  %4789 = vmatpush1.msra.mxu0 0.0
  %4790 = vmatprep.subr.mxu0 0.0
  %4791 = vmatpush1.msra.mxu0 0.0
  %4792 = vmatprep.subr.mxu0 0.0
  %4793 = vmatpush1.msra.mxu0 0.0
  %4794 = vmatprep.subr.mxu0 0.0
  %4795 = vmatpush1.msra.mxu0 0.0
  %4796 = vmatprep.subr.mxu0 0.0
  %4797 = vmatpush1.msra.mxu0 0.0
  %4798 = vmatprep.subr.mxu0 0.0
  %4799 = vmatpush1.msra.mxu0 0.0
  %4800 = vmatprep.subr.mxu0 0.0
  %4801 = vmatpush1.msra.mxu0 0.0
  %4802 = vmatprep.subr.mxu0 0.0
  %4803 = vmatpush1.msra.mxu0 0.0
  %4804 = vmatprep.mubr.f32.mxu0 0.0
  %4805 = vmatmul.mubr.f32.gmra.mrb[0].mxu0 %v4699
  %v4806 = vpop.f32.mrb[0].mxu0
  %v4807 = vadd.f32 %v4047, %v4806
  %v4808 = vpop.f32.mrb[0].mxu0
  %4809 = vmatprep.mubr.f32.mxu0 0.0
  %4810 = vmatmul.mubr.f32.gmra.mrb[0].mxu0 %v4702
  %v4811 = vpop.f32.mrb[0].mxu0
  %v4812 = vadd.f32 %v4052, %v4811
  %v4813 = vpop.f32.mrb[0].mxu0
  %4814 = vmatprep.mubr.f32.mxu0 0.0
  %4815 = vmatmul.mubr.f32.gmra.mrb[0].mxu0 %v4705
  %v4816 = vpop.f32.mrb[0].mxu0
  %v4817 = vadd.f32 %v4057, %v4816
  %v4818 = vpop.f32.mrb[0].mxu0
  %4819 = vmatprep.mubr.f32.mxu0 0.0
  %4820 = vmatmul.mubr.f32.gmra.mrb[0].mxu0 %v4708
  %v4821 = vpop.f32.mrb[0].mxu0
  %v4822 = vadd.f32 %v4062, %v4821
  %v4823 = vpop.f32.mrb[0].mxu0
  %4824 = vmatprep.mubr.f32.mxu0 0.0
  %4825 = vmatmul.mubr.f32.gmra.mrb[0].mxu0 %v4711
  %v4826 = vpop.f32.mrb[0].mxu0
  %v4827 = vadd.f32 %v4067, %v4826
  %v4828 = vpop.f32.mrb[0].mxu0
  %4829 = vmatprep.mubr.f32.mxu0 0.0
  %4830 = vmatmul.mubr.f32.gmra.mrb[0].mxu0 %v4714
  %v4831 = vpop.f32.mrb[0].mxu0
  %v4832 = vadd.f32 %v4072, %v4831
  %v4833 = vpop.f32.mrb[0].mxu0
  %4834 = vmatprep.mubr.f32.mxu0 0.0
  %4835 = vmatmul.mubr.f32.gmra.mrb[0].mxu0 %v4717
  %v4836 = vpop.f32.mrb[0].mxu0
  %v4837 = vadd.f32 %v4077, %v4836
  %v4838 = vpop.f32.mrb[0].mxu0
  %4839 = vmatprep.mubr.f32.mxu0 0.0
  %4840 = vmatmul.mubr.f32.gmra.mrb[0].mxu0 %v4720
  %v4841 = vpop.f32.mrb[0].mxu0
  %v4842 = vadd.f32 %v4082, %v4841
  %v4843 = vpop.f32.mrb[0].mxu0
  %4844 = vmatprep.mubr.f32.mxu0 0.0
  %4845 = vmatmul.mubr.f32.gmra.mrb[0].mxu0 %v4723
  %v4846 = vpop.f32.mrb[0].mxu0
  %v4847 = vadd.f32 %v4087, %v4846
  %v4848 = vpop.f32.mrb[0].mxu0
  %4849 = vmatprep.mubr.f32.mxu0 0.0
  %4850 = vmatmul.mubr.f32.gmra.mrb[0].mxu0 %v4726
  %v4851 = vpop.f32.mrb[0].mxu0
  %v4852 = vadd.f32 %v4092, %v4851
  %v4853 = vpop.f32.mrb[0].mxu0
  %4854 = vmatprep.mubr.f32.mxu0 0.0
  %4855 = vmatmul.mubr.f32.gmra.mrb[0].mxu0 %v4729
  %v4856 = vpop.f32.mrb[0].mxu0
  %v4857 = vadd.f32 %v4097, %v4856
  %v4858 = vpop.f32.mrb[0].mxu0
  %4859 = vmatprep.mubr.f32.mxu0 0.0
  %4860 = vmatmul.mubr.f32.gmra.mrb[0].mxu0 %v4732
  %v4861 = vpop.f32.mrb[0].mxu0
  %v4862 = vadd.f32 %v4102, %v4861
  %v4863 = vpop.f32.mrb[0].mxu0
  %4864 = vmatprep.mubr.f32.mxu0 0.0
  %4865 = vmatmul.mubr.f32.gmra.mrb[0].mxu0 %v4735
  %v4866 = vpop.f32.mrb[0].mxu0
  %v4867 = vadd.f32 %v4107, %v4866
  %v4868 = vpop.f32.mrb[0].mxu0
  %4869 = vmatprep.mubr.f32.mxu0 0.0
  %4870 = vmatmul.mubr.f32.gmra.mrb[0].mxu0 %v4738
  %v4871 = vpop.f32.mrb[0].mxu0
  %v4872 = vadd.f32 %v4112, %v4871
  %v4873 = vpop.f32.mrb[0].mxu0
  %4874 = vdwg.mxu0
  %v4876 = vsel %vm3213, %v4115, 0
  %v4879 = vsel %vm3213, %v4116, 0
  %v4882 = vsel %vm3213, %v4117, 0
  %v4885 = vsel %vm3213, %v4118, 0
  %v4888 = vsel %vm3213, %v4119, 0
  %v4891 = vsel %vm3213, %v4120, 0
  %v4894 = vsel %vm3213, %v4121, 0
  %v4897 = vsel %vm3213, %v4122, 0
  %v4900 = vsel %vm3213, %v4123, 0
  %v4903 = vsel %vm3213, %v4124, 0
  %v4906 = vsel %vm3213, %v4125, 0
  %v4909 = vsel %vm3213, %v4126, 0
  %v4912 = vsel %vm3213, %v4127, 0
  %v4915 = vsel %vm3213, %v4128, 0
  %4917 = vmatprep.subr.mxu0 0.0
  %4918 = vmatpush1.msra.mxu0 %v4130
  %4919 = vmatprep.subr.mxu0 0.0
  %4920 = vmatpush1.msra.mxu0 %v4131
  %4921 = vmatprep.subr.mxu0 0.0
  %4922 = vmatpush1.msra.mxu0 %v4132
  %4923 = vmatprep.subr.mxu0 0.0
  %4924 = vmatpush1.msra.mxu0 %v4133
  %4925 = vmatprep.subr.mxu0 0.0
  %4926 = vmatpush1.msra.mxu0 0.0
  %4927 = vmatprep.subr.mxu0 0.0
  %4928 = vmatpush1.msra.mxu0 0.0
  %4929 = vmatprep.subr.mxu0 0.0
  %4930 = vmatpush1.msra.mxu0 0.0
  %4931 = vmatprep.subr.mxu0 0.0
  %4932 = vmatpush1.msra.mxu0 0.0
  %4933 = vmatprep.subr.mxu0 0.0
  %4934 = vmatpush1.msra.mxu0 0.0
  %4935 = vmatprep.subr.mxu0 0.0
  %4936 = vmatpush1.msra.mxu0 0.0
  %4937 = vmatprep.subr.mxu0 0.0
  %4938 = vmatpush1.msra.mxu0 0.0
  %4939 = vmatprep.subr.mxu0 0.0
  %4940 = vmatpush1.msra.mxu0 0.0
  %4941 = vmatprep.subr.mxu0 0.0
  %4942 = vmatpush1.msra.mxu0 0.0
  %4943 = vmatprep.subr.mxu0 0.0
  %4944 = vmatpush1.msra.mxu0 0.0
  %4945 = vmatprep.subr.mxu0 0.0
  %4946 = vmatpush1.msra.mxu0 0.0
  %4947 = vmatprep.subr.mxu0 0.0
  %4948 = vmatpush1.msra.mxu0 0.0
  %4949 = vmatprep.subr.mxu0 0.0
  %4950 = vmatpush1.msra.mxu0 0.0
  %4951 = vmatprep.subr.mxu0 0.0
  %4952 = vmatpush1.msra.mxu0 0.0
  %4953 = vmatprep.subr.mxu0 0.0
  %4954 = vmatpush1.msra.mxu0 0.0
  %4955 = vmatprep.subr.mxu0 0.0
  %4956 = vmatpush1.msra.mxu0 0.0
  %4957 = vmatprep.subr.mxu0 0.0
  %4958 = vmatpush1.msra.mxu0 0.0
  %4959 = vmatprep.subr.mxu0 0.0
  %4960 = vmatpush1.msra.mxu0 0.0
  %4961 = vmatprep.subr.mxu0 0.0
  %4962 = vmatpush1.msra.mxu0 0.0
  %4963 = vmatprep.subr.mxu0 0.0
  %4964 = vmatpush1.msra.mxu0 0.0
  %4965 = vmatprep.subr.mxu0 0.0
  %4966 = vmatpush1.msra.mxu0 0.0
  %4967 = vmatprep.subr.mxu0 0.0
  %4968 = vmatpush1.msra.mxu0 0.0
  %4969 = vmatprep.subr.mxu0 0.0
  %4970 = vmatpush1.msra.mxu0 0.0
  %4971 = vmatprep.subr.mxu0 0.0
  %4972 = vmatpush1.msra.mxu0 0.0
  %4973 = vmatprep.subr.mxu0 0.0
  %4974 = vmatpush1.msra.mxu0 0.0
  %4975 = vmatprep.subr.mxu0 0.0
  %4976 = vmatpush1.msra.mxu0 0.0
  %4977 = vmatprep.subr.mxu0 0.0
  %4978 = vmatpush1.msra.mxu0 0.0
  %4979 = vmatprep.subr.mxu0 0.0
  %4980 = vmatpush1.msra.mxu0 0.0
  %4981 = vmatprep.mubr.f32.mxu0 0.0
  %4982 = vmatmul.mubr.f32.gmra.mrb[0].mxu0 %v4876
  %v4983 = vpop.f32.mrb[0].mxu0
  %v4984 = vadd.f32 %v4262, %v4983
  %v4985 = vpop.f32.mrb[0].mxu0
  %4986 = vmatprep.mubr.f32.mxu0 0.0
  %4987 = vmatmul.mubr.f32.gmra.mrb[0].mxu0 %v4879
  %v4988 = vpop.f32.mrb[0].mxu0
  %v4989 = vadd.f32 %v4267, %v4988
  %v4990 = vpop.f32.mrb[0].mxu0
  %4991 = vmatprep.mubr.f32.mxu0 0.0
  %4992 = vmatmul.mubr.f32.gmra.mrb[0].mxu0 %v4882
  %v4993 = vpop.f32.mrb[0].mxu0
  %v4994 = vadd.f32 %v4272, %v4993
  %v4995 = vpop.f32.mrb[0].mxu0
  %4996 = vmatprep.mubr.f32.mxu0 0.0
  %4997 = vmatmul.mubr.f32.gmra.mrb[0].mxu0 %v4885
  %v4998 = vpop.f32.mrb[0].mxu0
  %v4999 = vadd.f32 %v4277, %v4998
  %v5000 = vpop.f32.mrb[0].mxu0
  %5001 = vmatprep.mubr.f32.mxu0 0.0
  %5002 = vmatmul.mubr.f32.gmra.mrb[0].mxu0 %v4888
  %v5003 = vpop.f32.mrb[0].mxu0
  %v5004 = vadd.f32 %v4282, %v5003
  %v5005 = vpop.f32.mrb[0].mxu0
  %5006 = vmatprep.mubr.f32.mxu0 0.0
  %5007 = vmatmul.mubr.f32.gmra.mrb[0].mxu0 %v4891
  %v5008 = vpop.f32.mrb[0].mxu0
  %v5009 = vadd.f32 %v4287, %v5008
  %v5010 = vpop.f32.mrb[0].mxu0
  %5011 = vmatprep.mubr.f32.mxu0 0.0
  %5012 = vmatmul.mubr.f32.gmra.mrb[0].mxu0 %v4894
  %v5013 = vpop.f32.mrb[0].mxu0
  %v5014 = vadd.f32 %v4292, %v5013
  %v5015 = vpop.f32.mrb[0].mxu0
  %5016 = vmatprep.mubr.f32.mxu0 0.0
  %5017 = vmatmul.mubr.f32.gmra.mrb[0].mxu0 %v4897
  %v5018 = vpop.f32.mrb[0].mxu0
  %v5019 = vadd.f32 %v4297, %v5018
  %v5020 = vpop.f32.mrb[0].mxu0
  %5021 = vmatprep.mubr.f32.mxu0 0.0
  %5022 = vmatmul.mubr.f32.gmra.mrb[0].mxu0 %v4900
  %v5023 = vpop.f32.mrb[0].mxu0
  %v5024 = vadd.f32 %v4302, %v5023
  %v5025 = vpop.f32.mrb[0].mxu0
  %5026 = vmatprep.mubr.f32.mxu0 0.0
  %5027 = vmatmul.mubr.f32.gmra.mrb[0].mxu0 %v4903
  %v5028 = vpop.f32.mrb[0].mxu0
  %v5029 = vadd.f32 %v4307, %v5028
  %v5030 = vpop.f32.mrb[0].mxu0
  %5031 = vmatprep.mubr.f32.mxu0 0.0
  %5032 = vmatmul.mubr.f32.gmra.mrb[0].mxu0 %v4906
  %v5033 = vpop.f32.mrb[0].mxu0
  %v5034 = vadd.f32 %v4312, %v5033
  %v5035 = vpop.f32.mrb[0].mxu0
  %5036 = vmatprep.mubr.f32.mxu0 0.0
  %5037 = vmatmul.mubr.f32.gmra.mrb[0].mxu0 %v4909
  %v5038 = vpop.f32.mrb[0].mxu0
  %v5039 = vadd.f32 %v4317, %v5038
  %v5040 = vpop.f32.mrb[0].mxu0
  %5041 = vmatprep.mubr.f32.mxu0 0.0
  %5042 = vmatmul.mubr.f32.gmra.mrb[0].mxu0 %v4912
  %v5043 = vpop.f32.mrb[0].mxu0
  %v5044 = vadd.f32 %v4322, %v5043
  %v5045 = vpop.f32.mrb[0].mxu0
  %5046 = vmatprep.mubr.f32.mxu0 0.0
  %5047 = vmatmul.mubr.f32.gmra.mrb[0].mxu0 %v4915
  %v5048 = vpop.f32.mrb[0].mxu0
  %v5049 = vadd.f32 %v4327, %v5048
  %v5050 = vpop.f32.mrb[0].mxu0
  %5051 = vdwg.mxu0
  %v5052 = vadd.f32 %v4330, %v4453
  %v5053 = vadd.f32 %v4331, %v4458
  %v5054 = vadd.f32 %v4332, %v4463
  %v5055 = vadd.f32 %v4333, %v4468
  %v5056 = vadd.f32 %v4334, %v4473
  %v5057 = vadd.f32 %v4335, %v4478
  %v5058 = vadd.f32 %v4336, %v4483
  %v5059 = vadd.f32 %v4337, %v4488
  %v5060 = vadd.f32 %v4338, %v4493
  %v5061 = vadd.f32 %v4339, %v4498
  %v5062 = vadd.f32 %v4340, %v4503
  %v5063 = vadd.f32 %v4341, %v4508
  %v5064 = vadd.f32 %v4342, %v4513
  %v5065 = vadd.f32 %v4343, %v4518
  %v5066 = vadd.f32 %v4630, %v4807
  %v5067 = vadd.f32 %v4635, %v4812
  %v5068 = vadd.f32 %v4640, %v4817
  %v5069 = vadd.f32 %v4645, %v4822
  %v5070 = vadd.f32 %v4650, %v4827
  %v5071 = vadd.f32 %v4655, %v4832
  %v5072 = vadd.f32 %v4660, %v4837
  %v5073 = vadd.f32 %v4665, %v4842
  %v5074 = vadd.f32 %v4670, %v4847
  %v5075 = vadd.f32 %v4675, %v4852
  %v5076 = vadd.f32 %v4680, %v4857
  %v5077 = vadd.f32 %v4685, %v4862
  %v5078 = vadd.f32 %v4690, %v4867
  %v5079 = vadd.f32 %v4695, %v4872
  %v5080 = vadd.f32 %v5052, %v5066
  %v5081 = vadd.f32 %v5053, %v5067
  %v5082 = vadd.f32 %v5054, %v5068
  %v5083 = vadd.f32 %v5055, %v5069
  %v5084 = vadd.f32 %v5056, %v5070
  %v5085 = vadd.f32 %v5057, %v5071
  %v5086 = vadd.f32 %v5058, %v5072
  %v5087 = vadd.f32 %v5059, %v5073
  %v5088 = vadd.f32 %v5060, %v5074
  %v5089 = vadd.f32 %v5061, %v5075
  %v5090 = vadd.f32 %v5062, %v5076
  %v5091 = vadd.f32 %v5063, %v5077
  %v5092 = vadd.f32 %v5064, %v5078
  %v5093 = vadd.f32 %v5065, %v5079
  %v5094 = vadd.f32 %v5080, %v4984
  %v5095 = vadd.f32 %v5081, %v4989
  %v5096 = vadd.f32 %v5082, %v4994
  %v5097 = vadd.f32 %v5083, %v4999
  %v5098 = vadd.f32 %v5084, %v5004
  %v5099 = vadd.f32 %v5085, %v5009
  %v5100 = vadd.f32 %v5086, %v5014
  %v5101 = vadd.f32 %v5087, %v5019
  %v5102 = vadd.f32 %v5088, %v5024
  %v5103 = vadd.f32 %v5089, %v5029
  %v5104 = vadd.f32 %v5090, %v5034
  %v5105 = vadd.f32 %v5091, %v5039
  %v5106 = vadd.f32 %v5092, %v5044
  %v5107 = vadd.f32 %v5093, %v5049
  %v5108 = vmax.f32 %v5094, 0.0
  %v5109 = vmax.f32 %v5095, 0.0
  %v5110 = vmax.f32 %v5096, 0.0
  %v5111 = vmax.f32 %v5097, 0.0
  %v5112 = vmax.f32 %v5098, 0.0
  %v5113 = vmax.f32 %v5099, 0.0
  %v5114 = vmax.f32 %v5100, 0.0
  %v5115 = vmax.f32 %v5101, 0.0
  %v5116 = vmax.f32 %v5102, 0.0
  %v5117 = vmax.f32 %v5103, 0.0
  %v5118 = vmax.f32 %v5104, 0.0
  %v5119 = vmax.f32 %v5105, 0.0
  %v5120 = vmax.f32 %v5106, 0.0
  %v5121 = vmax.f32 %v5107, 0.0
  %v5122 = vmax.f32 %v5108, %v5109
  %v5123 = vmax.f32 %v5115, %v5116
  %v5124 = vmax.f32 %v5122, %v5110
  %v5125 = vmax.f32 %v5123, %v5117
  %5126 = vst.msk [vmem:[#allocation5] sm:$0xff] %vm3213, %v5124
  %5127 = vst.msk [vmem:[#allocation5 + $0x18] sm:$0xff] %vm3213, %v5125
  %v5128 = vmax.f32 %v5110, %v5111
  %v5129 = vmax.f32 %v5117, %v5118
  %v5130 = vmax.f32 %v5128, %v5112
  %v5131 = vmax.f32 %v5129, %v5119
  %s5132 = scalar_lea.vmem [#allocation5], 8
  %5133 = vst.msk [vmem:[%s5132] sm:$0xff] %vm3213, %v5130
  %5134 = vst.msk [vmem:[%s5132 + $0x18] sm:$0xff] %vm3213, %v5131
  %v5135 = vmax.f32 %v5112, %v5113
  %v5136 = vmax.f32 %v5119, %v5120
  %v5137 = vmax.f32 %v5135, %v5114
  %v5138 = vmax.f32 %v5136, %v5121
  %s5139 = scalar_lea.vmem [#allocation5], 16
  %5140 = vst.msk [vmem:[%s5139] sm:$0xff] %vm3213, %v5137
  %5141 = vst.msk [vmem:[%s5139 + $0x18] sm:$0xff] %vm3213, %v5138
  %v5142 = vld [vmem:[#allocation5] ss:$2 sm:$0x7]
  %s5143 = scalar_lea.vmem [#allocation5], 8
  %v5144 = vld [vmem:[%s5143] ss:$2 sm:$0x7]
  %s5145 = scalar_lea.vmem [#allocation5], 16
  %v5146 = vld [vmem:[%s5145] ss:$2 sm:$0x7]
  %s5147 = scalar_lea.vmem [#allocation5], 24
  %v5148 = vld [vmem:[%s5147] ss:$2 sm:$0x7]
  %s5149 = scalar_lea.vmem [#allocation5], 32
  %v5150 = vld [vmem:[%s5149] ss:$2 sm:$0x7]
  %s5151 = scalar_lea.vmem [#allocation5], 40
  %v5152 = vld [vmem:[%s5151] ss:$2 sm:$0x7]
  %s5153 = scalar_lea.vmem [#allocation5], 1
  %v5154 = vld [vmem:[%s5153] ss:$2 sm:$0x7]
  %s5155 = scalar_lea.vmem [#allocation5], 9
  %v5156 = vld [vmem:[%s5155] ss:$2 sm:$0x7]
  %s5157 = scalar_lea.vmem [#allocation5], 17
  %v5158 = vld [vmem:[%s5157] ss:$2 sm:$0x7]
  %s5159 = scalar_lea.vmem [#allocation5], 25
  %v5160 = vld [vmem:[%s5159] ss:$2 sm:$0x7]
  %s5161 = scalar_lea.vmem [#allocation5], 33
  %v5162 = vld [vmem:[%s5161] ss:$2 sm:$0x7]
  %s5163 = scalar_lea.vmem [#allocation5], 41
  %v5164 = vld [vmem:[%s5163] ss:$2 sm:$0x7]
  %s5165 = scalar_lea.vmem [#allocation5], 2
  %v5166 = vld [vmem:[%s5165] ss:$2 sm:$0x7]
  %s5167 = scalar_lea.vmem [#allocation5], 10
  %v5168 = vld [vmem:[%s5167] ss:$2 sm:$0x7]
  %s5169 = scalar_lea.vmem [#allocation5], 18
  %v5170 = vld [vmem:[%s5169] ss:$2 sm:$0x7]
  %s5171 = scalar_lea.vmem [#allocation5], 26
  %v5172 = vld [vmem:[%s5171] ss:$2 sm:$0x7]
  %s5173 = scalar_lea.vmem [#allocation5], 34
  %v5174 = vld [vmem:[%s5173] ss:$2 sm:$0x7]
  %s5175 = scalar_lea.vmem [#allocation5], 42
  %v5176 = vld [vmem:[%s5175] ss:$2 sm:$0x7]
  %v5177 = vmax.f32 %v5142, %v5154
  %v5178 = vmax.f32 %v5144, %v5156
  %v5179 = vmax.f32 %v5146, %v5158
  %v5180 = vmax.f32 %v5148, %v5160
  %v5181 = vmax.f32 %v5150, %v5162
  %v5182 = vmax.f32 %v5152, %v5164
  %v5183 = vmax.f32 %v5177, %v5166
  %v5184 = vmax.f32 %v5178, %v5168
  %v5185 = vmax.f32 %v5179, %v5170
  %v5186 = vmax.f32 %v5180, %v5172
  %v5187 = vmax.f32 %v5181, %v5174
  %v5188 = vmax.f32 %v5182, %v5176
  %vm5189 = vcmask 256000
  %5190 = vst.msk [vmem:[%s8] sm:$0x7] %vm5189, %v5183
  %5191 = vst.msk [vmem:[%s8 + $0x4] sm:$0x7] %vm5189, %v5184
  %5192 = vst.msk [vmem:[%s8 + $0x8] sm:$0x7] %vm5189, %v5185
  %5193 = vst.msk [vmem:[%s8 + $0xc] sm:$0x7] %vm5189, %v5186
  %5194 = vst.msk [vmem:[%s8 + $0x10] sm:$0x7] %vm5189, %v5187
  %5195 = vst.msk [vmem:[%s8 + $0x14] sm:$0x7] %vm5189, %v5188
  // Predicated region
  $region34: #{net_exit1_part2l_forward.1} parent=0 // pred_check
    _
  $region35: #{net_exit1_part2l_forward.1} parent=0 // pred_check_branch
    %5197 = sbr.rel (0) target = $region37
  $region36: #{net_exit1_part2l_forward.1} parent=0 // pred_region
    _
  $region37: #{net_exit1_part2l_forward.1} parent=0 // pred_fallthru
    _
  // Predicated region
  $region38: #{net_exit1_part2l_forward.1} parent=0 // pred_check
    _
  $region39: #{net_exit1_part2l_forward.1} parent=0 // pred_check_branch
    %5199 = sbr.rel (0) target = $region41
  $region40: #{net_exit1_part2l_forward.1} parent=0 // pred_region
    _
  $region41: #{net_exit1_part2l_forward.1} parent=0 // pred_fallthru
    _

</llo_original>
